<compile_context>
chip_gen: v6e
topology: v6e:2x2x1
jax: 0.10.0
libtpu: 0.0.40
codegen_flags: <defaults>
</compile_context>

<pallas_src>
import functools

import jax
import jax.numpy as jnp
from jax.experimental import pallas as pl
from jax.experimental.pallas import tpu as pltpu


# ---------------------------------------------------------------------------
# helpers
# ---------------------------------------------------------------------------
def _round_up(x, m):
    return (x + m - 1) // m * m


def _silu(x):
    # silu(x) = x * sigmoid(x); sigmoid lowers to EUP transcendentals.
    return x * jax.nn.sigmoid(x)


def _vmem_capacity_bytes():
    """Physical per-core VMEM (v5e/v6e: 128 MiB, v7x: 64 MiB). Conservative
    64 MiB fallback if the query is unavailable."""
    try:
        cap = getattr(pltpu.get_tpu_info(), "vmem_capacity_bytes", None)
        if cap:
            return int(cap)
    except Exception:
        pass
    return 64 * 1024 * 1024


def _pick_tiles(M, dim, hidden_p, c_item, o_item, vmem_cap, out_is_f32):
    """Pick (tm, tn) from a ~75% VMEM budget.

    Per grid step the kernel streams 3*dim*tn*c_item weight bytes and does
    6*tm*dim*tn flops, so arithmetic intensity ~ tm flop/byte: tm >= ~640 is
    needed to be MXU-bound on v6e/v7x. tn prefers 512 then 256 (256-aligned
    for the 2x256^2 MXUs)."""
    budget = int(vmem_cap * 0.75)
    M8 = _round_up(max(int(M), 1), 8)
    acc_row = 0 if out_is_f32 else dim * 4           # f32 acc scratch per row

    def max_tm(tn):
        fixed = 2 * 3 * dim * tn * c_item            # fused w13 + w2, double-buffered
        per_row = (2 * dim * c_item                  # x tile, double-buffered
                   + 2 * dim * o_item                # out tile, double-buffered
                   + acc_row                         # acc scratch (narrow-out path only)
                   + 3 * tn * 4)                     # h1, h3, h f32 intermediates
        return (budget - fixed) // per_row

    best = None
    for tn in (512, 256, 128):
        if hidden_p % tn != 0:
            continue
        cap = min(1024, max_tm(tn))
        if cap < 8:
            continue
        if M8 <= cap:                 # whole M fits in one tile: no padding needed
            tm = M8
        elif cap >= 128:
            tm = (cap // 128) * 128
        else:
            tm = (cap // 8) * 8
        cfg = (int(tm), int(tn))
        if tm >= 640 or tm >= M8:     # MXU-bound (or can't do better) -> take it
            return cfg
        if best is None or tm > best[0]:
            best = cfg
    if best is None:                  # degenerate (enormous dim): smallest legal tiles
        best = (8, 128)
    return best


# ---------------------------------------------------------------------------
# one-time parameter preparation (hoisted out of the hot path)
# ---------------------------------------------------------------------------
def prepare_ffn_weights(w1, w2, w3, *, compute_dtype=jnp.bfloat16):
    """Transpose PyTorch Linear (out,in) weights to (in,out), cast to the compute
    dtype (bf16 by default; pass jnp.float32 for strict f32), fuse w1/w3 into a
    single streamed tensor, and zero-pad hidden to a multiple of 256.

    Returns (w13t, w2t):
      w13t: (2, dim, hidden_p)   [w13t[0] = w1^T, w13t[1] = w3^T]
      w2t : (hidden_p, dim)
    Zero-padding is exact: padded gate/value columns give silu(0)*0 = 0 and the
    matching w2 rows are zero, so they contribute nothing.
    """
    w1 = jnp.asarray(w1)
    w2 = jnp.asarray(w2)
    w3 = jnp.asarray(w3)
    if compute_dtype is not None:
        w1 = w1.astype(compute_dtype)
        w2 = w2.astype(compute_dtype)
        w3 = w3.astype(compute_dtype)
    hidden, _dim = w1.shape
    hidden_p = _round_up(hidden, 256)        # 256-aligned hidden -> tn in {256, 512} legal
    pad = hidden_p - hidden
    w13t = jnp.stack([w1.T, w3.T], axis=0)   # (2, dim, hidden)
    w2t = w2.T                               # (hidden, dim)
    if pad:
        w13t = jnp.pad(w13t, ((0, 0), (0, 0), (0, pad)))
        w2t = jnp.pad(w2t, ((0, pad), (0, 0)))
    return w13t, w2t


# ---------------------------------------------------------------------------
# kernels
# ---------------------------------------------------------------------------
def _ffn_step(x_ref, w13_ref, w2_ref, acc_like_ref, precision):
    x = x_ref[...]                                                  # (tm, dim)
    h1 = jnp.dot(x, w13_ref[0], preferred_element_type=jnp.float32,
                 precision=precision)                               # (tm, tn) f32
    h3 = jnp.dot(x, w13_ref[1], preferred_element_type=jnp.float32,
                 precision=precision)                               # (tm, tn) f32
    h = _silu(h1) * h3                                              # f32
    acc_like_ref[...] += jnp.dot(h.astype(w2_ref.dtype), w2_ref[...],
                                 preferred_element_type=jnp.float32,
                                 precision=precision)               # (tm, dim) f32


def ffn_kernel_f32out(x_ref, w13_ref, w2_ref, o_ref, *, precision):
    """f32 output: accumulate directly into o_ref (resident across j)."""
    j = pl.program_id(1)

    @pl.when(j == 0)
    def _():
        o_ref[...] = jnp.zeros_like(o_ref)

    _ffn_step(x_ref, w13_ref, w2_ref, o_ref, precision)


def ffn_kernel_acc(x_ref, w13_ref, w2_ref, o_ref, acc_ref, *, precision):
    """Narrow output dtype: f32 scratch accumulator, cast on the last j step."""
    j = pl.program_id(1)

    @pl.when(j == 0)
    def _():
        acc_ref[...] = jnp.zeros_like(acc_ref)

    _ffn_step(x_ref, w13_ref, w2_ref, acc_ref, precision)

    @pl.when(j == pl.num_programs(1) - 1)
    def _():
        o_ref[...] = acc_ref[...].astype(o_ref.dtype)


# ---------------------------------------------------------------------------
# wrapper
# ---------------------------------------------------------------------------
def feed_forward(x, w13t, w2t, *, tm=None, tn=None):
    """x: (..., dim); w13t: (2, dim, hidden_p); w2t: (hidden_p, dim)
    (use prepare_ffn_weights() once to get the fused/transposed/padded weights).
    Output dtype == x.dtype."""
    orig_shape = x.shape
    dim = orig_shape[-1]
    assert w13t.ndim == 3 and w13t.shape[0] == 2 and w13t.shape[1] == dim
    hidden_p = w13t.shape[2]
    assert hidden_p % 128 == 0, "prepare_ffn_weights pads hidden to a 128 multiple"

    cdt = w13t.dtype                          # compute dtype (bf16 by default)
    c_item = jnp.dtype(cdt).itemsize
    out_dtype = x.dtype
    o_item = jnp.dtype(out_dtype).itemsize
    out_is_f32 = (jnp.dtype(out_dtype) == jnp.dtype(jnp.float32))

    x2d = x.reshape(-1, dim)
    if x2d.dtype != cdt:
        x2d = x2d.astype(cdt)
    M = x2d.shape[0]

    # ---- generation-aware tile selection (fits v7x's 64 MiB VMEM) ----
    vmem_cap = _vmem_capacity_bytes()
    if tm is None or tn is None:
        tm_auto, tn_auto = _pick_tiles(M, dim, hidden_p, c_item, o_item,
                                       vmem_cap, out_is_f32)
        tm = tm_auto if tm is None else tm
        tn = tn_auto if tn is None else tn
    assert hidden_p % tn == 0

    # ---- pad M up to a tile multiple (ragged batch*seq handled by padding) ----
    n_m = pl.cdiv(M, tm)
    M_p = n_m * tm
    if M_p != M:
        x2d = jnp.pad(x2d, ((0, M_p - M), (0, 0)))

    # True f32 matmuls only when explicitly requested via f32 weights.
    precision = (jax.lax.Precision.HIGHEST
                 if jnp.dtype(cdt) == jnp.dtype(jnp.float32) else None)

    if out_is_f32:
        kernel = functools.partial(ffn_kernel_f32out, precision=precision)
        scratch_shapes = []
        acc_bytes = 0
    else:
        kernel = functools.partial(ffn_kernel_acc, precision=precision)
        scratch_shapes = [pltpu.VMEM((tm, dim), jnp.float32)]
        acc_bytes = tm * dim * 4

    # ---- VMEM budget: double-buffered streams + resident output + intermediates ----
    est = (2 * (tm * dim + 3 * dim * tn) * c_item   # x + fused w13 + w2, double-buffered
           + 2 * tm * dim * o_item                  # output tile
           + acc_bytes                              # f32 acc scratch (narrow-out path)
           + 3 * tm * tn * 4)                       # h1, h3, h f32 intermediates
    vmem_limit = int(min(max(int(est * 1.3), 32 * 1024 * 1024),
                         int(vmem_cap * 0.9)))

    out2d = pl.pallas_call(
        kernel,
        out_shape=jax.ShapeDtypeStruct((M_p, dim), out_dtype),
        grid_spec=pltpu.PrefetchScalarGridSpec(
            num_scalar_prefetch=0,
            grid=(n_m, hidden_p // tn),
            in_specs=[
                pl.BlockSpec((tm, dim), lambda i, j: (i, 0)),      # x tile
                pl.BlockSpec((2, dim, tn), lambda i, j: (0, 0, j)),  # fused w1^T|w3^T slice
                pl.BlockSpec((tn, dim), lambda i, j: (j, 0)),      # w2^T slice
            ],
            out_specs=pl.BlockSpec((tm, dim), lambda i, j: (i, 0)),
            scratch_shapes=scratch_shapes,
        ),
        compiler_params=pltpu.CompilerParams(
            dimension_semantics=("parallel", "arbitrary"),
            vmem_limit_bytes=vmem_limit),
    )(x2d, w13t, w2t)

    return out2d[:M].reshape(orig_shape)


# ---------------------------------------------------------------------------
# reference + params (PyTorch Linear layout / hidden-dim arithmetic)
# ---------------------------------------------------------------------------
def make_params(key, dim, hidden_dim, multiple_of, dtype=jnp.float32):
    hidden = int(2 * hidden_dim / 3)
    hidden = multiple_of * ((hidden + multiple_of - 1) // multiple_of)
    k1, k2, k3 = jax.random.split(key, 3)
    s1 = 1.0 / jnp.sqrt(dim)
    s2 = 1.0 / jnp.sqrt(hidden)
    w1 = jax.random.uniform(k1, (hidden, dim), dtype, -s1, s1)   # Linear(dim, hidden)
    w3 = jax.random.uniform(k3, (hidden, dim), dtype, -s1, s1)   # Linear(dim, hidden)
    w2 = jax.random.uniform(k2, (dim, hidden), dtype, -s2, s2)   # Linear(hidden, dim)
    return w1, w2, w3


def feed_forward_ref(x, w1, w2, w3):
    h1 = x @ w1.T
    h3 = x @ w3.T
    return (_silu(h1) * h3) @ w2.T


if __name__ == "__main__":
    key = jax.random.PRNGKey(0)
    kx, kp, kx2 = jax.random.split(key, 3)

    dim = 128
    hidden_dim = 4 * dim          # -> hidden = 384 after the 2/3 + rounding rule
    multiple_of = 128
    batch, seq = 2, 8

    w1, w2, w3 = make_params(kp, dim, hidden_dim, multiple_of)

    # --- strict f32 path (explicit f32 compute, precision=HIGHEST) ---
    x = jax.random.normal(kx, (batch, seq, dim), dtype=jnp.float32)
    w13t_f32, w2t_f32 = prepare_ffn_weights(w1, w2, w3, compute_dtype=jnp.float32)
    out = jax.block_until_ready(feed_forward(x, w13t_f32, w2t_f32))
    ref = feed_forward_ref(x, w1, w2, w3)
    assert out.shape == x.shape
    assert jnp.allclose(out, ref, atol=1e-4, rtol=1e-4), "f32 mismatch vs reference"

    # --- ragged M (batch*seq not a multiple of the tile) exercises padding path ---
    x_ragged = jax.random.normal(kx2, (3, 5, dim), dtype=jnp.float32)
    out_r = jax.block_until_ready(feed_forward(x_ragged, w13t_f32, w2t_f32))
    ref_r = feed_forward_ref(x_ragged, w1, w2, w3)
    assert jnp.allclose(out_r, ref_r, atol=1e-4, rtol=1e-4), "ragged-M mismatch"

    # --- default bf16 compute path, f32 input/output (accumulate-into-output kernel) ---
    w13t_bf, w2t_bf = prepare_ffn_weights(w1, w2, w3)   # bf16 by default
    out_bf = jax.block_until_ready(feed_forward(x, w13t_bf, w2t_bf))
    assert out_bf.shape == x.shape
    assert bool(jnp.all(jnp.isfinite(out_bf.astype(jnp.float32))))
    assert jnp.allclose(out_bf.astype(jnp.float32), ref,
                        atol=5e-2, rtol=5e-2), "bf16-compute mismatch"

    # --- bf16 input/output (f32 scratch-accumulator kernel path) ---
    x_bf = x.astype(jnp.bfloat16)
    out_bf16 = jax.block_until_ready(feed_forward(x_bf, w13t_bf, w2t_bf))
    assert out_bf16.dtype == jnp.bfloat16 and out_bf16.shape == x.shape
    assert jnp.allclose(out_bf16.astype(jnp.float32), ref,
                        atol=1e-1, rtol=1e-1), "bf16-output mismatch"

    print("KERNEL_OK")
</pallas_src>

<mosaic_0001>
module attributes {stable_mosaic.version = 11 : i64} {
  func.func @ffn_kernel_f32out(%arg0: i32, %arg1: i32, %arg2: memref<16x128xf32, #tpu.memory_space<vmem>>, %arg3: memref<2x128x512xf32, #tpu.memory_space<vmem>>, %arg4: memref<512x128xf32, #tpu.memory_space<vmem>>, %arg5: memref<16x128xf32, #tpu.memory_space<vmem>>) attributes {dimension_semantics = [#tpu.dimension_semantics<parallel>, #tpu.dimension_semantics<arbitrary>], iteration_bounds = array<i64: 1, 1>, scalar_prefetch = 0 : i64, scratch_operands = 0 : i64, tpu.core_type = #tpu.core_type<tc>, window_params = [{transform_indices = @transform_0, window_bounds = array<i64: 16, 128>}, {transform_indices = @transform_1, window_bounds = array<i64: 2, 128, 512>}, {transform_indices = @transform_2, window_bounds = array<i64: 512, 128>}, {transform_indices = @transform_3, window_bounds = array<i64: 16, 128>}]} {
    %c0_i32 = arith.constant 0 : i32
    %0 = arith.cmpi eq, %arg1, %c0_i32 : i32
    %1 = arith.extui %0 : i1 to i32
    %c0_i32_0 = arith.constant 0 : i32
    %2 = arith.cmpi ne, %1, %c0_i32_0 : i32
    scf.if %2 {
      %cst_16 = arith.constant 0.000000e+00 : f32
      %22 = vector.broadcast %cst_16 : f32 to vector<16x128xf32>
      %c0_17 = arith.constant 0 : index
      %c0_18 = arith.constant 0 : index
      %23 = vector.load %arg5[%c0_17, %c0_18] : memref<16x128xf32, #tpu.memory_space<vmem>>, vector<16x128xf32>
      tpu.vector_store %arg5[%c0_17, %c0_18], %22 {strides = array<i32>} : memref<16x128xf32, #tpu.memory_space<vmem>>, vector<16x128xf32>,
    } else {
    }
    %c0 = arith.constant 0 : index
    %c0_1 = arith.constant 0 : index
    %3 = vector.load %arg2[%c0, %c0_1] : memref<16x128xf32, #tpu.memory_space<vmem>>, vector<16x128xf32>
    %c0_2 = arith.constant 0 : index
    %c0_3 = arith.constant 0 : index
    %c0_4 = arith.constant 0 : index
    %4 = vector.load %arg3[%c0_2, %c0_3, %c0_4] : memref<2x128x512xf32, #tpu.memory_space<vmem>>, vector<1x128x512xf32>
    %5 = vector.shape_cast %4 : vector<1x128x512xf32> to vector<128x512xf32>
    %cst = arith.constant dense<0.000000e+00> : vector<16x512xf32>
    %6 = tpu.matmul %3, %5, %cst {dimension_numbers = #tpu.dot_dimension_numbers<[1], [0], [0], [1], [0, 0, 1, 1], [], []>, precision = #tpu.contract_precision<fp32>} : vector<16x128xf32>, vector<128x512xf32>, vector<16x512xf32> -> vector<16x512xf32>
    %c1 = arith.constant 1 : index
    %c0_5 = arith.constant 0 : index
    %c0_6 = arith.constant 0 : index
    %7 = vector.load %arg3[%c1, %c0_5, %c0_6] : memref<2x128x512xf32, #tpu.memory_space<vmem>>, vector<1x128x512xf32>
    %8 = vector.shape_cast %7 : vector<1x128x512xf32> to vector<128x512xf32>
    %cst_7 = arith.constant dense<0.000000e+00> : vector<16x512xf32>
    %9 = tpu.matmul %3, %8, %cst_7 {dimension_numbers = #tpu.dot_dimension_numbers<[1], [0], [0], [1], [0, 0, 1, 1], [], []>, precision = #tpu.contract_precision<fp32>} : vector<16x128xf32>, vector<128x512xf32>, vector<16x512xf32> -> vector<16x512xf32>
    %10 = arith.negf %6 : vector<16x512xf32>
    %11 = math.exp %10 : vector<16x512xf32>
    %cst_8 = arith.constant 1.000000e+00 : f32
    %12 = vector.broadcast %cst_8 : f32 to vector<16x512xf32>
    %13 = arith.addf %12, %11 : vector<16x512xf32>
    %14 = arith.divf %12, %13 : vector<16x512xf32>
    %15 = arith.mulf %6, %14 : vector<16x512xf32>
    %16 = arith.mulf %15, %9 : vector<16x512xf32>
    %c0_9 = arith.constant 0 : index
    %c0_10 = arith.constant 0 : index
    %17 = vector.load %arg5[%c0_9, %c0_10] : memref<16x128xf32, #tpu.memory_space<vmem>>, vector<16x128xf32>
    %c0_11 = arith.constant 0 : index
    %c0_12 = arith.constant 0 : index
    %18 = vector.load %arg4[%c0_11, %c0_12] : memref<512x128xf32, #tpu.memory_space<vmem>>, vector<512x128xf32>
    %cst_13 = arith.constant dense<0.000000e+00> : vector<16x128xf32>
    %19 = tpu.matmul %16, %18, %cst_13 {dimension_numbers = #tpu.dot_dimension_numbers<[1], [0], [0], [1], [0, 0, 1, 1], [], []>, precision = #tpu.contract_precision<fp32>} : vector<16x512xf32>, vector<512x128xf32>, vector<16x128xf32> -> vector<16x128xf32>
    %20 = arith.addf %17, %19 : vector<16x128xf32>
    %c0_14 = arith.constant 0 : index
    %c0_15 = arith.constant 0 : index
    %21 = vector.load %arg5[%c0_14, %c0_15] : memref<16x128xf32, #tpu.memory_space<vmem>>, vector<16x128xf32>
    tpu.vector_store %arg5[%c0_14, %c0_15], %20 {strides = array<i32>} : memref<16x128xf32, #tpu.memory_space<vmem>>, vector<16x128xf32>,
    return
  }
  func.func @transform_0(%arg0: i32, %arg1: i32) -> (i32, i32) {
    %c0_i32 = arith.constant 0 : i32
    %c0_i32_0 = arith.constant 0 : i32
    return %arg0, %c0_i32 : i32, i32
  }
  func.func @transform_1(%arg0: i32, %arg1: i32) -> (i32, i32, i32) {
    %c0_i32 = arith.constant 0 : i32
    %c0_i32_0 = arith.constant 0 : i32
    %c0_i32_1 = arith.constant 0 : i32
    return %c0_i32, %c0_i32_0, %arg1 : i32, i32, i32
  }
  func.func @transform_2(%arg0: i32, %arg1: i32) -> (i32, i32) {
    %c0_i32 = arith.constant 0 : i32
    %c0_i32_0 = arith.constant 0 : i32
    return %arg1, %c0_i32 : i32, i32
  }
  func.func @transform_3(%arg0: i32, %arg1: i32) -> (i32, i32) {
    %c0_i32 = arith.constant 0 : i32
    %c0_i32_0 = arith.constant 0 : i32
    return %arg0, %c0_i32 : i32, i32
  }
}

</mosaic_0001>

<llo_original>
// kernel: tpu_custom_call.1
$region0: #{tpu_custom_call.1}
  #allocation0 [shape = 'u32[]', space=smem, size = 0x4, offset = 0x4, fixed_abs, tag = 'smem constant byte address 0x4 - core index']
  #allocation1 [shape = 'u32[144,128]{1,0:T(1,128)}', space=vmem, size = 0x12000, scoped, tag = 'internal scratch']
  %s0 = inlined_call_operand.hbm [shape: f32[16,128], index: 0, kind: input, shape index: {}]
  %s1 = inlined_call_operand.hbm [shape: f32[2,128,512], index: 1, kind: input, shape index: {}]
  %s2 = inlined_call_operand.hbm [shape: f32[512,128], index: 2, kind: input, shape index: {}]
  %s3 = inlined_call_operand.hbm [shape: f32[16,128], index: 3, kind: output, shape index: {}]
  %s4 = sld [smem:[#allocation0]]
  $region38: #{tpu_custom_call.1} parent=0
    _
  %s6 = ssub.s32 1, %s4
  %s7 = scalar_select 0, %s6, %s4
  $region1: #{tpu_custom_call.1} parent=0
    #allocation2 [shape = 'u8[8192]{0}', space=vmem, size = 0x2000, scoped, tag = 'input window, operand 0, single buffered']
    #allocation3 [shape = 's32[1]{0}', space=sflag, size = 0x4, scoped, tag = 'scoped memory for tpu_custom_call.1']
    #allocation4 [shape = 's32[1]{0}', space=sflag, size = 0x4, scoped, tag = 'scoped memory for tpu_custom_call.1']
    #allocation5 [shape = 'u8[524288]{0}', space=vmem, size = 0x80000, scoped, tag = 'input window, operand 1, single buffered']
    #allocation6 [shape = 's32[1]{0}', space=sflag, size = 0x4, scoped, tag = 'scoped memory for tpu_custom_call.1']
    #allocation7 [shape = 'u8[262144]{0}', space=vmem, size = 0x40000, scoped, tag = 'input window, operand 2, single buffered']
    #allocation8 [shape = 'u8[8192]{0}', space=vmem, size = 0x2000, scoped, tag = 'output window, operand 0, single buffered']
    %8 = vsyncpa [#allocation3], 0
    %9 = vsyncpa [#allocation6], 0
    %10 = vsyncpa [#allocation4], 0
    // Predicated region
    $region2: #{tpu_custom_call.1} parent=1 // pred_check
      _
    $region3: #{tpu_custom_call.1} parent=1 // pred_check_branch
      %12 = sbr.rel (0) target = $region5
    $region4: #{tpu_custom_call.1} parent=1 // pred_region
      %s14 = ssub.s32 256, 256
      %15 = vsyncadd [#allocation3], %s14
      %s16 = sshll.u32 [#allocation2], 4
      %s17 = int_to_ptr.vmem [resolvable:$true] %s16
      %22 = dma.hbm_to_vmem [thread:$0]  %s0, 256, %s17, [#allocation3], 128, 128, 8
    $region5: #{tpu_custom_call.1} parent=1 // pred_fallthru
      _
    // Predicated region
    $region6: #{tpu_custom_call.1} parent=1 // pred_check
      _
    $region7: #{tpu_custom_call.1} parent=1 // pred_check_branch
      %24 = sbr.rel (0) target = $region9
    $region8: #{tpu_custom_call.1} parent=1 // pred_region
      %s26 = ssub.s32 16384, 16384
      %27 = vsyncadd [#allocation6], %s26
      %s28 = sshll.u32 [#allocation5], 4
      %s29 = int_to_ptr.vmem [resolvable:$true] %s28
      %34 = dma.hbm_to_vmem [thread:$0]  %s1, 16384, %s29, [#allocation6], 512, 512, 32
    $region9: #{tpu_custom_call.1} parent=1 // pred_fallthru
      _
    // Predicated region
    $region10: #{tpu_custom_call.1} parent=1 // pred_check
      _
    $region11: #{tpu_custom_call.1} parent=1 // pred_check_branch
      %36 = sbr.rel (0) target = $region13
    $region12: #{tpu_custom_call.1} parent=1 // pred_region
      %s38 = ssub.s32 8192, 8192
      %39 = vsyncadd [#allocation6], %s38
      %s40 = sshll.u32 [#allocation7], 4
      %s41 = int_to_ptr.vmem [resolvable:$true] %s40
      %46 = dma.hbm_to_vmem [thread:$0]  %s2, 8192, %s41, [#allocation6], 128, 128, 8
    $region13: #{tpu_custom_call.1} parent=1 // pred_fallthru
      _
    // Predicated region
    $region14: #{tpu_custom_call.1} parent=1 // pred_check
      _
    $region15: #{tpu_custom_call.1} parent=1 // pred_check_branch
      %48 = sbr.rel (0) target = $region17
    $region16: #{tpu_custom_call.1} parent=1 // pred_region
      %49 = dma.done [#allocation3], 256
    $region17: #{tpu_custom_call.1} parent=1 // pred_fallthru
      _
    // Predicated region
    $region18: #{tpu_custom_call.1} parent=1 // pred_check
      _
    $region19: #{tpu_custom_call.1} parent=1 // pred_check_branch
      %51 = sbr.rel (0) target = $region21
    $region20: #{tpu_custom_call.1} parent=1 // pred_region
      %52 = dma.done [#allocation6], 16384
    $region21: #{tpu_custom_call.1} parent=1 // pred_fallthru
      _
    // Predicated region
    $region22: #{tpu_custom_call.1} parent=1 // pred_check
      _
    $region23: #{tpu_custom_call.1} parent=1 // pred_check_branch
      %54 = sbr.rel (0) target = $region25
    $region24: #{tpu_custom_call.1} parent=1 // pred_region
      %55 = dma.done [#allocation6], 8192
    $region25: #{tpu_custom_call.1} parent=1 // pred_fallthru
      _
    %p56 = scmp.eq.s32.totalorder 0, 0
    // Predicated region
    $region26: #{tpu_custom_call.1} parent=1 // pred_check
      %p57 = pneg %p56
    $region27: #{tpu_custom_call.1} parent=1 // pred_check_branch
      %59 = sbr.rel (%p57) target = $region29
    $region28: #{tpu_custom_call.1} parent=1 // pred_region
      %60 = vst [vmem:[#allocation8] sm:$0xff] 0.0
      %61 = vst [vmem:[#allocation8 + $0x8] sm:$0xff] 0.0
    $region29: #{tpu_custom_call.1} parent=1 // pred_fallthru
      _
    %v62 = vld [vmem:[#allocation2] sm:$0xff]
    %v63 = vld [vmem:[#allocation2 + $0x8] sm:$0xff]
    %v64 = vld [vmem:[#allocation5] sm:$0xff]
    %v65 = vld [vmem:[#allocation5 + $0x8] sm:$0xff]
    %v66 = vld [vmem:[#allocation5 + $0x10] sm:$0xff]
    %v67 = vld [vmem:[#allocation5 + $0x18] sm:$0xff]
    %v68 = vld [vmem:[#allocation5 + $0x20] sm:$0xff]
    %v69 = vld [vmem:[#allocation5 + $0x28] sm:$0xff]
    %v70 = vld [vmem:[#allocation5 + $0x30] sm:$0xff]
    %v71 = vld [vmem:[#allocation5 + $0x38] sm:$0xff]
    %v72 = vld [vmem:[#allocation5 + $0x40] sm:$0xff]
    %v73 = vld [vmem:[#allocation5 + $0x48] sm:$0xff]
    %v74 = vld [vmem:[#allocation5 + $0x50] sm:$0xff]
    %v75 = vld [vmem:[#allocation5 + $0x58] sm:$0xff]
    %v76 = vld [vmem:[#allocation5 + $0x60] sm:$0xff]
    %v77 = vld [vmem:[#allocation5 + $0x68] sm:$0xff]
    %v78 = vld [vmem:[#allocation5 + $0x70] sm:$0xff]
    %v79 = vld [vmem:[#allocation5 + $0x78] sm:$0xff]
    %v80 = vld [vmem:[#allocation5 + $0x80] sm:$0xff]
    %v81 = vld [vmem:[#allocation5 + $0x88] sm:$0xff]
    %v82 = vld [vmem:[#allocation5 + $0x90] sm:$0xff]
    %v83 = vld [vmem:[#allocation5 + $0x98] sm:$0xff]
    %v84 = vld [vmem:[#allocation5 + $0xa0] sm:$0xff]
    %v85 = vld [vmem:[#allocation5 + $0xa8] sm:$0xff]
    %v86 = vld [vmem:[#allocation5 + $0xb0] sm:$0xff]
    %v87 = vld [vmem:[#allocation5 + $0xb8] sm:$0xff]
    %v88 = vld [vmem:[#allocation5 + $0xc0] sm:$0xff]
    %v89 = vld [vmem:[#allocation5 + $0xc8] sm:$0xff]
    %v90 = vld [vmem:[#allocation5 + $0xd0] sm:$0xff]
    %v91 = vld [vmem:[#allocation5 + $0xd8] sm:$0xff]
    %v92 = vld [vmem:[#allocation5 + $0xe0] sm:$0xff]
    %v93 = vld [vmem:[#allocation5 + $0xe8] sm:$0xff]
    %v94 = vld [vmem:[#allocation5 + $0xf0] sm:$0xff]
    %v95 = vld [vmem:[#allocation5 + $0xf8] sm:$0xff]
    %v96 = vld [vmem:[#allocation5 + $0x100] sm:$0xff]
    %v97 = vld [vmem:[#allocation5 + $0x108] sm:$0xff]
    %v98 = vld [vmem:[#allocation5 + $0x110] sm:$0xff]
    %v99 = vld [vmem:[#allocation5 + $0x118] sm:$0xff]
    %v100 = vld [vmem:[#allocation5 + $0x120] sm:$0xff]
    %v101 = vld [vmem:[#allocation5 + $0x128] sm:$0xff]
    %v102 = vld [vmem:[#allocation5 + $0x130] sm:$0xff]
    %v103 = vld [vmem:[#allocation5 + $0x138] sm:$0xff]
    %v104 = vld [vmem:[#allocation5 + $0x140] sm:$0xff]
    %v105 = vld [vmem:[#allocation5 + $0x148] sm:$0xff]
    %v106 = vld [vmem:[#allocation5 + $0x150] sm:$0xff]
    %v107 = vld [vmem:[#allocation5 + $0x158] sm:$0xff]
    %v108 = vld [vmem:[#allocation5 + $0x160] sm:$0xff]
    %v109 = vld [vmem:[#allocation5 + $0x168] sm:$0xff]
    %v110 = vld [vmem:[#allocation5 + $0x170] sm:$0xff]
    %v111 = vld [vmem:[#allocation5 + $0x178] sm:$0xff]
    %v112 = vld [vmem:[#allocation5 + $0x180] sm:$0xff]
    %v113 = vld [vmem:[#allocation5 + $0x188] sm:$0xff]
    %v114 = vld [vmem:[#allocation5 + $0x190] sm:$0xff]
    %v115 = vld [vmem:[#allocation5 + $0x198] sm:$0xff]
    %v116 = vld [vmem:[#allocation5 + $0x1a0] sm:$0xff]
    %v117 = vld [vmem:[#allocation5 + $0x1a8] sm:$0xff]
    %v118 = vld [vmem:[#allocation5 + $0x1b0] sm:$0xff]
    %v119 = vld [vmem:[#allocation5 + $0x1b8] sm:$0xff]
    %v120 = vld [vmem:[#allocation5 + $0x1c0] sm:$0xff]
    %v121 = vld [vmem:[#allocation5 + $0x1c8] sm:$0xff]
    %v122 = vld [vmem:[#allocation5 + $0x1d0] sm:$0xff]
    %v123 = vld [vmem:[#allocation5 + $0x1d8] sm:$0xff]
    %v124 = vld [vmem:[#allocation5 + $0x1e0] sm:$0xff]
    %v125 = vld [vmem:[#allocation5 + $0x1e8] sm:$0xff]
    %v126 = vld [vmem:[#allocation5 + $0x1f0] sm:$0xff]
    %v127 = vld [vmem:[#allocation5 + $0x1f8] sm:$0xff]
    %v128 = vand.u32 %v125, 4294901760
    %129 = vmatprep.subr.mxu0 %v128
    %v130 = vand.u32 %v124, 4294901760
    %131 = vmatpush1.msra.mxu0 %v130
    %v132 = vand.u32 %v121, 4294901760
    %133 = vmatprep.subr.mxu0 %v132
    %v134 = vand.u32 %v120, 4294901760
    %135 = vmatpush1.msra.mxu0 %v134
    %v136 = vand.u32 %v117, 4294901760
    %137 = vmatprep.subr.mxu0 %v136
    %v138 = vand.u32 %v116, 4294901760
    %139 = vmatpush1.msra.mxu0 %v138
    %v140 = vand.u32 %v113, 4294901760
    %141 = vmatprep.subr.mxu0 %v140
    %v142 = vand.u32 %v112, 4294901760
    %143 = vmatpush1.msra.mxu0 %v142
    %v144 = vand.u32 %v109, 4294901760
    %145 = vmatprep.subr.mxu0 %v144
    %v146 = vand.u32 %v108, 4294901760
    %147 = vmatpush1.msra.mxu0 %v146
    %v148 = vand.u32 %v105, 4294901760
    %149 = vmatprep.subr.mxu0 %v148
    %v150 = vand.u32 %v104, 4294901760
    %151 = vmatpush1.msra.mxu0 %v150
    %v152 = vand.u32 %v101, 4294901760
    %153 = vmatprep.subr.mxu0 %v152
    %v154 = vand.u32 %v100, 4294901760
    %155 = vmatpush1.msra.mxu0 %v154
    %v156 = vand.u32 %v97, 4294901760
    %157 = vmatprep.subr.mxu0 %v156
    %v158 = vand.u32 %v96, 4294901760
    %159 = vmatpush1.msra.mxu0 %v158
    %v160 = vand.u32 %v93, 4294901760
    %161 = vmatprep.subr.mxu0 %v160
    %v162 = vand.u32 %v92, 4294901760
    %163 = vmatpush1.msra.mxu0 %v162
    %v164 = vand.u32 %v89, 4294901760
    %165 = vmatprep.subr.mxu0 %v164
    %v166 = vand.u32 %v88, 4294901760
    %167 = vmatpush1.msra.mxu0 %v166
    %v168 = vand.u32 %v85, 4294901760
    %169 = vmatprep.subr.mxu0 %v168
    %v170 = vand.u32 %v84, 4294901760
    %171 = vmatpush1.msra.mxu0 %v170
    %v172 = vand.u32 %v81, 4294901760
    %173 = vmatprep.subr.mxu0 %v172
    %v174 = vand.u32 %v80, 4294901760
    %175 = vmatpush1.msra.mxu0 %v174
    %v176 = vand.u32 %v77, 4294901760
    %177 = vmatprep.subr.mxu0 %v176
    %v178 = vand.u32 %v76, 4294901760
    %179 = vmatpush1.msra.mxu0 %v178
    %v180 = vand.u32 %v73, 4294901760
    %181 = vmatprep.subr.mxu0 %v180
    %v182 = vand.u32 %v72, 4294901760
    %183 = vmatpush1.msra.mxu0 %v182
    %v184 = vand.u32 %v69, 4294901760
    %185 = vmatprep.subr.mxu0 %v184
    %v186 = vand.u32 %v68, 4294901760
    %187 = vmatpush1.msra.mxu0 %v186
    %v188 = vand.u32 %v65, 4294901760
    %189 = vmatprep.subr.mxu0 %v188
    %v190 = vand.u32 %v64, 4294901760
    %191 = vmatpush1.msra.mxu0 %v190
    %192 = vmatprep.subr.mxu0 0.0
    %193 = vmatpush2.msra.mxu0 0.0
    %194 = vmatprep.subr.mxu0 0.0
    %195 = vmatpush2.msra.mxu0 0.0
    %196 = vmatprep.subr.mxu0 0.0
    %197 = vmatpush2.msra.mxu0 0.0
    %198 = vmatprep.subr.mxu0 0.0
    %199 = vmatpush2.msra.mxu0 0.0
    %200 = vmatprep.subr.mxu0 0.0
    %201 = vmatpush2.msra.mxu0 0.0
    %202 = vmatprep.subr.mxu0 0.0
    %203 = vmatpush2.msra.mxu0 0.0
    %204 = vmatprep.subr.mxu0 0.0
    %205 = vmatpush2.msra.mxu0 0.0
    %206 = vmatprep.subr.mxu0 0.0
    %207 = vmatpush2.msra.mxu0 0.0
    %208 = vmatprep.subr.mxu0 0.0
    %209 = vmatpush2.msra.mxu0 0.0
    %210 = vmatprep.subr.mxu0 0.0
    %211 = vmatpush2.msra.mxu0 0.0
    %212 = vmatprep.subr.mxu0 0.0
    %213 = vmatpush2.msra.mxu0 0.0
    %214 = vmatprep.subr.mxu0 0.0
    %215 = vmatpush2.msra.mxu0 0.0
    %216 = vmatprep.subr.mxu0 0.0
    %217 = vmatpush2.msra.mxu0 0.0
    %218 = vmatprep.subr.mxu0 0.0
    %219 = vmatpush2.msra.mxu0 0.0
    %220 = vmatprep.subr.mxu0 0.0
    %221 = vmatpush2.msra.mxu0 0.0
    %222 = vmatprep.subr.mxu0 0.0
    %223 = vmatpush2.msra.mxu0 0.0
    %224 = vmatprep.mubr.f32.mxu0 0.0
    %v225 = vand.u32 %v62, 4294901760
    %v226 = vsub.f32 %v62, %v225
    %v227 = vand.u32 %v226, 4294901760
    %v228 = vsub.f32 %v226, %v227
    %v229 = vand.u32 %v228, 4294901760
    %230 = vmatmul.mubr.f32.gmra.mxu0 %v229
    %v231 = vpop.f32.mrf.mxu0
    %v232 = vadd.f32 0.0, %v231
    %v233 = vpop.f32.mrf.mxu0
    %v234 = vadd.f32 0.0, %v233
    %235 = vmatprep.mubr.f32.mxu0 0.0
    %v236 = vand.u32 %v63, 4294901760
    %v237 = vsub.f32 %v63, %v236
    %v238 = vand.u32 %v237, 4294901760
    %v239 = vsub.f32 %v237, %v238
    %v240 = vand.u32 %v239, 4294901760
    %241 = vmatmul.mubr.f32.gmra.mxu0 %v240
    %v242 = vpop.f32.mrf.mxu0
    %v243 = vadd.f32 0.0, %v242
    %v244 = vpop.f32.mrf.mxu0
    %v245 = vadd.f32 0.0, %v244
    %246 = vdwg.mxu0
    %v247 = vand.u32 %v125, 4294901760
    %v248 = vsub.f32 %v125, %v247
    %v249 = vand.u32 %v248, 4294901760
    %v250 = vsub.f32 %v248, %v249
    %v251 = vand.u32 %v250, 4294901760
    %252 = vmatprep.subr.mxu0 %v251
    %v253 = vand.u32 %v124, 4294901760
    %v254 = vsub.f32 %v124, %v253
    %v255 = vand.u32 %v254, 4294901760
    %v256 = vsub.f32 %v254, %v255
    %v257 = vand.u32 %v256, 4294901760
    %258 = vmatpush1.msra.mxu0 %v257
    %v259 = vand.u32 %v121, 4294901760
    %v260 = vsub.f32 %v121, %v259
    %v261 = vand.u32 %v260, 4294901760
    %v262 = vsub.f32 %v260, %v261
    %v263 = vand.u32 %v262, 4294901760
    %264 = vmatprep.subr.mxu0 %v263
    %v265 = vand.u32 %v120, 4294901760
    %v266 = vsub.f32 %v120, %v265
    %v267 = vand.u32 %v266, 4294901760
    %v268 = vsub.f32 %v266, %v267
    %v269 = vand.u32 %v268, 4294901760
    %270 = vmatpush1.msra.mxu0 %v269
    %v271 = vand.u32 %v117, 4294901760
    %v272 = vsub.f32 %v117, %v271
    %v273 = vand.u32 %v272, 4294901760
    %v274 = vsub.f32 %v272, %v273
    %v275 = vand.u32 %v274, 4294901760
    %276 = vmatprep.subr.mxu0 %v275
    %v277 = vand.u32 %v116, 4294901760
    %v278 = vsub.f32 %v116, %v277
    %v279 = vand.u32 %v278, 4294901760
    %v280 = vsub.f32 %v278, %v279
    %v281 = vand.u32 %v280, 4294901760
    %282 = vmatpush1.msra.mxu0 %v281
    %v283 = vand.u32 %v113, 4294901760
    %v284 = vsub.f32 %v113, %v283
    %v285 = vand.u32 %v284, 4294901760
    %v286 = vsub.f32 %v284, %v285
    %v287 = vand.u32 %v286, 4294901760
    %288 = vmatprep.subr.mxu0 %v287
    %v289 = vand.u32 %v112, 4294901760
    %v290 = vsub.f32 %v112, %v289
    %v291 = vand.u32 %v290, 4294901760
    %v292 = vsub.f32 %v290, %v291
    %v293 = vand.u32 %v292, 4294901760
    %294 = vmatpush1.msra.mxu0 %v293
    %v295 = vand.u32 %v109, 4294901760
    %v296 = vsub.f32 %v109, %v295
    %v297 = vand.u32 %v296, 4294901760
    %v298 = vsub.f32 %v296, %v297
    %v299 = vand.u32 %v298, 4294901760
    %300 = vmatprep.subr.mxu0 %v299
    %v301 = vand.u32 %v108, 4294901760
    %v302 = vsub.f32 %v108, %v301
    %v303 = vand.u32 %v302, 4294901760
    %v304 = vsub.f32 %v302, %v303
    %v305 = vand.u32 %v304, 4294901760
    %306 = vmatpush1.msra.mxu0 %v305
    %v307 = vand.u32 %v105, 4294901760
    %v308 = vsub.f32 %v105, %v307
    %v309 = vand.u32 %v308, 4294901760
    %v310 = vsub.f32 %v308, %v309
    %v311 = vand.u32 %v310, 4294901760
    %312 = vmatprep.subr.mxu0 %v311
    %v313 = vand.u32 %v104, 4294901760
    %v314 = vsub.f32 %v104, %v313
    %v315 = vand.u32 %v314, 4294901760
    %v316 = vsub.f32 %v314, %v315
    %v317 = vand.u32 %v316, 4294901760
    %318 = vmatpush1.msra.mxu0 %v317
    %v319 = vand.u32 %v101, 4294901760
    %v320 = vsub.f32 %v101, %v319
    %v321 = vand.u32 %v320, 4294901760
    %v322 = vsub.f32 %v320, %v321
    %v323 = vand.u32 %v322, 4294901760
    %324 = vmatprep.subr.mxu0 %v323
    %v325 = vand.u32 %v100, 4294901760
    %v326 = vsub.f32 %v100, %v325
    %v327 = vand.u32 %v326, 4294901760
    %v328 = vsub.f32 %v326, %v327
    %v329 = vand.u32 %v328, 4294901760
    %330 = vmatpush1.msra.mxu0 %v329
    %v331 = vand.u32 %v97, 4294901760
    %v332 = vsub.f32 %v97, %v331
    %v333 = vand.u32 %v332, 4294901760
    %v334 = vsub.f32 %v332, %v333
    %v335 = vand.u32 %v334, 4294901760
    %336 = vmatprep.subr.mxu0 %v335
    %v337 = vand.u32 %v96, 4294901760
    %v338 = vsub.f32 %v96, %v337
    %v339 = vand.u32 %v338, 4294901760
    %v340 = vsub.f32 %v338, %v339
    %v341 = vand.u32 %v340, 4294901760
    %342 = vmatpush1.msra.mxu0 %v341
    %v343 = vand.u32 %v93, 4294901760
    %v344 = vsub.f32 %v93, %v343
    %v345 = vand.u32 %v344, 4294901760
    %v346 = vsub.f32 %v344, %v345
    %v347 = vand.u32 %v346, 4294901760
    %348 = vmatprep.subr.mxu0 %v347
    %v349 = vand.u32 %v92, 4294901760
    %v350 = vsub.f32 %v92, %v349
    %v351 = vand.u32 %v350, 4294901760
    %v352 = vsub.f32 %v350, %v351
    %v353 = vand.u32 %v352, 4294901760
    %354 = vmatpush1.msra.mxu0 %v353
    %v355 = vand.u32 %v89, 4294901760
    %v356 = vsub.f32 %v89, %v355
    %v357 = vand.u32 %v356, 4294901760
    %v358 = vsub.f32 %v356, %v357
    %v359 = vand.u32 %v358, 4294901760
    %360 = vmatprep.subr.mxu0 %v359
    %v361 = vand.u32 %v88, 4294901760
    %v362 = vsub.f32 %v88, %v361
    %v363 = vand.u32 %v362, 4294901760
    %v364 = vsub.f32 %v362, %v363
    %v365 = vand.u32 %v364, 4294901760
    %366 = vmatpush1.msra.mxu0 %v365
    %v367 = vand.u32 %v85, 4294901760
    %v368 = vsub.f32 %v85, %v367
    %v369 = vand.u32 %v368, 4294901760
    %v370 = vsub.f32 %v368, %v369
    %v371 = vand.u32 %v370, 4294901760
    %372 = vmatprep.subr.mxu0 %v371
    %v373 = vand.u32 %v84, 4294901760
    %v374 = vsub.f32 %v84, %v373
    %v375 = vand.u32 %v374, 4294901760
    %v376 = vsub.f32 %v374, %v375
    %v377 = vand.u32 %v376, 4294901760
    %378 = vmatpush1.msra.mxu0 %v377
    %v379 = vand.u32 %v81, 4294901760
    %v380 = vsub.f32 %v81, %v379
    %v381 = vand.u32 %v380, 4294901760
    %v382 = vsub.f32 %v380, %v381
    %v383 = vand.u32 %v382, 4294901760
    %384 = vmatprep.subr.mxu0 %v383
    %v385 = vand.u32 %v80, 4294901760
    %v386 = vsub.f32 %v80, %v385
    %v387 = vand.u32 %v386, 4294901760
    %v388 = vsub.f32 %v386, %v387
    %v389 = vand.u32 %v388, 4294901760
    %390 = vmatpush1.msra.mxu0 %v389
    %v391 = vand.u32 %v77, 4294901760
    %v392 = vsub.f32 %v77, %v391
    %v393 = vand.u32 %v392, 4294901760
    %v394 = vsub.f32 %v392, %v393
    %v395 = vand.u32 %v394, 4294901760
    %396 = vmatprep.subr.mxu0 %v395
    %v397 = vand.u32 %v76, 4294901760
    %v398 = vsub.f32 %v76, %v397
    %v399 = vand.u32 %v398, 4294901760
    %v400 = vsub.f32 %v398, %v399
    %v401 = vand.u32 %v400, 4294901760
    %402 = vmatpush1.msra.mxu0 %v401
    %v403 = vand.u32 %v73, 4294901760
    %v404 = vsub.f32 %v73, %v403
    %v405 = vand.u32 %v404, 4294901760
    %v406 = vsub.f32 %v404, %v405
    %v407 = vand.u32 %v406, 4294901760
    %408 = vmatprep.subr.mxu0 %v407
    %v409 = vand.u32 %v72, 4294901760
    %v410 = vsub.f32 %v72, %v409
    %v411 = vand.u32 %v410, 4294901760
    %v412 = vsub.f32 %v410, %v411
    %v413 = vand.u32 %v412, 4294901760
    %414 = vmatpush1.msra.mxu0 %v413
    %v415 = vand.u32 %v69, 4294901760
    %v416 = vsub.f32 %v69, %v415
    %v417 = vand.u32 %v416, 4294901760
    %v418 = vsub.f32 %v416, %v417
    %v419 = vand.u32 %v418, 4294901760
    %420 = vmatprep.subr.mxu0 %v419
    %v421 = vand.u32 %v68, 4294901760
    %v422 = vsub.f32 %v68, %v421
    %v423 = vand.u32 %v422, 4294901760
    %v424 = vsub.f32 %v422, %v423
    %v425 = vand.u32 %v424, 4294901760
    %426 = vmatpush1.msra.mxu0 %v425
    %v427 = vand.u32 %v65, 4294901760
    %v428 = vsub.f32 %v65, %v427
    %v429 = vand.u32 %v428, 4294901760
    %v430 = vsub.f32 %v428, %v429
    %v431 = vand.u32 %v430, 4294901760
    %432 = vmatprep.subr.mxu0 %v431
    %v433 = vand.u32 %v64, 4294901760
    %v434 = vsub.f32 %v64, %v433
    %v435 = vand.u32 %v434, 4294901760
    %v436 = vsub.f32 %v434, %v435
    %v437 = vand.u32 %v436, 4294901760
    %438 = vmatpush1.msra.mxu0 %v437
    %439 = vmatprep.subr.mxu0 0.0
    %440 = vmatpush2.msra.mxu0 0.0
    %441 = vmatprep.subr.mxu0 0.0
    %442 = vmatpush2.msra.mxu0 0.0
    %443 = vmatprep.subr.mxu0 0.0
    %444 = vmatpush2.msra.mxu0 0.0
    %445 = vmatprep.subr.mxu0 0.0
    %446 = vmatpush2.msra.mxu0 0.0
    %447 = vmatprep.subr.mxu0 0.0
    %448 = vmatpush2.msra.mxu0 0.0
    %449 = vmatprep.subr.mxu0 0.0
    %450 = vmatpush2.msra.mxu0 0.0
    %451 = vmatprep.subr.mxu0 0.0
    %452 = vmatpush2.msra.mxu0 0.0
    %453 = vmatprep.subr.mxu0 0.0
    %454 = vmatpush2.msra.mxu0 0.0
    %455 = vmatprep.subr.mxu0 0.0
    %456 = vmatpush2.msra.mxu0 0.0
    %457 = vmatprep.subr.mxu0 0.0
    %458 = vmatpush2.msra.mxu0 0.0
    %459 = vmatprep.subr.mxu0 0.0
    %460 = vmatpush2.msra.mxu0 0.0
    %461 = vmatprep.subr.mxu0 0.0
    %462 = vmatpush2.msra.mxu0 0.0
    %463 = vmatprep.subr.mxu0 0.0
    %464 = vmatpush2.msra.mxu0 0.0
    %465 = vmatprep.subr.mxu0 0.0
    %466 = vmatpush2.msra.mxu0 0.0
    %467 = vmatprep.subr.mxu0 0.0
    %468 = vmatpush2.msra.mxu0 0.0
    %469 = vmatprep.subr.mxu0 0.0
    %470 = vmatpush2.msra.mxu0 0.0
    %471 = vmatprep.mubr.f32.mxu0 0.0
    %v472 = vand.u32 %v62, 4294901760
    %473 = vmatmul.mubr.f32.gmra.mxu0 %v472
    %v474 = vpop.f32.mrf.mxu0
    %v475 = vadd.f32 %v232, %v474
    %v476 = vpop.f32.mrf.mxu0
    %v477 = vadd.f32 %v234, %v476
    %478 = vmatprep.mubr.f32.mxu0 0.0
    %v479 = vand.u32 %v63, 4294901760
    %480 = vmatmul.mubr.f32.gmra.mxu0 %v479
    %v481 = vpop.f32.mrf.mxu0
    %v482 = vadd.f32 %v243, %v481
    %v483 = vpop.f32.mrf.mxu0
    %v484 = vadd.f32 %v245, %v483
    %485 = vdwg.mxu0
    %v486 = vand.u32 %v125, 4294901760
    %v487 = vsub.f32 %v125, %v486
    %488 = vmatprep.subr.mxu0 %v487
    %v489 = vand.u32 %v124, 4294901760
    %v490 = vsub.f32 %v124, %v489
    %491 = vmatpush1.msra.mxu0 %v490
    %v492 = vand.u32 %v121, 4294901760
    %v493 = vsub.f32 %v121, %v492
    %494 = vmatprep.subr.mxu0 %v493
    %v495 = vand.u32 %v120, 4294901760
    %v496 = vsub.f32 %v120, %v495
    %497 = vmatpush1.msra.mxu0 %v496
    %v498 = vand.u32 %v117, 4294901760
    %v499 = vsub.f32 %v117, %v498
    %500 = vmatprep.subr.mxu0 %v499
    %v501 = vand.u32 %v116, 4294901760
    %v502 = vsub.f32 %v116, %v501
    %503 = vmatpush1.msra.mxu0 %v502
    %v504 = vand.u32 %v113, 4294901760
    %v505 = vsub.f32 %v113, %v504
    %506 = vmatprep.subr.mxu0 %v505
    %v507 = vand.u32 %v112, 4294901760
    %v508 = vsub.f32 %v112, %v507
    %509 = vmatpush1.msra.mxu0 %v508
    %v510 = vand.u32 %v109, 4294901760
    %v511 = vsub.f32 %v109, %v510
    %512 = vmatprep.subr.mxu0 %v511
    %v513 = vand.u32 %v108, 4294901760
    %v514 = vsub.f32 %v108, %v513
    %515 = vmatpush1.msra.mxu0 %v514
    %v516 = vand.u32 %v105, 4294901760
    %v517 = vsub.f32 %v105, %v516
    %518 = vmatprep.subr.mxu0 %v517
    %v519 = vand.u32 %v104, 4294901760
    %v520 = vsub.f32 %v104, %v519
    %521 = vmatpush1.msra.mxu0 %v520
    %v522 = vand.u32 %v101, 4294901760
    %v523 = vsub.f32 %v101, %v522
    %524 = vmatprep.subr.mxu0 %v523
    %v525 = vand.u32 %v100, 4294901760
    %v526 = vsub.f32 %v100, %v525
    %527 = vmatpush1.msra.mxu0 %v526
    %v528 = vand.u32 %v97, 4294901760
    %v529 = vsub.f32 %v97, %v528
    %530 = vmatprep.subr.mxu0 %v529
    %v531 = vand.u32 %v96, 4294901760
    %v532 = vsub.f32 %v96, %v531
    %533 = vmatpush1.msra.mxu0 %v532
    %v534 = vand.u32 %v93, 4294901760
    %v535 = vsub.f32 %v93, %v534
    %536 = vmatprep.subr.mxu0 %v535
    %v537 = vand.u32 %v92, 4294901760
    %v538 = vsub.f32 %v92, %v537
    %539 = vmatpush1.msra.mxu0 %v538
    %v540 = vand.u32 %v89, 4294901760
    %v541 = vsub.f32 %v89, %v540
    %542 = vmatprep.subr.mxu0 %v541
    %v543 = vand.u32 %v88, 4294901760
    %v544 = vsub.f32 %v88, %v543
    %545 = vmatpush1.msra.mxu0 %v544
    %v546 = vand.u32 %v85, 4294901760
    %v547 = vsub.f32 %v85, %v546
    %548 = vmatprep.subr.mxu0 %v547
    %v549 = vand.u32 %v84, 4294901760
    %v550 = vsub.f32 %v84, %v549
    %551 = vmatpush1.msra.mxu0 %v550
    %v552 = vand.u32 %v81, 4294901760
    %v553 = vsub.f32 %v81, %v552
    %554 = vmatprep.subr.mxu0 %v553
    %v555 = vand.u32 %v80, 4294901760
    %v556 = vsub.f32 %v80, %v555
    %557 = vmatpush1.msra.mxu0 %v556
    %v558 = vand.u32 %v77, 4294901760
    %v559 = vsub.f32 %v77, %v558
    %560 = vmatprep.subr.mxu0 %v559
    %v561 = vand.u32 %v76, 4294901760
    %v562 = vsub.f32 %v76, %v561
    %563 = vmatpush1.msra.mxu0 %v562
    %v564 = vand.u32 %v73, 4294901760
    %v565 = vsub.f32 %v73, %v564
    %566 = vmatprep.subr.mxu0 %v565
    %v567 = vand.u32 %v72, 4294901760
    %v568 = vsub.f32 %v72, %v567
    %569 = vmatpush1.msra.mxu0 %v568
    %v570 = vand.u32 %v69, 4294901760
    %v571 = vsub.f32 %v69, %v570
    %572 = vmatprep.subr.mxu0 %v571
    %v573 = vand.u32 %v68, 4294901760
    %v574 = vsub.f32 %v68, %v573
    %575 = vmatpush1.msra.mxu0 %v574
    %v576 = vand.u32 %v65, 4294901760
    %v577 = vsub.f32 %v65, %v576
    %578 = vmatprep.subr.mxu0 %v577
    %v579 = vand.u32 %v64, 4294901760
    %v580 = vsub.f32 %v64, %v579
    %581 = vmatpush1.msra.mxu0 %v580
    %582 = vmatprep.subr.mxu0 0.0
    %583 = vmatpush2.msra.mxu0 0.0
    %584 = vmatprep.subr.mxu0 0.0
    %585 = vmatpush2.msra.mxu0 0.0
    %586 = vmatprep.subr.mxu0 0.0
    %587 = vmatpush2.msra.mxu0 0.0
    %588 = vmatprep.subr.mxu0 0.0
    %589 = vmatpush2.msra.mxu0 0.0
    %590 = vmatprep.subr.mxu0 0.0
    %591 = vmatpush2.msra.mxu0 0.0
    %592 = vmatprep.subr.mxu0 0.0
    %593 = vmatpush2.msra.mxu0 0.0
    %594 = vmatprep.subr.mxu0 0.0
    %595 = vmatpush2.msra.mxu0 0.0
    %596 = vmatprep.subr.mxu0 0.0
    %597 = vmatpush2.msra.mxu0 0.0
    %598 = vmatprep.subr.mxu0 0.0
    %599 = vmatpush2.msra.mxu0 0.0
    %600 = vmatprep.subr.mxu0 0.0
    %601 = vmatpush2.msra.mxu0 0.0
    %602 = vmatprep.subr.mxu0 0.0
    %603 = vmatpush2.msra.mxu0 0.0
    %604 = vmatprep.subr.mxu0 0.0
    %605 = vmatpush2.msra.mxu0 0.0
    %606 = vmatprep.subr.mxu0 0.0
    %607 = vmatpush2.msra.mxu0 0.0
    %608 = vmatprep.subr.mxu0 0.0
    %609 = vmatpush2.msra.mxu0 0.0
    %610 = vmatprep.subr.mxu0 0.0
    %611 = vmatpush2.msra.mxu0 0.0
    %612 = vmatprep.subr.mxu0 0.0
    %613 = vmatpush2.msra.mxu0 0.0
    %614 = vmatprep.mubr.f32.mxu0 0.0
    %v615 = vand.u32 %v62, 4294901760
    %v616 = vsub.f32 %v62, %v615
    %617 = vmatmul.mubr.f32.gmra.mxu0 %v616
    %v618 = vpop.f32.mrf.mxu0
    %v619 = vadd.f32 %v475, %v618
    %v620 = vpop.f32.mrf.mxu0
    %v621 = vadd.f32 %v477, %v620
    %622 = vmatprep.mubr.f32.mxu0 0.0
    %v623 = vand.u32 %v63, 4294901760
    %v624 = vsub.f32 %v63, %v623
    %625 = vmatmul.mubr.f32.gmra.mxu0 %v624
    %v626 = vpop.f32.mrf.mxu0
    %v627 = vadd.f32 %v482, %v626
    %v628 = vpop.f32.mrf.mxu0
    %v629 = vadd.f32 %v484, %v628
    %630 = vdwg.mxu0
    %v631 = vand.u32 %v125, 4294901760
    %632 = vmatprep.subr.mxu0 %v631
    %v633 = vand.u32 %v124, 4294901760
    %634 = vmatpush1.msra.mxu0 %v633
    %v635 = vand.u32 %v121, 4294901760
    %636 = vmatprep.subr.mxu0 %v635
    %v637 = vand.u32 %v120, 4294901760
    %638 = vmatpush1.msra.mxu0 %v637
    %v639 = vand.u32 %v117, 4294901760
    %640 = vmatprep.subr.mxu0 %v639
    %v641 = vand.u32 %v116, 4294901760
    %642 = vmatpush1.msra.mxu0 %v641
    %v643 = vand.u32 %v113, 4294901760
    %644 = vmatprep.subr.mxu0 %v643
    %v645 = vand.u32 %v112, 4294901760
    %646 = vmatpush1.msra.mxu0 %v645
    %v647 = vand.u32 %v109, 4294901760
    %648 = vmatprep.subr.mxu0 %v647
    %v649 = vand.u32 %v108, 4294901760
    %650 = vmatpush1.msra.mxu0 %v649
    %v651 = vand.u32 %v105, 4294901760
    %652 = vmatprep.subr.mxu0 %v651
    %v653 = vand.u32 %v104, 4294901760
    %654 = vmatpush1.msra.mxu0 %v653
    %v655 = vand.u32 %v101, 4294901760
    %656 = vmatprep.subr.mxu0 %v655
    %v657 = vand.u32 %v100, 4294901760
    %658 = vmatpush1.msra.mxu0 %v657
    %v659 = vand.u32 %v97, 4294901760
    %660 = vmatprep.subr.mxu0 %v659
    %v661 = vand.u32 %v96, 4294901760
    %662 = vmatpush1.msra.mxu0 %v661
    %v663 = vand.u32 %v93, 4294901760
    %664 = vmatprep.subr.mxu0 %v663
    %v665 = vand.u32 %v92, 4294901760
    %666 = vmatpush1.msra.mxu0 %v665
    %v667 = vand.u32 %v89, 4294901760
    %668 = vmatprep.subr.mxu0 %v667
    %v669 = vand.u32 %v88, 4294901760
    %670 = vmatpush1.msra.mxu0 %v669
    %v671 = vand.u32 %v85, 4294901760
    %672 = vmatprep.subr.mxu0 %v671
    %v673 = vand.u32 %v84, 4294901760
    %674 = vmatpush1.msra.mxu0 %v673
    %v675 = vand.u32 %v81, 4294901760
    %676 = vmatprep.subr.mxu0 %v675
    %v677 = vand.u32 %v80, 4294901760
    %678 = vmatpush1.msra.mxu0 %v677
    %v679 = vand.u32 %v77, 4294901760
    %680 = vmatprep.subr.mxu0 %v679
    %v681 = vand.u32 %v76, 4294901760
    %682 = vmatpush1.msra.mxu0 %v681
    %v683 = vand.u32 %v73, 4294901760
    %684 = vmatprep.subr.mxu0 %v683
    %v685 = vand.u32 %v72, 4294901760
    %686 = vmatpush1.msra.mxu0 %v685
    %v687 = vand.u32 %v69, 4294901760
    %688 = vmatprep.subr.mxu0 %v687
    %v689 = vand.u32 %v68, 4294901760
    %690 = vmatpush1.msra.mxu0 %v689
    %v691 = vand.u32 %v65, 4294901760
    %692 = vmatprep.subr.mxu0 %v691
    %v693 = vand.u32 %v64, 4294901760
    %694 = vmatpush1.msra.mxu0 %v693
    %695 = vmatprep.subr.mxu0 0.0
    %696 = vmatpush2.msra.mxu0 0.0
    %697 = vmatprep.subr.mxu0 0.0
    %698 = vmatpush2.msra.mxu0 0.0
    %699 = vmatprep.subr.mxu0 0.0
    %700 = vmatpush2.msra.mxu0 0.0
    %701 = vmatprep.subr.mxu0 0.0
    %702 = vmatpush2.msra.mxu0 0.0
    %703 = vmatprep.subr.mxu0 0.0
    %704 = vmatpush2.msra.mxu0 0.0
    %705 = vmatprep.subr.mxu0 0.0
    %706 = vmatpush2.msra.mxu0 0.0
    %707 = vmatprep.subr.mxu0 0.0
    %708 = vmatpush2.msra.mxu0 0.0
    %709 = vmatprep.subr.mxu0 0.0
    %710 = vmatpush2.msra.mxu0 0.0
    %711 = vmatprep.subr.mxu0 0.0
    %712 = vmatpush2.msra.mxu0 0.0
    %713 = vmatprep.subr.mxu0 0.0
    %714 = vmatpush2.msra.mxu0 0.0
    %715 = vmatprep.subr.mxu0 0.0
    %716 = vmatpush2.msra.mxu0 0.0
    %717 = vmatprep.subr.mxu0 0.0
    %718 = vmatpush2.msra.mxu0 0.0
    %719 = vmatprep.subr.mxu0 0.0
    %720 = vmatpush2.msra.mxu0 0.0
    %721 = vmatprep.subr.mxu0 0.0
    %722 = vmatpush2.msra.mxu0 0.0
    %723 = vmatprep.subr.mxu0 0.0
    %724 = vmatpush2.msra.mxu0 0.0
    %725 = vmatprep.subr.mxu0 0.0
    %726 = vmatpush2.msra.mxu0 0.0
    %727 = vmatprep.mubr.f32.mxu0 0.0
    %v728 = vand.u32 %v62, 4294901760
    %v729 = vsub.f32 %v62, %v728
    %v730 = vand.u32 %v729, 4294901760
    %731 = vmatmul.mubr.f32.gmra.mxu0 %v730
    %v732 = vpop.f32.mrf.mxu0
    %v733 = vadd.f32 %v619, %v732
    %v734 = vpop.f32.mrf.mxu0
    %v735 = vadd.f32 %v621, %v734
    %736 = vmatprep.mubr.f32.mxu0 0.0
    %v737 = vand.u32 %v63, 4294901760
    %v738 = vsub.f32 %v63, %v737
    %v739 = vand.u32 %v738, 4294901760
    %740 = vmatmul.mubr.f32.gmra.mxu0 %v739
    %v741 = vpop.f32.mrf.mxu0
    %v742 = vadd.f32 %v627, %v741
    %v743 = vpop.f32.mrf.mxu0
    %v744 = vadd.f32 %v629, %v743
    %745 = vdwg.mxu0
    %v746 = vand.u32 %v125, 4294901760
    %v747 = vsub.f32 %v125, %v746
    %v748 = vand.u32 %v747, 4294901760
    %749 = vmatprep.subr.mxu0 %v748
    %v750 = vand.u32 %v124, 4294901760
    %v751 = vsub.f32 %v124, %v750
    %v752 = vand.u32 %v751, 4294901760
    %753 = vmatpush1.msra.mxu0 %v752
    %v754 = vand.u32 %v121, 4294901760
    %v755 = vsub.f32 %v121, %v754
    %v756 = vand.u32 %v755, 4294901760
    %757 = vmatprep.subr.mxu0 %v756
    %v758 = vand.u32 %v120, 4294901760
    %v759 = vsub.f32 %v120, %v758
    %v760 = vand.u32 %v759, 4294901760
    %761 = vmatpush1.msra.mxu0 %v760
    %v762 = vand.u32 %v117, 4294901760
    %v763 = vsub.f32 %v117, %v762
    %v764 = vand.u32 %v763, 4294901760
    %765 = vmatprep.subr.mxu0 %v764
    %v766 = vand.u32 %v116, 4294901760
    %v767 = vsub.f32 %v116, %v766
    %v768 = vand.u32 %v767, 4294901760
    %769 = vmatpush1.msra.mxu0 %v768
    %v770 = vand.u32 %v113, 4294901760
    %v771 = vsub.f32 %v113, %v770
    %v772 = vand.u32 %v771, 4294901760
    %773 = vmatprep.subr.mxu0 %v772
    %v774 = vand.u32 %v112, 4294901760
    %v775 = vsub.f32 %v112, %v774
    %v776 = vand.u32 %v775, 4294901760
    %777 = vmatpush1.msra.mxu0 %v776
    %v778 = vand.u32 %v109, 4294901760
    %v779 = vsub.f32 %v109, %v778
    %v780 = vand.u32 %v779, 4294901760
    %781 = vmatprep.subr.mxu0 %v780
    %v782 = vand.u32 %v108, 4294901760
    %v783 = vsub.f32 %v108, %v782
    %v784 = vand.u32 %v783, 4294901760
    %785 = vmatpush1.msra.mxu0 %v784
    %v786 = vand.u32 %v105, 4294901760
    %v787 = vsub.f32 %v105, %v786
    %v788 = vand.u32 %v787, 4294901760
    %789 = vmatprep.subr.mxu0 %v788
    %v790 = vand.u32 %v104, 4294901760
    %v791 = vsub.f32 %v104, %v790
    %v792 = vand.u32 %v791, 4294901760
    %793 = vmatpush1.msra.mxu0 %v792
    %v794 = vand.u32 %v101, 4294901760
    %v795 = vsub.f32 %v101, %v794
    %v796 = vand.u32 %v795, 4294901760
    %797 = vmatprep.subr.mxu0 %v796
    %v798 = vand.u32 %v100, 4294901760
    %v799 = vsub.f32 %v100, %v798
    %v800 = vand.u32 %v799, 4294901760
    %801 = vmatpush1.msra.mxu0 %v800
    %v802 = vand.u32 %v97, 4294901760
    %v803 = vsub.f32 %v97, %v802
    %v804 = vand.u32 %v803, 4294901760
    %805 = vmatprep.subr.mxu0 %v804
    %v806 = vand.u32 %v96, 4294901760
    %v807 = vsub.f32 %v96, %v806
    %v808 = vand.u32 %v807, 4294901760
    %809 = vmatpush1.msra.mxu0 %v808
    %v810 = vand.u32 %v93, 4294901760
    %v811 = vsub.f32 %v93, %v810
    %v812 = vand.u32 %v811, 4294901760
    %813 = vmatprep.subr.mxu0 %v812
    %v814 = vand.u32 %v92, 4294901760
    %v815 = vsub.f32 %v92, %v814
    %v816 = vand.u32 %v815, 4294901760
    %817 = vmatpush1.msra.mxu0 %v816
    %v818 = vand.u32 %v89, 4294901760
    %v819 = vsub.f32 %v89, %v818
    %v820 = vand.u32 %v819, 4294901760
    %821 = vmatprep.subr.mxu0 %v820
    %v822 = vand.u32 %v88, 4294901760
    %v823 = vsub.f32 %v88, %v822
    %v824 = vand.u32 %v823, 4294901760
    %825 = vmatpush1.msra.mxu0 %v824
    %v826 = vand.u32 %v85, 4294901760
    %v827 = vsub.f32 %v85, %v826
    %v828 = vand.u32 %v827, 4294901760
    %829 = vmatprep.subr.mxu0 %v828
    %v830 = vand.u32 %v84, 4294901760
    %v831 = vsub.f32 %v84, %v830
    %v832 = vand.u32 %v831, 4294901760
    %833 = vmatpush1.msra.mxu0 %v832
    %v834 = vand.u32 %v81, 4294901760
    %v835 = vsub.f32 %v81, %v834
    %v836 = vand.u32 %v835, 4294901760
    %837 = vmatprep.subr.mxu0 %v836
    %v838 = vand.u32 %v80, 4294901760
    %v839 = vsub.f32 %v80, %v838
    %v840 = vand.u32 %v839, 4294901760
    %841 = vmatpush1.msra.mxu0 %v840
    %v842 = vand.u32 %v77, 4294901760
    %v843 = vsub.f32 %v77, %v842
    %v844 = vand.u32 %v843, 4294901760
    %845 = vmatprep.subr.mxu0 %v844
    %v846 = vand.u32 %v76, 4294901760
    %v847 = vsub.f32 %v76, %v846
    %v848 = vand.u32 %v847, 4294901760
    %849 = vmatpush1.msra.mxu0 %v848
    %v850 = vand.u32 %v73, 4294901760
    %v851 = vsub.f32 %v73, %v850
    %v852 = vand.u32 %v851, 4294901760
    %853 = vmatprep.subr.mxu0 %v852
    %v854 = vand.u32 %v72, 4294901760
    %v855 = vsub.f32 %v72, %v854
    %v856 = vand.u32 %v855, 4294901760
    %857 = vmatpush1.msra.mxu0 %v856
    %v858 = vand.u32 %v69, 4294901760
    %v859 = vsub.f32 %v69, %v858
    %v860 = vand.u32 %v859, 4294901760
    %861 = vmatprep.subr.mxu0 %v860
    %v862 = vand.u32 %v68, 4294901760
    %v863 = vsub.f32 %v68, %v862
    %v864 = vand.u32 %v863, 4294901760
    %865 = vmatpush1.msra.mxu0 %v864
    %v866 = vand.u32 %v65, 4294901760
    %v867 = vsub.f32 %v65, %v866
    %v868 = vand.u32 %v867, 4294901760
    %869 = vmatprep.subr.mxu0 %v868
    %v870 = vand.u32 %v64, 4294901760
    %v871 = vsub.f32 %v64, %v870
    %v872 = vand.u32 %v871, 4294901760
    %873 = vmatpush1.msra.mxu0 %v872
    %874 = vmatprep.subr.mxu0 0.0
    %875 = vmatpush2.msra.mxu0 0.0
    %876 = vmatprep.subr.mxu0 0.0
    %877 = vmatpush2.msra.mxu0 0.0
    %878 = vmatprep.subr.mxu0 0.0
    %879 = vmatpush2.msra.mxu0 0.0
    %880 = vmatprep.subr.mxu0 0.0
    %881 = vmatpush2.msra.mxu0 0.0
    %882 = vmatprep.subr.mxu0 0.0
    %883 = vmatpush2.msra.mxu0 0.0
    %884 = vmatprep.subr.mxu0 0.0
    %885 = vmatpush2.msra.mxu0 0.0
    %886 = vmatprep.subr.mxu0 0.0
    %887 = vmatpush2.msra.mxu0 0.0
    %888 = vmatprep.subr.mxu0 0.0
    %889 = vmatpush2.msra.mxu0 0.0
    %890 = vmatprep.subr.mxu0 0.0
    %891 = vmatpush2.msra.mxu0 0.0
    %892 = vmatprep.subr.mxu0 0.0
    %893 = vmatpush2.msra.mxu0 0.0
    %894 = vmatprep.subr.mxu0 0.0
    %895 = vmatpush2.msra.mxu0 0.0
    %896 = vmatprep.subr.mxu0 0.0
    %897 = vmatpush2.msra.mxu0 0.0
    %898 = vmatprep.subr.mxu0 0.0
    %899 = vmatpush2.msra.mxu0 0.0
    %900 = vmatprep.subr.mxu0 0.0
    %901 = vmatpush2.msra.mxu0 0.0
    %902 = vmatprep.subr.mxu0 0.0
    %903 = vmatpush2.msra.mxu0 0.0
    %904 = vmatprep.subr.mxu0 0.0
    %905 = vmatpush2.msra.mxu0 0.0
    %906 = vmatprep.mubr.f32.mxu0 0.0
    %v907 = vand.u32 %v62, 4294901760
    %908 = vmatmul.mubr.f32.gmra.mxu0 %v907
    %v909 = vpop.f32.mrf.mxu0
    %v910 = vadd.f32 %v733, %v909
    %v911 = vpop.f32.mrf.mxu0
    %v912 = vadd.f32 %v735, %v911
    %913 = vmatprep.mubr.f32.mxu0 0.0
    %v914 = vand.u32 %v63, 4294901760
    %915 = vmatmul.mubr.f32.gmra.mxu0 %v914
    %v916 = vpop.f32.mrf.mxu0
    %v917 = vadd.f32 %v742, %v916
    %v918 = vpop.f32.mrf.mxu0
    %v919 = vadd.f32 %v744, %v918
    %920 = vdwg.mxu0
    %v921 = vand.u32 %v125, 4294901760
    %922 = vmatprep.subr.mxu0 %v921
    %v923 = vand.u32 %v124, 4294901760
    %924 = vmatpush1.msra.mxu0 %v923
    %v925 = vand.u32 %v121, 4294901760
    %926 = vmatprep.subr.mxu0 %v925
    %v927 = vand.u32 %v120, 4294901760
    %928 = vmatpush1.msra.mxu0 %v927
    %v929 = vand.u32 %v117, 4294901760
    %930 = vmatprep.subr.mxu0 %v929
    %v931 = vand.u32 %v116, 4294901760
    %932 = vmatpush1.msra.mxu0 %v931
    %v933 = vand.u32 %v113, 4294901760
    %934 = vmatprep.subr.mxu0 %v933
    %v935 = vand.u32 %v112, 4294901760
    %936 = vmatpush1.msra.mxu0 %v935
    %v937 = vand.u32 %v109, 4294901760
    %938 = vmatprep.subr.mxu0 %v937
    %v939 = vand.u32 %v108, 4294901760
    %940 = vmatpush1.msra.mxu0 %v939
    %v941 = vand.u32 %v105, 4294901760
    %942 = vmatprep.subr.mxu0 %v941
    %v943 = vand.u32 %v104, 4294901760
    %944 = vmatpush1.msra.mxu0 %v943
    %v945 = vand.u32 %v101, 4294901760
    %946 = vmatprep.subr.mxu0 %v945
    %v947 = vand.u32 %v100, 4294901760
    %948 = vmatpush1.msra.mxu0 %v947
    %v949 = vand.u32 %v97, 4294901760
    %950 = vmatprep.subr.mxu0 %v949
    %v951 = vand.u32 %v96, 4294901760
    %952 = vmatpush1.msra.mxu0 %v951
    %v953 = vand.u32 %v93, 4294901760
    %954 = vmatprep.subr.mxu0 %v953
    %v955 = vand.u32 %v92, 4294901760
    %956 = vmatpush1.msra.mxu0 %v955
    %v957 = vand.u32 %v89, 4294901760
    %958 = vmatprep.subr.mxu0 %v957
    %v959 = vand.u32 %v88, 4294901760
    %960 = vmatpush1.msra.mxu0 %v959
    %v961 = vand.u32 %v85, 4294901760
    %962 = vmatprep.subr.mxu0 %v961
    %v963 = vand.u32 %v84, 4294901760
    %964 = vmatpush1.msra.mxu0 %v963
    %v965 = vand.u32 %v81, 4294901760
    %966 = vmatprep.subr.mxu0 %v965
    %v967 = vand.u32 %v80, 4294901760
    %968 = vmatpush1.msra.mxu0 %v967
    %v969 = vand.u32 %v77, 4294901760
    %970 = vmatprep.subr.mxu0 %v969
    %v971 = vand.u32 %v76, 4294901760
    %972 = vmatpush1.msra.mxu0 %v971
    %v973 = vand.u32 %v73, 4294901760
    %974 = vmatprep.subr.mxu0 %v973
    %v975 = vand.u32 %v72, 4294901760
    %976 = vmatpush1.msra.mxu0 %v975
    %v977 = vand.u32 %v69, 4294901760
    %978 = vmatprep.subr.mxu0 %v977
    %v979 = vand.u32 %v68, 4294901760
    %980 = vmatpush1.msra.mxu0 %v979
    %v981 = vand.u32 %v65, 4294901760
    %982 = vmatprep.subr.mxu0 %v981
    %v983 = vand.u32 %v64, 4294901760
    %984 = vmatpush1.msra.mxu0 %v983
    %985 = vmatprep.subr.mxu0 0.0
    %986 = vmatpush2.msra.mxu0 0.0
    %987 = vmatprep.subr.mxu0 0.0
    %988 = vmatpush2.msra.mxu0 0.0
    %989 = vmatprep.subr.mxu0 0.0
    %990 = vmatpush2.msra.mxu0 0.0
    %991 = vmatprep.subr.mxu0 0.0
    %992 = vmatpush2.msra.mxu0 0.0
    %993 = vmatprep.subr.mxu0 0.0
    %994 = vmatpush2.msra.mxu0 0.0
    %995 = vmatprep.subr.mxu0 0.0
    %996 = vmatpush2.msra.mxu0 0.0
    %997 = vmatprep.subr.mxu0 0.0
    %998 = vmatpush2.msra.mxu0 0.0
    %999 = vmatprep.subr.mxu0 0.0
    %1000 = vmatpush2.msra.mxu0 0.0
    %1001 = vmatprep.subr.mxu0 0.0
    %1002 = vmatpush2.msra.mxu0 0.0
    %1003 = vmatprep.subr.mxu0 0.0
    %1004 = vmatpush2.msra.mxu0 0.0
    %1005 = vmatprep.subr.mxu0 0.0
    %1006 = vmatpush2.msra.mxu0 0.0
    %1007 = vmatprep.subr.mxu0 0.0
    %1008 = vmatpush2.msra.mxu0 0.0
    %1009 = vmatprep.subr.mxu0 0.0
    %1010 = vmatpush2.msra.mxu0 0.0
    %1011 = vmatprep.subr.mxu0 0.0
    %1012 = vmatpush2.msra.mxu0 0.0
    %1013 = vmatprep.subr.mxu0 0.0
    %1014 = vmatpush2.msra.mxu0 0.0
    %1015 = vmatprep.subr.mxu0 0.0
    %1016 = vmatpush2.msra.mxu0 0.0
    %1017 = vmatprep.mubr.f32.mxu0 0.0
    %v1018 = vand.u32 %v62, 4294901760
    %1019 = vmatmul.mubr.f32.gmra.mxu0 %v1018
    %v1020 = vpop.f32.mrf.mxu0
    %v1021 = vadd.f32 %v910, %v1020
    %v1022 = vpop.f32.mrf.mxu0
    %v1023 = vadd.f32 %v912, %v1022
    %1024 = vmatprep.mubr.f32.mxu0 0.0
    %v1025 = vand.u32 %v63, 4294901760
    %1026 = vmatmul.mubr.f32.gmra.mxu0 %v1025
    %v1027 = vpop.f32.mrf.mxu0
    %v1028 = vadd.f32 %v917, %v1027
    %v1029 = vpop.f32.mrf.mxu0
    %v1030 = vadd.f32 %v919, %v1029
    %1031 = vdwg.mxu0
    %v1032 = vand.u32 %v127, 4294901760
    %1033 = vmatprep.subr.mxu0 %v1032
    %v1034 = vand.u32 %v126, 4294901760
    %1035 = vmatpush1.msra.mxu0 %v1034
    %v1036 = vand.u32 %v123, 4294901760
    %1037 = vmatprep.subr.mxu0 %v1036
    %v1038 = vand.u32 %v122, 4294901760
    %1039 = vmatpush1.msra.mxu0 %v1038
    %v1040 = vand.u32 %v119, 4294901760
    %1041 = vmatprep.subr.mxu0 %v1040
    %v1042 = vand.u32 %v118, 4294901760
    %1043 = vmatpush1.msra.mxu0 %v1042
    %v1044 = vand.u32 %v115, 4294901760
    %1045 = vmatprep.subr.mxu0 %v1044
    %v1046 = vand.u32 %v114, 4294901760
    %1047 = vmatpush1.msra.mxu0 %v1046
    %v1048 = vand.u32 %v111, 4294901760
    %1049 = vmatprep.subr.mxu0 %v1048
    %v1050 = vand.u32 %v110, 4294901760
    %1051 = vmatpush1.msra.mxu0 %v1050
    %v1052 = vand.u32 %v107, 4294901760
    %1053 = vmatprep.subr.mxu0 %v1052
    %v1054 = vand.u32 %v106, 4294901760
    %1055 = vmatpush1.msra.mxu0 %v1054
    %v1056 = vand.u32 %v103, 4294901760
    %1057 = vmatprep.subr.mxu0 %v1056
    %v1058 = vand.u32 %v102, 4294901760
    %1059 = vmatpush1.msra.mxu0 %v1058
    %v1060 = vand.u32 %v99, 4294901760
    %1061 = vmatprep.subr.mxu0 %v1060
    %v1062 = vand.u32 %v98, 4294901760
    %1063 = vmatpush1.msra.mxu0 %v1062
    %v1064 = vand.u32 %v95, 4294901760
    %1065 = vmatprep.subr.mxu0 %v1064
    %v1066 = vand.u32 %v94, 4294901760
    %1067 = vmatpush1.msra.mxu0 %v1066
    %v1068 = vand.u32 %v91, 4294901760
    %1069 = vmatprep.subr.mxu0 %v1068
    %v1070 = vand.u32 %v90, 4294901760
    %1071 = vmatpush1.msra.mxu0 %v1070
    %v1072 = vand.u32 %v87, 4294901760
    %1073 = vmatprep.subr.mxu0 %v1072
    %v1074 = vand.u32 %v86, 4294901760
    %1075 = vmatpush1.msra.mxu0 %v1074
    %v1076 = vand.u32 %v83, 4294901760
    %1077 = vmatprep.subr.mxu0 %v1076
    %v1078 = vand.u32 %v82, 4294901760
    %1079 = vmatpush1.msra.mxu0 %v1078
    %v1080 = vand.u32 %v79, 4294901760
    %1081 = vmatprep.subr.mxu0 %v1080
    %v1082 = vand.u32 %v78, 4294901760
    %1083 = vmatpush1.msra.mxu0 %v1082
    %v1084 = vand.u32 %v75, 4294901760
    %1085 = vmatprep.subr.mxu0 %v1084
    %v1086 = vand.u32 %v74, 4294901760
    %1087 = vmatpush1.msra.mxu0 %v1086
    %v1088 = vand.u32 %v71, 4294901760
    %1089 = vmatprep.subr.mxu0 %v1088
    %v1090 = vand.u32 %v70, 4294901760
    %1091 = vmatpush1.msra.mxu0 %v1090
    %v1092 = vand.u32 %v67, 4294901760
    %1093 = vmatprep.subr.mxu0 %v1092
    %v1094 = vand.u32 %v66, 4294901760
    %1095 = vmatpush1.msra.mxu0 %v1094
    %1096 = vmatprep.subr.mxu0 0.0
    %1097 = vmatpush2.msra.mxu0 0.0
    %1098 = vmatprep.subr.mxu0 0.0
    %1099 = vmatpush2.msra.mxu0 0.0
    %1100 = vmatprep.subr.mxu0 0.0
    %1101 = vmatpush2.msra.mxu0 0.0
    %1102 = vmatprep.subr.mxu0 0.0
    %1103 = vmatpush2.msra.mxu0 0.0
    %1104 = vmatprep.subr.mxu0 0.0
    %1105 = vmatpush2.msra.mxu0 0.0
    %1106 = vmatprep.subr.mxu0 0.0
    %1107 = vmatpush2.msra.mxu0 0.0
    %1108 = vmatprep.subr.mxu0 0.0
    %1109 = vmatpush2.msra.mxu0 0.0
    %1110 = vmatprep.subr.mxu0 0.0
    %1111 = vmatpush2.msra.mxu0 0.0
    %1112 = vmatprep.subr.mxu0 0.0
    %1113 = vmatpush2.msra.mxu0 0.0
    %1114 = vmatprep.subr.mxu0 0.0
    %1115 = vmatpush2.msra.mxu0 0.0
    %1116 = vmatprep.subr.mxu0 0.0
    %1117 = vmatpush2.msra.mxu0 0.0
    %1118 = vmatprep.subr.mxu0 0.0
    %1119 = vmatpush2.msra.mxu0 0.0
    %1120 = vmatprep.subr.mxu0 0.0
    %1121 = vmatpush2.msra.mxu0 0.0
    %1122 = vmatprep.subr.mxu0 0.0
    %1123 = vmatpush2.msra.mxu0 0.0
    %1124 = vmatprep.subr.mxu0 0.0
    %1125 = vmatpush2.msra.mxu0 0.0
    %1126 = vmatprep.subr.mxu0 0.0
    %1127 = vmatpush2.msra.mxu0 0.0
    %1128 = vmatprep.mubr.f32.mxu0 0.0
    %v1129 = vand.u32 %v62, 4294901760
    %v1130 = vsub.f32 %v62, %v1129
    %v1131 = vand.u32 %v1130, 4294901760
    %v1132 = vsub.f32 %v1130, %v1131
    %v1133 = vand.u32 %v1132, 4294901760
    %1134 = vmatmul.mubr.f32.gmra.mxu0 %v1133
    %v1135 = vpop.f32.mrf.mxu0
    %v1136 = vadd.f32 0.0, %v1135
    %v1137 = vpop.f32.mrf.mxu0
    %v1138 = vadd.f32 0.0, %v1137
    %1139 = vmatprep.mubr.f32.mxu0 0.0
    %v1140 = vand.u32 %v63, 4294901760
    %v1141 = vsub.f32 %v63, %v1140
    %v1142 = vand.u32 %v1141, 4294901760
    %v1143 = vsub.f32 %v1141, %v1142
    %v1144 = vand.u32 %v1143, 4294901760
    %1145 = vmatmul.mubr.f32.gmra.mxu0 %v1144
    %v1146 = vpop.f32.mrf.mxu0
    %v1147 = vadd.f32 0.0, %v1146
    %v1148 = vpop.f32.mrf.mxu0
    %v1149 = vadd.f32 0.0, %v1148
    %1150 = vdwg.mxu0
    %v1151 = vand.u32 %v127, 4294901760
    %v1152 = vsub.f32 %v127, %v1151
    %v1153 = vand.u32 %v1152, 4294901760
    %v1154 = vsub.f32 %v1152, %v1153
    %v1155 = vand.u32 %v1154, 4294901760
    %1156 = vmatprep.subr.mxu0 %v1155
    %v1157 = vand.u32 %v126, 4294901760
    %v1158 = vsub.f32 %v126, %v1157
    %v1159 = vand.u32 %v1158, 4294901760
    %v1160 = vsub.f32 %v1158, %v1159
    %v1161 = vand.u32 %v1160, 4294901760
    %1162 = vmatpush1.msra.mxu0 %v1161
    %v1163 = vand.u32 %v123, 4294901760
    %v1164 = vsub.f32 %v123, %v1163
    %v1165 = vand.u32 %v1164, 4294901760
    %v1166 = vsub.f32 %v1164, %v1165
    %v1167 = vand.u32 %v1166, 4294901760
    %1168 = vmatprep.subr.mxu0 %v1167
    %v1169 = vand.u32 %v122, 4294901760
    %v1170 = vsub.f32 %v122, %v1169
    %v1171 = vand.u32 %v1170, 4294901760
    %v1172 = vsub.f32 %v1170, %v1171
    %v1173 = vand.u32 %v1172, 4294901760
    %1174 = vmatpush1.msra.mxu0 %v1173
    %v1175 = vand.u32 %v119, 4294901760
    %v1176 = vsub.f32 %v119, %v1175
    %v1177 = vand.u32 %v1176, 4294901760
    %v1178 = vsub.f32 %v1176, %v1177
    %v1179 = vand.u32 %v1178, 4294901760
    %1180 = vmatprep.subr.mxu0 %v1179
    %v1181 = vand.u32 %v118, 4294901760
    %v1182 = vsub.f32 %v118, %v1181
    %v1183 = vand.u32 %v1182, 4294901760
    %v1184 = vsub.f32 %v1182, %v1183
    %v1185 = vand.u32 %v1184, 4294901760
    %1186 = vmatpush1.msra.mxu0 %v1185
    %v1187 = vand.u32 %v115, 4294901760
    %v1188 = vsub.f32 %v115, %v1187
    %v1189 = vand.u32 %v1188, 4294901760
    %v1190 = vsub.f32 %v1188, %v1189
    %v1191 = vand.u32 %v1190, 4294901760
    %1192 = vmatprep.subr.mxu0 %v1191
    %v1193 = vand.u32 %v114, 4294901760
    %v1194 = vsub.f32 %v114, %v1193
    %v1195 = vand.u32 %v1194, 4294901760
    %v1196 = vsub.f32 %v1194, %v1195
    %v1197 = vand.u32 %v1196, 4294901760
    %1198 = vmatpush1.msra.mxu0 %v1197
    %v1199 = vand.u32 %v111, 4294901760
    %v1200 = vsub.f32 %v111, %v1199
    %v1201 = vand.u32 %v1200, 4294901760
    %v1202 = vsub.f32 %v1200, %v1201
    %v1203 = vand.u32 %v1202, 4294901760
    %1204 = vmatprep.subr.mxu0 %v1203
    %v1205 = vand.u32 %v110, 4294901760
    %v1206 = vsub.f32 %v110, %v1205
    %v1207 = vand.u32 %v1206, 4294901760
    %v1208 = vsub.f32 %v1206, %v1207
    %v1209 = vand.u32 %v1208, 4294901760
    %1210 = vmatpush1.msra.mxu0 %v1209
    %v1211 = vand.u32 %v107, 4294901760
    %v1212 = vsub.f32 %v107, %v1211
    %v1213 = vand.u32 %v1212, 4294901760
    %v1214 = vsub.f32 %v1212, %v1213
    %v1215 = vand.u32 %v1214, 4294901760
    %1216 = vmatprep.subr.mxu0 %v1215
    %v1217 = vand.u32 %v106, 4294901760
    %v1218 = vsub.f32 %v106, %v1217
    %v1219 = vand.u32 %v1218, 4294901760
    %v1220 = vsub.f32 %v1218, %v1219
    %v1221 = vand.u32 %v1220, 4294901760
    %1222 = vmatpush1.msra.mxu0 %v1221
    %v1223 = vand.u32 %v103, 4294901760
    %v1224 = vsub.f32 %v103, %v1223
    %v1225 = vand.u32 %v1224, 4294901760
    %v1226 = vsub.f32 %v1224, %v1225
    %v1227 = vand.u32 %v1226, 4294901760
    %1228 = vmatprep.subr.mxu0 %v1227
    %v1229 = vand.u32 %v102, 4294901760
    %v1230 = vsub.f32 %v102, %v1229
    %v1231 = vand.u32 %v1230, 4294901760
    %v1232 = vsub.f32 %v1230, %v1231
    %v1233 = vand.u32 %v1232, 4294901760
    %1234 = vmatpush1.msra.mxu0 %v1233
    %v1235 = vand.u32 %v99, 4294901760
    %v1236 = vsub.f32 %v99, %v1235
    %v1237 = vand.u32 %v1236, 4294901760
    %v1238 = vsub.f32 %v1236, %v1237
    %v1239 = vand.u32 %v1238, 4294901760
    %1240 = vmatprep.subr.mxu0 %v1239
    %v1241 = vand.u32 %v98, 4294901760
    %v1242 = vsub.f32 %v98, %v1241
    %v1243 = vand.u32 %v1242, 4294901760
    %v1244 = vsub.f32 %v1242, %v1243
    %v1245 = vand.u32 %v1244, 4294901760
    %1246 = vmatpush1.msra.mxu0 %v1245
    %v1247 = vand.u32 %v95, 4294901760
    %v1248 = vsub.f32 %v95, %v1247
    %v1249 = vand.u32 %v1248, 4294901760
    %v1250 = vsub.f32 %v1248, %v1249
    %v1251 = vand.u32 %v1250, 4294901760
    %1252 = vmatprep.subr.mxu0 %v1251
    %v1253 = vand.u32 %v94, 4294901760
    %v1254 = vsub.f32 %v94, %v1253
    %v1255 = vand.u32 %v1254, 4294901760
    %v1256 = vsub.f32 %v1254, %v1255
    %v1257 = vand.u32 %v1256, 4294901760
    %1258 = vmatpush1.msra.mxu0 %v1257
    %v1259 = vand.u32 %v91, 4294901760
    %v1260 = vsub.f32 %v91, %v1259
    %v1261 = vand.u32 %v1260, 4294901760
    %v1262 = vsub.f32 %v1260, %v1261
    %v1263 = vand.u32 %v1262, 4294901760
    %1264 = vmatprep.subr.mxu0 %v1263
    %v1265 = vand.u32 %v90, 4294901760
    %v1266 = vsub.f32 %v90, %v1265
    %v1267 = vand.u32 %v1266, 4294901760
    %v1268 = vsub.f32 %v1266, %v1267
    %v1269 = vand.u32 %v1268, 4294901760
    %1270 = vmatpush1.msra.mxu0 %v1269
    %v1271 = vand.u32 %v87, 4294901760
    %v1272 = vsub.f32 %v87, %v1271
    %v1273 = vand.u32 %v1272, 4294901760
    %v1274 = vsub.f32 %v1272, %v1273
    %v1275 = vand.u32 %v1274, 4294901760
    %1276 = vmatprep.subr.mxu0 %v1275
    %v1277 = vand.u32 %v86, 4294901760
    %v1278 = vsub.f32 %v86, %v1277
    %v1279 = vand.u32 %v1278, 4294901760
    %v1280 = vsub.f32 %v1278, %v1279
    %v1281 = vand.u32 %v1280, 4294901760
    %1282 = vmatpush1.msra.mxu0 %v1281
    %v1283 = vand.u32 %v83, 4294901760
    %v1284 = vsub.f32 %v83, %v1283
    %v1285 = vand.u32 %v1284, 4294901760
    %v1286 = vsub.f32 %v1284, %v1285
    %v1287 = vand.u32 %v1286, 4294901760
    %1288 = vmatprep.subr.mxu0 %v1287
    %v1289 = vand.u32 %v82, 4294901760
    %v1290 = vsub.f32 %v82, %v1289
    %v1291 = vand.u32 %v1290, 4294901760
    %v1292 = vsub.f32 %v1290, %v1291
    %v1293 = vand.u32 %v1292, 4294901760
    %1294 = vmatpush1.msra.mxu0 %v1293
    %v1295 = vand.u32 %v79, 4294901760
    %v1296 = vsub.f32 %v79, %v1295
    %v1297 = vand.u32 %v1296, 4294901760
    %v1298 = vsub.f32 %v1296, %v1297
    %v1299 = vand.u32 %v1298, 4294901760
    %1300 = vmatprep.subr.mxu0 %v1299
    %v1301 = vand.u32 %v78, 4294901760
    %v1302 = vsub.f32 %v78, %v1301
    %v1303 = vand.u32 %v1302, 4294901760
    %v1304 = vsub.f32 %v1302, %v1303
    %v1305 = vand.u32 %v1304, 4294901760
    %1306 = vmatpush1.msra.mxu0 %v1305
    %v1307 = vand.u32 %v75, 4294901760
    %v1308 = vsub.f32 %v75, %v1307
    %v1309 = vand.u32 %v1308, 4294901760
    %v1310 = vsub.f32 %v1308, %v1309
    %v1311 = vand.u32 %v1310, 4294901760
    %1312 = vmatprep.subr.mxu0 %v1311
    %v1313 = vand.u32 %v74, 4294901760
    %v1314 = vsub.f32 %v74, %v1313
    %v1315 = vand.u32 %v1314, 4294901760
    %v1316 = vsub.f32 %v1314, %v1315
    %v1317 = vand.u32 %v1316, 4294901760
    %1318 = vmatpush1.msra.mxu0 %v1317
    %v1319 = vand.u32 %v71, 4294901760
    %v1320 = vsub.f32 %v71, %v1319
    %v1321 = vand.u32 %v1320, 4294901760
    %v1322 = vsub.f32 %v1320, %v1321
    %v1323 = vand.u32 %v1322, 4294901760
    %1324 = vmatprep.subr.mxu0 %v1323
    %v1325 = vand.u32 %v70, 4294901760
    %v1326 = vsub.f32 %v70, %v1325
    %v1327 = vand.u32 %v1326, 4294901760
    %v1328 = vsub.f32 %v1326, %v1327
    %v1329 = vand.u32 %v1328, 4294901760
    %1330 = vmatpush1.msra.mxu0 %v1329
    %v1331 = vand.u32 %v67, 4294901760
    %v1332 = vsub.f32 %v67, %v1331
    %v1333 = vand.u32 %v1332, 4294901760
    %v1334 = vsub.f32 %v1332, %v1333
    %v1335 = vand.u32 %v1334, 4294901760
    %1336 = vmatprep.subr.mxu0 %v1335
    %v1337 = vand.u32 %v66, 4294901760
    %v1338 = vsub.f32 %v66, %v1337
    %v1339 = vand.u32 %v1338, 4294901760
    %v1340 = vsub.f32 %v1338, %v1339
    %v1341 = vand.u32 %v1340, 4294901760
    %1342 = vmatpush1.msra.mxu0 %v1341
    %1343 = vmatprep.subr.mxu0 0.0
    %1344 = vmatpush2.msra.mxu0 0.0
    %1345 = vmatprep.subr.mxu0 0.0
    %1346 = vmatpush2.msra.mxu0 0.0
    %1347 = vmatprep.subr.mxu0 0.0
    %1348 = vmatpush2.msra.mxu0 0.0
    %1349 = vmatprep.subr.mxu0 0.0
    %1350 = vmatpush2.msra.mxu0 0.0
    %1351 = vmatprep.subr.mxu0 0.0
    %1352 = vmatpush2.msra.mxu0 0.0
    %1353 = vmatprep.subr.mxu0 0.0
    %1354 = vmatpush2.msra.mxu0 0.0
    %1355 = vmatprep.subr.mxu0 0.0
    %1356 = vmatpush2.msra.mxu0 0.0
    %1357 = vmatprep.subr.mxu0 0.0
    %1358 = vmatpush2.msra.mxu0 0.0
    %1359 = vmatprep.subr.mxu0 0.0
    %1360 = vmatpush2.msra.mxu0 0.0
    %1361 = vmatprep.subr.mxu0 0.0
    %1362 = vmatpush2.msra.mxu0 0.0
    %1363 = vmatprep.subr.mxu0 0.0
    %1364 = vmatpush2.msra.mxu0 0.0
    %1365 = vmatprep.subr.mxu0 0.0
    %1366 = vmatpush2.msra.mxu0 0.0
    %1367 = vmatprep.subr.mxu0 0.0
    %1368 = vmatpush2.msra.mxu0 0.0
    %1369 = vmatprep.subr.mxu0 0.0
    %1370 = vmatpush2.msra.mxu0 0.0
    %1371 = vmatprep.subr.mxu0 0.0
    %1372 = vmatpush2.msra.mxu0 0.0
    %1373 = vmatprep.subr.mxu0 0.0
    %1374 = vmatpush2.msra.mxu0 0.0
    %1375 = vmatprep.mubr.f32.mxu0 0.0
    %v1376 = vand.u32 %v62, 4294901760
    %1377 = vmatmul.mubr.f32.gmra.mxu0 %v1376
    %v1378 = vpop.f32.mrf.mxu0
    %v1379 = vadd.f32 %v1136, %v1378
    %v1380 = vpop.f32.mrf.mxu0
    %v1381 = vadd.f32 %v1138, %v1380
    %1382 = vmatprep.mubr.f32.mxu0 0.0
    %v1383 = vand.u32 %v63, 4294901760
    %1384 = vmatmul.mubr.f32.gmra.mxu0 %v1383
    %v1385 = vpop.f32.mrf.mxu0
    %v1386 = vadd.f32 %v1147, %v1385
    %v1387 = vpop.f32.mrf.mxu0
    %v1388 = vadd.f32 %v1149, %v1387
    %1389 = vdwg.mxu0
    %v1390 = vand.u32 %v127, 4294901760
    %v1391 = vsub.f32 %v127, %v1390
    %1392 = vmatprep.subr.mxu0 %v1391
    %v1393 = vand.u32 %v126, 4294901760
    %v1394 = vsub.f32 %v126, %v1393
    %1395 = vmatpush1.msra.mxu0 %v1394
    %v1396 = vand.u32 %v123, 4294901760
    %v1397 = vsub.f32 %v123, %v1396
    %1398 = vmatprep.subr.mxu0 %v1397
    %v1399 = vand.u32 %v122, 4294901760
    %v1400 = vsub.f32 %v122, %v1399
    %1401 = vmatpush1.msra.mxu0 %v1400
    %v1402 = vand.u32 %v119, 4294901760
    %v1403 = vsub.f32 %v119, %v1402
    %1404 = vmatprep.subr.mxu0 %v1403
    %v1405 = vand.u32 %v118, 4294901760
    %v1406 = vsub.f32 %v118, %v1405
    %1407 = vmatpush1.msra.mxu0 %v1406
    %v1408 = vand.u32 %v115, 4294901760
    %v1409 = vsub.f32 %v115, %v1408
    %1410 = vmatprep.subr.mxu0 %v1409
    %v1411 = vand.u32 %v114, 4294901760
    %v1412 = vsub.f32 %v114, %v1411
    %1413 = vmatpush1.msra.mxu0 %v1412
    %v1414 = vand.u32 %v111, 4294901760
    %v1415 = vsub.f32 %v111, %v1414
    %1416 = vmatprep.subr.mxu0 %v1415
    %v1417 = vand.u32 %v110, 4294901760
    %v1418 = vsub.f32 %v110, %v1417
    %1419 = vmatpush1.msra.mxu0 %v1418
    %v1420 = vand.u32 %v107, 4294901760
    %v1421 = vsub.f32 %v107, %v1420
    %1422 = vmatprep.subr.mxu0 %v1421
    %v1423 = vand.u32 %v106, 4294901760
    %v1424 = vsub.f32 %v106, %v1423
    %1425 = vmatpush1.msra.mxu0 %v1424
    %v1426 = vand.u32 %v103, 4294901760
    %v1427 = vsub.f32 %v103, %v1426
    %1428 = vmatprep.subr.mxu0 %v1427
    %v1429 = vand.u32 %v102, 4294901760
    %v1430 = vsub.f32 %v102, %v1429
    %1431 = vmatpush1.msra.mxu0 %v1430
    %v1432 = vand.u32 %v99, 4294901760
    %v1433 = vsub.f32 %v99, %v1432
    %1434 = vmatprep.subr.mxu0 %v1433
    %v1435 = vand.u32 %v98, 4294901760
    %v1436 = vsub.f32 %v98, %v1435
    %1437 = vmatpush1.msra.mxu0 %v1436
    %v1438 = vand.u32 %v95, 4294901760
    %v1439 = vsub.f32 %v95, %v1438
    %1440 = vmatprep.subr.mxu0 %v1439
    %v1441 = vand.u32 %v94, 4294901760
    %v1442 = vsub.f32 %v94, %v1441
    %1443 = vmatpush1.msra.mxu0 %v1442
    %v1444 = vand.u32 %v91, 4294901760
    %v1445 = vsub.f32 %v91, %v1444
    %1446 = vmatprep.subr.mxu0 %v1445
    %v1447 = vand.u32 %v90, 4294901760
    %v1448 = vsub.f32 %v90, %v1447
    %1449 = vmatpush1.msra.mxu0 %v1448
    %v1450 = vand.u32 %v87, 4294901760
    %v1451 = vsub.f32 %v87, %v1450
    %1452 = vmatprep.subr.mxu0 %v1451
    %v1453 = vand.u32 %v86, 4294901760
    %v1454 = vsub.f32 %v86, %v1453
    %1455 = vmatpush1.msra.mxu0 %v1454
    %v1456 = vand.u32 %v83, 4294901760
    %v1457 = vsub.f32 %v83, %v1456
    %1458 = vmatprep.subr.mxu0 %v1457
    %v1459 = vand.u32 %v82, 4294901760
    %v1460 = vsub.f32 %v82, %v1459
    %1461 = vmatpush1.msra.mxu0 %v1460
    %v1462 = vand.u32 %v79, 4294901760
    %v1463 = vsub.f32 %v79, %v1462
    %1464 = vmatprep.subr.mxu0 %v1463
    %v1465 = vand.u32 %v78, 4294901760
    %v1466 = vsub.f32 %v78, %v1465
    %1467 = vmatpush1.msra.mxu0 %v1466
    %v1468 = vand.u32 %v75, 4294901760
    %v1469 = vsub.f32 %v75, %v1468
    %1470 = vmatprep.subr.mxu0 %v1469
    %v1471 = vand.u32 %v74, 4294901760
    %v1472 = vsub.f32 %v74, %v1471
    %1473 = vmatpush1.msra.mxu0 %v1472
    %v1474 = vand.u32 %v71, 4294901760
    %v1475 = vsub.f32 %v71, %v1474
    %1476 = vmatprep.subr.mxu0 %v1475
    %v1477 = vand.u32 %v70, 4294901760
    %v1478 = vsub.f32 %v70, %v1477
    %1479 = vmatpush1.msra.mxu0 %v1478
    %v1480 = vand.u32 %v67, 4294901760
    %v1481 = vsub.f32 %v67, %v1480
    %1482 = vmatprep.subr.mxu0 %v1481
    %v1483 = vand.u32 %v66, 4294901760
    %v1484 = vsub.f32 %v66, %v1483
    %1485 = vmatpush1.msra.mxu0 %v1484
    %1486 = vmatprep.subr.mxu0 0.0
    %1487 = vmatpush2.msra.mxu0 0.0
    %1488 = vmatprep.subr.mxu0 0.0
    %1489 = vmatpush2.msra.mxu0 0.0
    %1490 = vmatprep.subr.mxu0 0.0
    %1491 = vmatpush2.msra.mxu0 0.0
    %1492 = vmatprep.subr.mxu0 0.0
    %1493 = vmatpush2.msra.mxu0 0.0
    %1494 = vmatprep.subr.mxu0 0.0
    %1495 = vmatpush2.msra.mxu0 0.0
    %1496 = vmatprep.subr.mxu0 0.0
    %1497 = vmatpush2.msra.mxu0 0.0
    %1498 = vmatprep.subr.mxu0 0.0
    %1499 = vmatpush2.msra.mxu0 0.0
    %1500 = vmatprep.subr.mxu0 0.0
    %1501 = vmatpush2.msra.mxu0 0.0
    %1502 = vmatprep.subr.mxu0 0.0
    %1503 = vmatpush2.msra.mxu0 0.0
    %1504 = vmatprep.subr.mxu0 0.0
    %1505 = vmatpush2.msra.mxu0 0.0
    %1506 = vmatprep.subr.mxu0 0.0
    %1507 = vmatpush2.msra.mxu0 0.0
    %1508 = vmatprep.subr.mxu0 0.0
    %1509 = vmatpush2.msra.mxu0 0.0
    %1510 = vmatprep.subr.mxu0 0.0
    %1511 = vmatpush2.msra.mxu0 0.0
    %1512 = vmatprep.subr.mxu0 0.0
    %1513 = vmatpush2.msra.mxu0 0.0
    %1514 = vmatprep.subr.mxu0 0.0
    %1515 = vmatpush2.msra.mxu0 0.0
    %1516 = vmatprep.subr.mxu0 0.0
    %1517 = vmatpush2.msra.mxu0 0.0
    %1518 = vmatprep.mubr.f32.mxu0 0.0
    %v1519 = vand.u32 %v62, 4294901760
    %v1520 = vsub.f32 %v62, %v1519
    %1521 = vmatmul.mubr.f32.gmra.mxu0 %v1520
    %v1522 = vpop.f32.mrf.mxu0
    %v1523 = vadd.f32 %v1379, %v1522
    %v1524 = vpop.f32.mrf.mxu0
    %v1525 = vadd.f32 %v1381, %v1524
    %1526 = vmatprep.mubr.f32.mxu0 0.0
    %v1527 = vand.u32 %v63, 4294901760
    %v1528 = vsub.f32 %v63, %v1527
    %1529 = vmatmul.mubr.f32.gmra.mxu0 %v1528
    %v1530 = vpop.f32.mrf.mxu0
    %v1531 = vadd.f32 %v1386, %v1530
    %v1532 = vpop.f32.mrf.mxu0
    %v1533 = vadd.f32 %v1388, %v1532
    %1534 = vdwg.mxu0
    %v1535 = vand.u32 %v127, 4294901760
    %1536 = vmatprep.subr.mxu0 %v1535
    %v1537 = vand.u32 %v126, 4294901760
    %1538 = vmatpush1.msra.mxu0 %v1537
    %v1539 = vand.u32 %v123, 4294901760
    %1540 = vmatprep.subr.mxu0 %v1539
    %v1541 = vand.u32 %v122, 4294901760
    %1542 = vmatpush1.msra.mxu0 %v1541
    %v1543 = vand.u32 %v119, 4294901760
    %1544 = vmatprep.subr.mxu0 %v1543
    %v1545 = vand.u32 %v118, 4294901760
    %1546 = vmatpush1.msra.mxu0 %v1545
    %v1547 = vand.u32 %v115, 4294901760
    %1548 = vmatprep.subr.mxu0 %v1547
    %v1549 = vand.u32 %v114, 4294901760
    %1550 = vmatpush1.msra.mxu0 %v1549
    %v1551 = vand.u32 %v111, 4294901760
    %1552 = vmatprep.subr.mxu0 %v1551
    %v1553 = vand.u32 %v110, 4294901760
    %1554 = vmatpush1.msra.mxu0 %v1553
    %v1555 = vand.u32 %v107, 4294901760
    %1556 = vmatprep.subr.mxu0 %v1555
    %v1557 = vand.u32 %v106, 4294901760
    %1558 = vmatpush1.msra.mxu0 %v1557
    %v1559 = vand.u32 %v103, 4294901760
    %1560 = vmatprep.subr.mxu0 %v1559
    %v1561 = vand.u32 %v102, 4294901760
    %1562 = vmatpush1.msra.mxu0 %v1561
    %v1563 = vand.u32 %v99, 4294901760
    %1564 = vmatprep.subr.mxu0 %v1563
    %v1565 = vand.u32 %v98, 4294901760
    %1566 = vmatpush1.msra.mxu0 %v1565
    %v1567 = vand.u32 %v95, 4294901760
    %1568 = vmatprep.subr.mxu0 %v1567
    %v1569 = vand.u32 %v94, 4294901760
    %1570 = vmatpush1.msra.mxu0 %v1569
    %v1571 = vand.u32 %v91, 4294901760
    %1572 = vmatprep.subr.mxu0 %v1571
    %v1573 = vand.u32 %v90, 4294901760
    %1574 = vmatpush1.msra.mxu0 %v1573
    %v1575 = vand.u32 %v87, 4294901760
    %1576 = vmatprep.subr.mxu0 %v1575
    %v1577 = vand.u32 %v86, 4294901760
    %1578 = vmatpush1.msra.mxu0 %v1577
    %v1579 = vand.u32 %v83, 4294901760
    %1580 = vmatprep.subr.mxu0 %v1579
    %v1581 = vand.u32 %v82, 4294901760
    %1582 = vmatpush1.msra.mxu0 %v1581
    %v1583 = vand.u32 %v79, 4294901760
    %1584 = vmatprep.subr.mxu0 %v1583
    %v1585 = vand.u32 %v78, 4294901760
    %1586 = vmatpush1.msra.mxu0 %v1585
    %v1587 = vand.u32 %v75, 4294901760
    %1588 = vmatprep.subr.mxu0 %v1587
    %v1589 = vand.u32 %v74, 4294901760
    %1590 = vmatpush1.msra.mxu0 %v1589
    %v1591 = vand.u32 %v71, 4294901760
    %1592 = vmatprep.subr.mxu0 %v1591
    %v1593 = vand.u32 %v70, 4294901760
    %1594 = vmatpush1.msra.mxu0 %v1593
    %v1595 = vand.u32 %v67, 4294901760
    %1596 = vmatprep.subr.mxu0 %v1595
    %v1597 = vand.u32 %v66, 4294901760
    %1598 = vmatpush1.msra.mxu0 %v1597
    %1599 = vmatprep.subr.mxu0 0.0
    %1600 = vmatpush2.msra.mxu0 0.0
    %1601 = vmatprep.subr.mxu0 0.0
    %1602 = vmatpush2.msra.mxu0 0.0
    %1603 = vmatprep.subr.mxu0 0.0
    %1604 = vmatpush2.msra.mxu0 0.0
    %1605 = vmatprep.subr.mxu0 0.0
    %1606 = vmatpush2.msra.mxu0 0.0
    %1607 = vmatprep.subr.mxu0 0.0
    %1608 = vmatpush2.msra.mxu0 0.0
    %1609 = vmatprep.subr.mxu0 0.0
    %1610 = vmatpush2.msra.mxu0 0.0
    %1611 = vmatprep.subr.mxu0 0.0
    %1612 = vmatpush2.msra.mxu0 0.0
    %1613 = vmatprep.subr.mxu0 0.0
    %1614 = vmatpush2.msra.mxu0 0.0
    %1615 = vmatprep.subr.mxu0 0.0
    %1616 = vmatpush2.msra.mxu0 0.0
    %1617 = vmatprep.subr.mxu0 0.0
    %1618 = vmatpush2.msra.mxu0 0.0
    %1619 = vmatprep.subr.mxu0 0.0
    %1620 = vmatpush2.msra.mxu0 0.0
    %1621 = vmatprep.subr.mxu0 0.0
    %1622 = vmatpush2.msra.mxu0 0.0
    %1623 = vmatprep.subr.mxu0 0.0
    %1624 = vmatpush2.msra.mxu0 0.0
    %1625 = vmatprep.subr.mxu0 0.0
    %1626 = vmatpush2.msra.mxu0 0.0
    %1627 = vmatprep.subr.mxu0 0.0
    %1628 = vmatpush2.msra.mxu0 0.0
    %1629 = vmatprep.subr.mxu0 0.0
    %1630 = vmatpush2.msra.mxu0 0.0
    %1631 = vmatprep.mubr.f32.mxu0 0.0
    %v1632 = vand.u32 %v62, 4294901760
    %v1633 = vsub.f32 %v62, %v1632
    %v1634 = vand.u32 %v1633, 4294901760
    %1635 = vmatmul.mubr.f32.gmra.mxu0 %v1634
    %v1636 = vpop.f32.mrf.mxu0
    %v1637 = vadd.f32 %v1523, %v1636
    %v1638 = vpop.f32.mrf.mxu0
    %v1639 = vadd.f32 %v1525, %v1638
    %1640 = vmatprep.mubr.f32.mxu0 0.0
    %v1641 = vand.u32 %v63, 4294901760
    %v1642 = vsub.f32 %v63, %v1641
    %v1643 = vand.u32 %v1642, 4294901760
    %1644 = vmatmul.mubr.f32.gmra.mxu0 %v1643
    %v1645 = vpop.f32.mrf.mxu0
    %v1646 = vadd.f32 %v1531, %v1645
    %v1647 = vpop.f32.mrf.mxu0
    %v1648 = vadd.f32 %v1533, %v1647
    %1649 = vdwg.mxu0
    %v1650 = vand.u32 %v127, 4294901760
    %v1651 = vsub.f32 %v127, %v1650
    %v1652 = vand.u32 %v1651, 4294901760
    %1653 = vmatprep.subr.mxu0 %v1652
    %v1654 = vand.u32 %v126, 4294901760
    %v1655 = vsub.f32 %v126, %v1654
    %v1656 = vand.u32 %v1655, 4294901760
    %1657 = vmatpush1.msra.mxu0 %v1656
    %v1658 = vand.u32 %v123, 4294901760
    %v1659 = vsub.f32 %v123, %v1658
    %v1660 = vand.u32 %v1659, 4294901760
    %1661 = vmatprep.subr.mxu0 %v1660
    %v1662 = vand.u32 %v122, 4294901760
    %v1663 = vsub.f32 %v122, %v1662
    %v1664 = vand.u32 %v1663, 4294901760
    %1665 = vmatpush1.msra.mxu0 %v1664
    %v1666 = vand.u32 %v119, 4294901760
    %v1667 = vsub.f32 %v119, %v1666
    %v1668 = vand.u32 %v1667, 4294901760
    %1669 = vmatprep.subr.mxu0 %v1668
    %v1670 = vand.u32 %v118, 4294901760
    %v1671 = vsub.f32 %v118, %v1670
    %v1672 = vand.u32 %v1671, 4294901760
    %1673 = vmatpush1.msra.mxu0 %v1672
    %v1674 = vand.u32 %v115, 4294901760
    %v1675 = vsub.f32 %v115, %v1674
    %v1676 = vand.u32 %v1675, 4294901760
    %1677 = vmatprep.subr.mxu0 %v1676
    %v1678 = vand.u32 %v114, 4294901760
    %v1679 = vsub.f32 %v114, %v1678
    %v1680 = vand.u32 %v1679, 4294901760
    %1681 = vmatpush1.msra.mxu0 %v1680
    %v1682 = vand.u32 %v111, 4294901760
    %v1683 = vsub.f32 %v111, %v1682
    %v1684 = vand.u32 %v1683, 4294901760
    %1685 = vmatprep.subr.mxu0 %v1684
    %v1686 = vand.u32 %v110, 4294901760
    %v1687 = vsub.f32 %v110, %v1686
    %v1688 = vand.u32 %v1687, 4294901760
    %1689 = vmatpush1.msra.mxu0 %v1688
    %v1690 = vand.u32 %v107, 4294901760
    %v1691 = vsub.f32 %v107, %v1690
    %v1692 = vand.u32 %v1691, 4294901760
    %1693 = vmatprep.subr.mxu0 %v1692
    %v1694 = vand.u32 %v106, 4294901760
    %v1695 = vsub.f32 %v106, %v1694
    %v1696 = vand.u32 %v1695, 4294901760
    %1697 = vmatpush1.msra.mxu0 %v1696
    %v1698 = vand.u32 %v103, 4294901760
    %v1699 = vsub.f32 %v103, %v1698
    %v1700 = vand.u32 %v1699, 4294901760
    %1701 = vmatprep.subr.mxu0 %v1700
    %v1702 = vand.u32 %v102, 4294901760
    %v1703 = vsub.f32 %v102, %v1702
    %v1704 = vand.u32 %v1703, 4294901760
    %1705 = vmatpush1.msra.mxu0 %v1704
    %v1706 = vand.u32 %v99, 4294901760
    %v1707 = vsub.f32 %v99, %v1706
    %v1708 = vand.u32 %v1707, 4294901760
    %1709 = vmatprep.subr.mxu0 %v1708
    %v1710 = vand.u32 %v98, 4294901760
    %v1711 = vsub.f32 %v98, %v1710
    %v1712 = vand.u32 %v1711, 4294901760
    %1713 = vmatpush1.msra.mxu0 %v1712
    %v1714 = vand.u32 %v95, 4294901760
    %v1715 = vsub.f32 %v95, %v1714
    %v1716 = vand.u32 %v1715, 4294901760
    %1717 = vmatprep.subr.mxu0 %v1716
    %v1718 = vand.u32 %v94, 4294901760
    %v1719 = vsub.f32 %v94, %v1718
    %v1720 = vand.u32 %v1719, 4294901760
    %1721 = vmatpush1.msra.mxu0 %v1720
    %v1722 = vand.u32 %v91, 4294901760
    %v1723 = vsub.f32 %v91, %v1722
    %v1724 = vand.u32 %v1723, 4294901760
    %1725 = vmatprep.subr.mxu0 %v1724
    %v1726 = vand.u32 %v90, 4294901760
    %v1727 = vsub.f32 %v90, %v1726
    %v1728 = vand.u32 %v1727, 4294901760
    %1729 = vmatpush1.msra.mxu0 %v1728
    %v1730 = vand.u32 %v87, 4294901760
    %v1731 = vsub.f32 %v87, %v1730
    %v1732 = vand.u32 %v1731, 4294901760
    %1733 = vmatprep.subr.mxu0 %v1732
    %v1734 = vand.u32 %v86, 4294901760
    %v1735 = vsub.f32 %v86, %v1734
    %v1736 = vand.u32 %v1735, 4294901760
    %1737 = vmatpush1.msra.mxu0 %v1736
    %v1738 = vand.u32 %v83, 4294901760
    %v1739 = vsub.f32 %v83, %v1738
    %v1740 = vand.u32 %v1739, 4294901760
    %1741 = vmatprep.subr.mxu0 %v1740
    %v1742 = vand.u32 %v82, 4294901760
    %v1743 = vsub.f32 %v82, %v1742
    %v1744 = vand.u32 %v1743, 4294901760
    %1745 = vmatpush1.msra.mxu0 %v1744
    %v1746 = vand.u32 %v79, 4294901760
    %v1747 = vsub.f32 %v79, %v1746
    %v1748 = vand.u32 %v1747, 4294901760
    %1749 = vmatprep.subr.mxu0 %v1748
    %v1750 = vand.u32 %v78, 4294901760
    %v1751 = vsub.f32 %v78, %v1750
    %v1752 = vand.u32 %v1751, 4294901760
    %1753 = vmatpush1.msra.mxu0 %v1752
    %v1754 = vand.u32 %v75, 4294901760
    %v1755 = vsub.f32 %v75, %v1754
    %v1756 = vand.u32 %v1755, 4294901760
    %1757 = vmatprep.subr.mxu0 %v1756
    %v1758 = vand.u32 %v74, 4294901760
    %v1759 = vsub.f32 %v74, %v1758
    %v1760 = vand.u32 %v1759, 4294901760
    %1761 = vmatpush1.msra.mxu0 %v1760
    %v1762 = vand.u32 %v71, 4294901760
    %v1763 = vsub.f32 %v71, %v1762
    %v1764 = vand.u32 %v1763, 4294901760
    %1765 = vmatprep.subr.mxu0 %v1764
    %v1766 = vand.u32 %v70, 4294901760
    %v1767 = vsub.f32 %v70, %v1766
    %v1768 = vand.u32 %v1767, 4294901760
    %1769 = vmatpush1.msra.mxu0 %v1768
    %v1770 = vand.u32 %v67, 4294901760
    %v1771 = vsub.f32 %v67, %v1770
    %v1772 = vand.u32 %v1771, 4294901760
    %1773 = vmatprep.subr.mxu0 %v1772
    %v1774 = vand.u32 %v66, 4294901760
    %v1775 = vsub.f32 %v66, %v1774
    %v1776 = vand.u32 %v1775, 4294901760
    %1777 = vmatpush1.msra.mxu0 %v1776
    %1778 = vmatprep.subr.mxu0 0.0
    %1779 = vmatpush2.msra.mxu0 0.0
    %1780 = vmatprep.subr.mxu0 0.0
    %1781 = vmatpush2.msra.mxu0 0.0
    %1782 = vmatprep.subr.mxu0 0.0
    %1783 = vmatpush2.msra.mxu0 0.0
    %1784 = vmatprep.subr.mxu0 0.0
    %1785 = vmatpush2.msra.mxu0 0.0
    %1786 = vmatprep.subr.mxu0 0.0
    %1787 = vmatpush2.msra.mxu0 0.0
    %1788 = vmatprep.subr.mxu0 0.0
    %1789 = vmatpush2.msra.mxu0 0.0
    %1790 = vmatprep.subr.mxu0 0.0
    %1791 = vmatpush2.msra.mxu0 0.0
    %1792 = vmatprep.subr.mxu0 0.0
    %1793 = vmatpush2.msra.mxu0 0.0
    %1794 = vmatprep.subr.mxu0 0.0
    %1795 = vmatpush2.msra.mxu0 0.0
    %1796 = vmatprep.subr.mxu0 0.0
    %1797 = vmatpush2.msra.mxu0 0.0
    %1798 = vmatprep.subr.mxu0 0.0
    %1799 = vmatpush2.msra.mxu0 0.0
    %1800 = vmatprep.subr.mxu0 0.0
    %1801 = vmatpush2.msra.mxu0 0.0
    %1802 = vmatprep.subr.mxu0 0.0
    %1803 = vmatpush2.msra.mxu0 0.0
    %1804 = vmatprep.subr.mxu0 0.0
    %1805 = vmatpush2.msra.mxu0 0.0
    %1806 = vmatprep.subr.mxu0 0.0
    %1807 = vmatpush2.msra.mxu0 0.0
    %1808 = vmatprep.subr.mxu0 0.0
    %1809 = vmatpush2.msra.mxu0 0.0
    %1810 = vmatprep.mubr.f32.mxu0 0.0
    %v1811 = vand.u32 %v62, 4294901760
    %1812 = vmatmul.mubr.f32.gmra.mxu0 %v1811
    %v1813 = vpop.f32.mrf.mxu0
    %v1814 = vadd.f32 %v1637, %v1813
    %v1815 = vpop.f32.mrf.mxu0
    %v1816 = vadd.f32 %v1639, %v1815
    %1817 = vmatprep.mubr.f32.mxu0 0.0
    %v1818 = vand.u32 %v63, 4294901760
    %1819 = vmatmul.mubr.f32.gmra.mxu0 %v1818
    %v1820 = vpop.f32.mrf.mxu0
    %v1821 = vadd.f32 %v1646, %v1820
    %v1822 = vpop.f32.mrf.mxu0
    %v1823 = vadd.f32 %v1648, %v1822
    %1824 = vdwg.mxu0
    %v1825 = vand.u32 %v127, 4294901760
    %1826 = vmatprep.subr.mxu0 %v1825
    %v1827 = vand.u32 %v126, 4294901760
    %1828 = vmatpush1.msra.mxu0 %v1827
    %v1829 = vand.u32 %v123, 4294901760
    %1830 = vmatprep.subr.mxu0 %v1829
    %v1831 = vand.u32 %v122, 4294901760
    %1832 = vmatpush1.msra.mxu0 %v1831
    %v1833 = vand.u32 %v119, 4294901760
    %1834 = vmatprep.subr.mxu0 %v1833
    %v1835 = vand.u32 %v118, 4294901760
    %1836 = vmatpush1.msra.mxu0 %v1835
    %v1837 = vand.u32 %v115, 4294901760
    %1838 = vmatprep.subr.mxu0 %v1837
    %v1839 = vand.u32 %v114, 4294901760
    %1840 = vmatpush1.msra.mxu0 %v1839
    %v1841 = vand.u32 %v111, 4294901760
    %1842 = vmatprep.subr.mxu0 %v1841
    %v1843 = vand.u32 %v110, 4294901760
    %1844 = vmatpush1.msra.mxu0 %v1843
    %v1845 = vand.u32 %v107, 4294901760
    %1846 = vmatprep.subr.mxu0 %v1845
    %v1847 = vand.u32 %v106, 4294901760
    %1848 = vmatpush1.msra.mxu0 %v1847
    %v1849 = vand.u32 %v103, 4294901760
    %1850 = vmatprep.subr.mxu0 %v1849
    %v1851 = vand.u32 %v102, 4294901760
    %1852 = vmatpush1.msra.mxu0 %v1851
    %v1853 = vand.u32 %v99, 4294901760
    %1854 = vmatprep.subr.mxu0 %v1853
    %v1855 = vand.u32 %v98, 4294901760
    %1856 = vmatpush1.msra.mxu0 %v1855
    %v1857 = vand.u32 %v95, 4294901760
    %1858 = vmatprep.subr.mxu0 %v1857
    %v1859 = vand.u32 %v94, 4294901760
    %1860 = vmatpush1.msra.mxu0 %v1859
    %v1861 = vand.u32 %v91, 4294901760
    %1862 = vmatprep.subr.mxu0 %v1861
    %v1863 = vand.u32 %v90, 4294901760
    %1864 = vmatpush1.msra.mxu0 %v1863
    %v1865 = vand.u32 %v87, 4294901760
    %1866 = vmatprep.subr.mxu0 %v1865
    %v1867 = vand.u32 %v86, 4294901760
    %1868 = vmatpush1.msra.mxu0 %v1867
    %v1869 = vand.u32 %v83, 4294901760
    %1870 = vmatprep.subr.mxu0 %v1869
    %v1871 = vand.u32 %v82, 4294901760
    %1872 = vmatpush1.msra.mxu0 %v1871
    %v1873 = vand.u32 %v79, 4294901760
    %1874 = vmatprep.subr.mxu0 %v1873
    %v1875 = vand.u32 %v78, 4294901760
    %1876 = vmatpush1.msra.mxu0 %v1875
    %v1877 = vand.u32 %v75, 4294901760
    %1878 = vmatprep.subr.mxu0 %v1877
    %v1879 = vand.u32 %v74, 4294901760
    %1880 = vmatpush1.msra.mxu0 %v1879
    %v1881 = vand.u32 %v71, 4294901760
    %1882 = vmatprep.subr.mxu0 %v1881
    %v1883 = vand.u32 %v70, 4294901760
    %1884 = vmatpush1.msra.mxu0 %v1883
    %v1885 = vand.u32 %v67, 4294901760
    %1886 = vmatprep.subr.mxu0 %v1885
    %v1887 = vand.u32 %v66, 4294901760
    %1888 = vmatpush1.msra.mxu0 %v1887
    %1889 = vmatprep.subr.mxu0 0.0
    %1890 = vmatpush2.msra.mxu0 0.0
    %1891 = vmatprep.subr.mxu0 0.0
    %1892 = vmatpush2.msra.mxu0 0.0
    %1893 = vmatprep.subr.mxu0 0.0
    %1894 = vmatpush2.msra.mxu0 0.0
    %1895 = vmatprep.subr.mxu0 0.0
    %1896 = vmatpush2.msra.mxu0 0.0
    %1897 = vmatprep.subr.mxu0 0.0
    %1898 = vmatpush2.msra.mxu0 0.0
    %1899 = vmatprep.subr.mxu0 0.0
    %1900 = vmatpush2.msra.mxu0 0.0
    %1901 = vmatprep.subr.mxu0 0.0
    %1902 = vmatpush2.msra.mxu0 0.0
    %1903 = vmatprep.subr.mxu0 0.0
    %1904 = vmatpush2.msra.mxu0 0.0
    %1905 = vmatprep.subr.mxu0 0.0
    %1906 = vmatpush2.msra.mxu0 0.0
    %1907 = vmatprep.subr.mxu0 0.0
    %1908 = vmatpush2.msra.mxu0 0.0
    %1909 = vmatprep.subr.mxu0 0.0
    %1910 = vmatpush2.msra.mxu0 0.0
    %1911 = vmatprep.subr.mxu0 0.0
    %1912 = vmatpush2.msra.mxu0 0.0
    %1913 = vmatprep.subr.mxu0 0.0
    %1914 = vmatpush2.msra.mxu0 0.0
    %1915 = vmatprep.subr.mxu0 0.0
    %1916 = vmatpush2.msra.mxu0 0.0
    %1917 = vmatprep.subr.mxu0 0.0
    %1918 = vmatpush2.msra.mxu0 0.0
    %1919 = vmatprep.subr.mxu0 0.0
    %1920 = vmatpush2.msra.mxu0 0.0
    %1921 = vmatprep.mubr.f32.mxu0 0.0
    %v1922 = vand.u32 %v62, 4294901760
    %1923 = vmatmul.mubr.f32.gmra.mxu0 %v1922
    %v1924 = vpop.f32.mrf.mxu0
    %v1925 = vadd.f32 %v1814, %v1924
    %v1926 = vpop.f32.mrf.mxu0
    %v1927 = vadd.f32 %v1816, %v1926
    %1928 = vmatprep.mubr.f32.mxu0 0.0
    %v1929 = vand.u32 %v63, 4294901760
    %1930 = vmatmul.mubr.f32.gmra.mxu0 %v1929
    %v1931 = vpop.f32.mrf.mxu0
    %v1932 = vadd.f32 %v1821, %v1931
    %v1933 = vpop.f32.mrf.mxu0
    %v1934 = vadd.f32 %v1823, %v1933
    %1935 = vdwg.mxu0
    %s1936 = scalar_lea.vmem [#allocation5], 512
    %v1937 = vld [vmem:[%s1936] sm:$0xff]
    %v1938 = vld [vmem:[%s1936 + $0x8] sm:$0xff]
    %v1939 = vld [vmem:[%s1936 + $0x10] sm:$0xff]
    %v1940 = vld [vmem:[%s1936 + $0x18] sm:$0xff]
    %v1941 = vld [vmem:[%s1936 + $0x20] sm:$0xff]
    %v1942 = vld [vmem:[%s1936 + $0x28] sm:$0xff]
    %v1943 = vld [vmem:[%s1936 + $0x30] sm:$0xff]
    %v1944 = vld [vmem:[%s1936 + $0x38] sm:$0xff]
    %v1945 = vld [vmem:[%s1936 + $0x40] sm:$0xff]
    %v1946 = vld [vmem:[%s1936 + $0x48] sm:$0xff]
    %v1947 = vld [vmem:[%s1936 + $0x50] sm:$0xff]
    %v1948 = vld [vmem:[%s1936 + $0x58] sm:$0xff]
    %v1949 = vld [vmem:[%s1936 + $0x60] sm:$0xff]
    %v1950 = vld [vmem:[%s1936 + $0x68] sm:$0xff]
    %v1951 = vld [vmem:[%s1936 + $0x70] sm:$0xff]
    %v1952 = vld [vmem:[%s1936 + $0x78] sm:$0xff]
    %v1953 = vld [vmem:[%s1936 + $0x80] sm:$0xff]
    %v1954 = vld [vmem:[%s1936 + $0x88] sm:$0xff]
    %v1955 = vld [vmem:[%s1936 + $0x90] sm:$0xff]
    %v1956 = vld [vmem:[%s1936 + $0x98] sm:$0xff]
    %v1957 = vld [vmem:[%s1936 + $0xa0] sm:$0xff]
    %v1958 = vld [vmem:[%s1936 + $0xa8] sm:$0xff]
    %v1959 = vld [vmem:[%s1936 + $0xb0] sm:$0xff]
    %v1960 = vld [vmem:[%s1936 + $0xb8] sm:$0xff]
    %v1961 = vld [vmem:[%s1936 + $0xc0] sm:$0xff]
    %v1962 = vld [vmem:[%s1936 + $0xc8] sm:$0xff]
    %v1963 = vld [vmem:[%s1936 + $0xd0] sm:$0xff]
    %v1964 = vld [vmem:[%s1936 + $0xd8] sm:$0xff]
    %v1965 = vld [vmem:[%s1936 + $0xe0] sm:$0xff]
    %v1966 = vld [vmem:[%s1936 + $0xe8] sm:$0xff]
    %v1967 = vld [vmem:[%s1936 + $0xf0] sm:$0xff]
    %v1968 = vld [vmem:[%s1936 + $0xf8] sm:$0xff]
    %v1969 = vld [vmem:[%s1936 + $0x100] sm:$0xff]
    %v1970 = vld [vmem:[%s1936 + $0x108] sm:$0xff]
    %v1971 = vld [vmem:[%s1936 + $0x110] sm:$0xff]
    %v1972 = vld [vmem:[%s1936 + $0x118] sm:$0xff]
    %v1973 = vld [vmem:[%s1936 + $0x120] sm:$0xff]
    %v1974 = vld [vmem:[%s1936 + $0x128] sm:$0xff]
    %v1975 = vld [vmem:[%s1936 + $0x130] sm:$0xff]
    %v1976 = vld [vmem:[%s1936 + $0x138] sm:$0xff]
    %v1977 = vld [vmem:[%s1936 + $0x140] sm:$0xff]
    %v1978 = vld [vmem:[%s1936 + $0x148] sm:$0xff]
    %v1979 = vld [vmem:[%s1936 + $0x150] sm:$0xff]
    %v1980 = vld [vmem:[%s1936 + $0x158] sm:$0xff]
    %v1981 = vld [vmem:[%s1936 + $0x160] sm:$0xff]
    %v1982 = vld [vmem:[%s1936 + $0x168] sm:$0xff]
    %v1983 = vld [vmem:[%s1936 + $0x170] sm:$0xff]
    %v1984 = vld [vmem:[%s1936 + $0x178] sm:$0xff]
    %v1985 = vld [vmem:[%s1936 + $0x180] sm:$0xff]
    %v1986 = vld [vmem:[%s1936 + $0x188] sm:$0xff]
    %v1987 = vld [vmem:[%s1936 + $0x190] sm:$0xff]
    %v1988 = vld [vmem:[%s1936 + $0x198] sm:$0xff]
    %v1989 = vld [vmem:[%s1936 + $0x1a0] sm:$0xff]
    %v1990 = vld [vmem:[%s1936 + $0x1a8] sm:$0xff]
    %v1991 = vld [vmem:[%s1936 + $0x1b0] sm:$0xff]
    %v1992 = vld [vmem:[%s1936 + $0x1b8] sm:$0xff]
    %v1993 = vld [vmem:[%s1936 + $0x1c0] sm:$0xff]
    %v1994 = vld [vmem:[%s1936 + $0x1c8] sm:$0xff]
    %v1995 = vld [vmem:[%s1936 + $0x1d0] sm:$0xff]
    %v1996 = vld [vmem:[%s1936 + $0x1d8] sm:$0xff]
    %v1997 = vld [vmem:[%s1936 + $0x1e0] sm:$0xff]
    %v1998 = vld [vmem:[%s1936 + $0x1e8] sm:$0xff]
    %v1999 = vld [vmem:[%s1936 + $0x1f0] sm:$0xff]
    %v2000 = vld [vmem:[%s1936 + $0x1f8] sm:$0xff]
    %v2001 = vand.u32 %v1998, 4294901760
    %2002 = vmatprep.subr.mxu0 %v2001
    %v2003 = vand.u32 %v1997, 4294901760
    %2004 = vmatpush1.msra.mxu0 %v2003
    %v2005 = vand.u32 %v1994, 4294901760
    %2006 = vmatprep.subr.mxu0 %v2005
    %v2007 = vand.u32 %v1993, 4294901760
    %2008 = vmatpush1.msra.mxu0 %v2007
    %v2009 = vand.u32 %v1990, 4294901760
    %2010 = vmatprep.subr.mxu0 %v2009
    %v2011 = vand.u32 %v1989, 4294901760
    %2012 = vmatpush1.msra.mxu0 %v2011
    %v2013 = vand.u32 %v1986, 4294901760
    %2014 = vmatprep.subr.mxu0 %v2013
    %v2015 = vand.u32 %v1985, 4294901760
    %2016 = vmatpush1.msra.mxu0 %v2015
    %v2017 = vand.u32 %v1982, 4294901760
    %2018 = vmatprep.subr.mxu0 %v2017
    %v2019 = vand.u32 %v1981, 4294901760
    %2020 = vmatpush1.msra.mxu0 %v2019
    %v2021 = vand.u32 %v1978, 4294901760
    %2022 = vmatprep.subr.mxu0 %v2021
    %v2023 = vand.u32 %v1977, 4294901760
    %2024 = vmatpush1.msra.mxu0 %v2023
    %v2025 = vand.u32 %v1974, 4294901760
    %2026 = vmatprep.subr.mxu0 %v2025
    %v2027 = vand.u32 %v1973, 4294901760
    %2028 = vmatpush1.msra.mxu0 %v2027
    %v2029 = vand.u32 %v1970, 4294901760
    %2030 = vmatprep.subr.mxu0 %v2029
    %v2031 = vand.u32 %v1969, 4294901760
    %2032 = vmatpush1.msra.mxu0 %v2031
    %v2033 = vand.u32 %v1966, 4294901760
    %2034 = vmatprep.subr.mxu0 %v2033
    %v2035 = vand.u32 %v1965, 4294901760
    %2036 = vmatpush1.msra.mxu0 %v2035
    %v2037 = vand.u32 %v1962, 4294901760
    %2038 = vmatprep.subr.mxu0 %v2037
    %v2039 = vand.u32 %v1961, 4294901760
    %2040 = vmatpush1.msra.mxu0 %v2039
    %v2041 = vand.u32 %v1958, 4294901760
    %2042 = vmatprep.subr.mxu0 %v2041
    %v2043 = vand.u32 %v1957, 4294901760
    %2044 = vmatpush1.msra.mxu0 %v2043
    %v2045 = vand.u32 %v1954, 4294901760
    %2046 = vmatprep.subr.mxu0 %v2045
    %v2047 = vand.u32 %v1953, 4294901760
    %2048 = vmatpush1.msra.mxu0 %v2047
    %v2049 = vand.u32 %v1950, 4294901760
    %2050 = vmatprep.subr.mxu0 %v2049
    %v2051 = vand.u32 %v1949, 4294901760
    %2052 = vmatpush1.msra.mxu0 %v2051
    %v2053 = vand.u32 %v1946, 4294901760
    %2054 = vmatprep.subr.mxu0 %v2053
    %v2055 = vand.u32 %v1945, 4294901760
    %2056 = vmatpush1.msra.mxu0 %v2055
    %v2057 = vand.u32 %v1942, 4294901760
    %2058 = vmatprep.subr.mxu0 %v2057
    %v2059 = vand.u32 %v1941, 4294901760
    %2060 = vmatpush1.msra.mxu0 %v2059
    %v2061 = vand.u32 %v1938, 4294901760
    %2062 = vmatprep.subr.mxu0 %v2061
    %v2063 = vand.u32 %v1937, 4294901760
    %2064 = vmatpush1.msra.mxu0 %v2063
    %2065 = vmatprep.subr.mxu0 0.0
    %2066 = vmatpush2.msra.mxu0 0.0
    %2067 = vmatprep.subr.mxu0 0.0
    %2068 = vmatpush2.msra.mxu0 0.0
    %2069 = vmatprep.subr.mxu0 0.0
    %2070 = vmatpush2.msra.mxu0 0.0
    %2071 = vmatprep.subr.mxu0 0.0
    %2072 = vmatpush2.msra.mxu0 0.0
    %2073 = vmatprep.subr.mxu0 0.0
    %2074 = vmatpush2.msra.mxu0 0.0
    %2075 = vmatprep.subr.mxu0 0.0
    %2076 = vmatpush2.msra.mxu0 0.0
    %2077 = vmatprep.subr.mxu0 0.0
    %2078 = vmatpush2.msra.mxu0 0.0
    %2079 = vmatprep.subr.mxu0 0.0
    %2080 = vmatpush2.msra.mxu0 0.0
    %2081 = vmatprep.subr.mxu0 0.0
    %2082 = vmatpush2.msra.mxu0 0.0
    %2083 = vmatprep.subr.mxu0 0.0
    %2084 = vmatpush2.msra.mxu0 0.0
    %2085 = vmatprep.subr.mxu0 0.0
    %2086 = vmatpush2.msra.mxu0 0.0
    %2087 = vmatprep.subr.mxu0 0.0
    %2088 = vmatpush2.msra.mxu0 0.0
    %2089 = vmatprep.subr.mxu0 0.0
    %2090 = vmatpush2.msra.mxu0 0.0
    %2091 = vmatprep.subr.mxu0 0.0
    %2092 = vmatpush2.msra.mxu0 0.0
    %2093 = vmatprep.subr.mxu0 0.0
    %2094 = vmatpush2.msra.mxu0 0.0
    %2095 = vmatprep.subr.mxu0 0.0
    %2096 = vmatpush2.msra.mxu0 0.0
    %2097 = vmatprep.mubr.f32.mxu0 0.0
    %v2098 = vand.u32 %v62, 4294901760
    %v2099 = vsub.f32 %v62, %v2098
    %v2100 = vand.u32 %v2099, 4294901760
    %v2101 = vsub.f32 %v2099, %v2100
    %v2102 = vand.u32 %v2101, 4294901760
    %2103 = vmatmul.mubr.f32.gmra.mxu0 %v2102
    %v2104 = vpop.f32.mrf.mxu0
    %v2105 = vadd.f32 0.0, %v2104
    %v2106 = vpop.f32.mrf.mxu0
    %v2107 = vadd.f32 0.0, %v2106
    %2108 = vmatprep.mubr.f32.mxu0 0.0
    %v2109 = vand.u32 %v63, 4294901760
    %v2110 = vsub.f32 %v63, %v2109
    %v2111 = vand.u32 %v2110, 4294901760
    %v2112 = vsub.f32 %v2110, %v2111
    %v2113 = vand.u32 %v2112, 4294901760
    %2114 = vmatmul.mubr.f32.gmra.mxu0 %v2113
    %v2115 = vpop.f32.mrf.mxu0
    %v2116 = vadd.f32 0.0, %v2115
    %v2117 = vpop.f32.mrf.mxu0
    %v2118 = vadd.f32 0.0, %v2117
    %2119 = vdwg.mxu0
    %v2120 = vand.u32 %v1998, 4294901760
    %v2121 = vsub.f32 %v1998, %v2120
    %v2122 = vand.u32 %v2121, 4294901760
    %v2123 = vsub.f32 %v2121, %v2122
    %v2124 = vand.u32 %v2123, 4294901760
    %2125 = vmatprep.subr.mxu0 %v2124
    %v2126 = vand.u32 %v1997, 4294901760
    %v2127 = vsub.f32 %v1997, %v2126
    %v2128 = vand.u32 %v2127, 4294901760
    %v2129 = vsub.f32 %v2127, %v2128
    %v2130 = vand.u32 %v2129, 4294901760
    %2131 = vmatpush1.msra.mxu0 %v2130
    %v2132 = vand.u32 %v1994, 4294901760
    %v2133 = vsub.f32 %v1994, %v2132
    %v2134 = vand.u32 %v2133, 4294901760
    %v2135 = vsub.f32 %v2133, %v2134
    %v2136 = vand.u32 %v2135, 4294901760
    %2137 = vmatprep.subr.mxu0 %v2136
    %v2138 = vand.u32 %v1993, 4294901760
    %v2139 = vsub.f32 %v1993, %v2138
    %v2140 = vand.u32 %v2139, 4294901760
    %v2141 = vsub.f32 %v2139, %v2140
    %v2142 = vand.u32 %v2141, 4294901760
    %2143 = vmatpush1.msra.mxu0 %v2142
    %v2144 = vand.u32 %v1990, 4294901760
    %v2145 = vsub.f32 %v1990, %v2144
    %v2146 = vand.u32 %v2145, 4294901760
    %v2147 = vsub.f32 %v2145, %v2146
    %v2148 = vand.u32 %v2147, 4294901760
    %2149 = vmatprep.subr.mxu0 %v2148
    %v2150 = vand.u32 %v1989, 4294901760
    %v2151 = vsub.f32 %v1989, %v2150
    %v2152 = vand.u32 %v2151, 4294901760
    %v2153 = vsub.f32 %v2151, %v2152
    %v2154 = vand.u32 %v2153, 4294901760
    %2155 = vmatpush1.msra.mxu0 %v2154
    %v2156 = vand.u32 %v1986, 4294901760
    %v2157 = vsub.f32 %v1986, %v2156
    %v2158 = vand.u32 %v2157, 4294901760
    %v2159 = vsub.f32 %v2157, %v2158
    %v2160 = vand.u32 %v2159, 4294901760
    %2161 = vmatprep.subr.mxu0 %v2160
    %v2162 = vand.u32 %v1985, 4294901760
    %v2163 = vsub.f32 %v1985, %v2162
    %v2164 = vand.u32 %v2163, 4294901760
    %v2165 = vsub.f32 %v2163, %v2164
    %v2166 = vand.u32 %v2165, 4294901760
    %2167 = vmatpush1.msra.mxu0 %v2166
    %v2168 = vand.u32 %v1982, 4294901760
    %v2169 = vsub.f32 %v1982, %v2168
    %v2170 = vand.u32 %v2169, 4294901760
    %v2171 = vsub.f32 %v2169, %v2170
    %v2172 = vand.u32 %v2171, 4294901760
    %2173 = vmatprep.subr.mxu0 %v2172
    %v2174 = vand.u32 %v1981, 4294901760
    %v2175 = vsub.f32 %v1981, %v2174
    %v2176 = vand.u32 %v2175, 4294901760
    %v2177 = vsub.f32 %v2175, %v2176
    %v2178 = vand.u32 %v2177, 4294901760
    %2179 = vmatpush1.msra.mxu0 %v2178
    %v2180 = vand.u32 %v1978, 4294901760
    %v2181 = vsub.f32 %v1978, %v2180
    %v2182 = vand.u32 %v2181, 4294901760
    %v2183 = vsub.f32 %v2181, %v2182
    %v2184 = vand.u32 %v2183, 4294901760
    %2185 = vmatprep.subr.mxu0 %v2184
    %v2186 = vand.u32 %v1977, 4294901760
    %v2187 = vsub.f32 %v1977, %v2186
    %v2188 = vand.u32 %v2187, 4294901760
    %v2189 = vsub.f32 %v2187, %v2188
    %v2190 = vand.u32 %v2189, 4294901760
    %2191 = vmatpush1.msra.mxu0 %v2190
    %v2192 = vand.u32 %v1974, 4294901760
    %v2193 = vsub.f32 %v1974, %v2192
    %v2194 = vand.u32 %v2193, 4294901760
    %v2195 = vsub.f32 %v2193, %v2194
    %v2196 = vand.u32 %v2195, 4294901760
    %2197 = vmatprep.subr.mxu0 %v2196
    %v2198 = vand.u32 %v1973, 4294901760
    %v2199 = vsub.f32 %v1973, %v2198
    %v2200 = vand.u32 %v2199, 4294901760
    %v2201 = vsub.f32 %v2199, %v2200
    %v2202 = vand.u32 %v2201, 4294901760
    %2203 = vmatpush1.msra.mxu0 %v2202
    %v2204 = vand.u32 %v1970, 4294901760
    %v2205 = vsub.f32 %v1970, %v2204
    %v2206 = vand.u32 %v2205, 4294901760
    %v2207 = vsub.f32 %v2205, %v2206
    %v2208 = vand.u32 %v2207, 4294901760
    %2209 = vmatprep.subr.mxu0 %v2208
    %v2210 = vand.u32 %v1969, 4294901760
    %v2211 = vsub.f32 %v1969, %v2210
    %v2212 = vand.u32 %v2211, 4294901760
    %v2213 = vsub.f32 %v2211, %v2212
    %v2214 = vand.u32 %v2213, 4294901760
    %2215 = vmatpush1.msra.mxu0 %v2214
    %v2216 = vand.u32 %v1966, 4294901760
    %v2217 = vsub.f32 %v1966, %v2216
    %v2218 = vand.u32 %v2217, 4294901760
    %v2219 = vsub.f32 %v2217, %v2218
    %v2220 = vand.u32 %v2219, 4294901760
    %2221 = vmatprep.subr.mxu0 %v2220
    %v2222 = vand.u32 %v1965, 4294901760
    %v2223 = vsub.f32 %v1965, %v2222
    %v2224 = vand.u32 %v2223, 4294901760
    %v2225 = vsub.f32 %v2223, %v2224
    %v2226 = vand.u32 %v2225, 4294901760
    %2227 = vmatpush1.msra.mxu0 %v2226
    %v2228 = vand.u32 %v1962, 4294901760
    %v2229 = vsub.f32 %v1962, %v2228
    %v2230 = vand.u32 %v2229, 4294901760
    %v2231 = vsub.f32 %v2229, %v2230
    %v2232 = vand.u32 %v2231, 4294901760
    %2233 = vmatprep.subr.mxu0 %v2232
    %v2234 = vand.u32 %v1961, 4294901760
    %v2235 = vsub.f32 %v1961, %v2234
    %v2236 = vand.u32 %v2235, 4294901760
    %v2237 = vsub.f32 %v2235, %v2236
    %v2238 = vand.u32 %v2237, 4294901760
    %2239 = vmatpush1.msra.mxu0 %v2238
    %v2240 = vand.u32 %v1958, 4294901760
    %v2241 = vsub.f32 %v1958, %v2240
    %v2242 = vand.u32 %v2241, 4294901760
    %v2243 = vsub.f32 %v2241, %v2242
    %v2244 = vand.u32 %v2243, 4294901760
    %2245 = vmatprep.subr.mxu0 %v2244
    %v2246 = vand.u32 %v1957, 4294901760
    %v2247 = vsub.f32 %v1957, %v2246
    %v2248 = vand.u32 %v2247, 4294901760
    %v2249 = vsub.f32 %v2247, %v2248
    %v2250 = vand.u32 %v2249, 4294901760
    %2251 = vmatpush1.msra.mxu0 %v2250
    %v2252 = vand.u32 %v1954, 4294901760
    %v2253 = vsub.f32 %v1954, %v2252
    %v2254 = vand.u32 %v2253, 4294901760
    %v2255 = vsub.f32 %v2253, %v2254
    %v2256 = vand.u32 %v2255, 4294901760
    %2257 = vmatprep.subr.mxu0 %v2256
    %v2258 = vand.u32 %v1953, 4294901760
    %v2259 = vsub.f32 %v1953, %v2258
    %v2260 = vand.u32 %v2259, 4294901760
    %v2261 = vsub.f32 %v2259, %v2260
    %v2262 = vand.u32 %v2261, 4294901760
    %2263 = vmatpush1.msra.mxu0 %v2262
    %v2264 = vand.u32 %v1950, 4294901760
    %v2265 = vsub.f32 %v1950, %v2264
    %v2266 = vand.u32 %v2265, 4294901760
    %v2267 = vsub.f32 %v2265, %v2266
    %v2268 = vand.u32 %v2267, 4294901760
    %2269 = vmatprep.subr.mxu0 %v2268
    %v2270 = vand.u32 %v1949, 4294901760
    %v2271 = vsub.f32 %v1949, %v2270
    %v2272 = vand.u32 %v2271, 4294901760
    %v2273 = vsub.f32 %v2271, %v2272
    %v2274 = vand.u32 %v2273, 4294901760
    %2275 = vmatpush1.msra.mxu0 %v2274
    %v2276 = vand.u32 %v1946, 4294901760
    %v2277 = vsub.f32 %v1946, %v2276
    %v2278 = vand.u32 %v2277, 4294901760
    %v2279 = vsub.f32 %v2277, %v2278
    %v2280 = vand.u32 %v2279, 4294901760
    %2281 = vmatprep.subr.mxu0 %v2280
    %v2282 = vand.u32 %v1945, 4294901760
    %v2283 = vsub.f32 %v1945, %v2282
    %v2284 = vand.u32 %v2283, 4294901760
    %v2285 = vsub.f32 %v2283, %v2284
    %v2286 = vand.u32 %v2285, 4294901760
    %2287 = vmatpush1.msra.mxu0 %v2286
    %v2288 = vand.u32 %v1942, 4294901760
    %v2289 = vsub.f32 %v1942, %v2288
    %v2290 = vand.u32 %v2289, 4294901760
    %v2291 = vsub.f32 %v2289, %v2290
    %v2292 = vand.u32 %v2291, 4294901760
    %2293 = vmatprep.subr.mxu0 %v2292
    %v2294 = vand.u32 %v1941, 4294901760
    %v2295 = vsub.f32 %v1941, %v2294
    %v2296 = vand.u32 %v2295, 4294901760
    %v2297 = vsub.f32 %v2295, %v2296
    %v2298 = vand.u32 %v2297, 4294901760
    %2299 = vmatpush1.msra.mxu0 %v2298
    %v2300 = vand.u32 %v1938, 4294901760
    %v2301 = vsub.f32 %v1938, %v2300
    %v2302 = vand.u32 %v2301, 4294901760
    %v2303 = vsub.f32 %v2301, %v2302
    %v2304 = vand.u32 %v2303, 4294901760
    %2305 = vmatprep.subr.mxu0 %v2304
    %v2306 = vand.u32 %v1937, 4294901760
    %v2307 = vsub.f32 %v1937, %v2306
    %v2308 = vand.u32 %v2307, 4294901760
    %v2309 = vsub.f32 %v2307, %v2308
    %v2310 = vand.u32 %v2309, 4294901760
    %2311 = vmatpush1.msra.mxu0 %v2310
    %2312 = vmatprep.subr.mxu0 0.0
    %2313 = vmatpush2.msra.mxu0 0.0
    %2314 = vmatprep.subr.mxu0 0.0
    %2315 = vmatpush2.msra.mxu0 0.0
    %2316 = vmatprep.subr.mxu0 0.0
    %2317 = vmatpush2.msra.mxu0 0.0
    %2318 = vmatprep.subr.mxu0 0.0
    %2319 = vmatpush2.msra.mxu0 0.0
    %2320 = vmatprep.subr.mxu0 0.0
    %2321 = vmatpush2.msra.mxu0 0.0
    %2322 = vmatprep.subr.mxu0 0.0
    %2323 = vmatpush2.msra.mxu0 0.0
    %2324 = vmatprep.subr.mxu0 0.0
    %2325 = vmatpush2.msra.mxu0 0.0
    %2326 = vmatprep.subr.mxu0 0.0
    %2327 = vmatpush2.msra.mxu0 0.0
    %2328 = vmatprep.subr.mxu0 0.0
    %2329 = vmatpush2.msra.mxu0 0.0
    %2330 = vmatprep.subr.mxu0 0.0
    %2331 = vmatpush2.msra.mxu0 0.0
    %2332 = vmatprep.subr.mxu0 0.0
    %2333 = vmatpush2.msra.mxu0 0.0
    %2334 = vmatprep.subr.mxu0 0.0
    %2335 = vmatpush2.msra.mxu0 0.0
    %2336 = vmatprep.subr.mxu0 0.0
    %2337 = vmatpush2.msra.mxu0 0.0
    %2338 = vmatprep.subr.mxu0 0.0
    %2339 = vmatpush2.msra.mxu0 0.0
    %2340 = vmatprep.subr.mxu0 0.0
    %2341 = vmatpush2.msra.mxu0 0.0
    %2342 = vmatprep.subr.mxu0 0.0
    %2343 = vmatpush2.msra.mxu0 0.0
    %2344 = vmatprep.mubr.f32.mxu0 0.0
    %v2345 = vand.u32 %v62, 4294901760
    %2346 = vmatmul.mubr.f32.gmra.mxu0 %v2345
    %v2347 = vpop.f32.mrf.mxu0
    %v2348 = vadd.f32 %v2105, %v2347
    %v2349 = vpop.f32.mrf.mxu0
    %v2350 = vadd.f32 %v2107, %v2349
    %2351 = vmatprep.mubr.f32.mxu0 0.0
    %v2352 = vand.u32 %v63, 4294901760
    %2353 = vmatmul.mubr.f32.gmra.mxu0 %v2352
    %v2354 = vpop.f32.mrf.mxu0
    %v2355 = vadd.f32 %v2116, %v2354
    %v2356 = vpop.f32.mrf.mxu0
    %v2357 = vadd.f32 %v2118, %v2356
    %2358 = vdwg.mxu0
    %v2359 = vand.u32 %v1998, 4294901760
    %v2360 = vsub.f32 %v1998, %v2359
    %2361 = vmatprep.subr.mxu0 %v2360
    %v2362 = vand.u32 %v1997, 4294901760
    %v2363 = vsub.f32 %v1997, %v2362
    %2364 = vmatpush1.msra.mxu0 %v2363
    %v2365 = vand.u32 %v1994, 4294901760
    %v2366 = vsub.f32 %v1994, %v2365
    %2367 = vmatprep.subr.mxu0 %v2366
    %v2368 = vand.u32 %v1993, 4294901760
    %v2369 = vsub.f32 %v1993, %v2368
    %2370 = vmatpush1.msra.mxu0 %v2369
    %v2371 = vand.u32 %v1990, 4294901760
    %v2372 = vsub.f32 %v1990, %v2371
    %2373 = vmatprep.subr.mxu0 %v2372
    %v2374 = vand.u32 %v1989, 4294901760
    %v2375 = vsub.f32 %v1989, %v2374
    %2376 = vmatpush1.msra.mxu0 %v2375
    %v2377 = vand.u32 %v1986, 4294901760
    %v2378 = vsub.f32 %v1986, %v2377
    %2379 = vmatprep.subr.mxu0 %v2378
    %v2380 = vand.u32 %v1985, 4294901760
    %v2381 = vsub.f32 %v1985, %v2380
    %2382 = vmatpush1.msra.mxu0 %v2381
    %v2383 = vand.u32 %v1982, 4294901760
    %v2384 = vsub.f32 %v1982, %v2383
    %2385 = vmatprep.subr.mxu0 %v2384
    %v2386 = vand.u32 %v1981, 4294901760
    %v2387 = vsub.f32 %v1981, %v2386
    %2388 = vmatpush1.msra.mxu0 %v2387
    %v2389 = vand.u32 %v1978, 4294901760
    %v2390 = vsub.f32 %v1978, %v2389
    %2391 = vmatprep.subr.mxu0 %v2390
    %v2392 = vand.u32 %v1977, 4294901760
    %v2393 = vsub.f32 %v1977, %v2392
    %2394 = vmatpush1.msra.mxu0 %v2393
    %v2395 = vand.u32 %v1974, 4294901760
    %v2396 = vsub.f32 %v1974, %v2395
    %2397 = vmatprep.subr.mxu0 %v2396
    %v2398 = vand.u32 %v1973, 4294901760
    %v2399 = vsub.f32 %v1973, %v2398
    %2400 = vmatpush1.msra.mxu0 %v2399
    %v2401 = vand.u32 %v1970, 4294901760
    %v2402 = vsub.f32 %v1970, %v2401
    %2403 = vmatprep.subr.mxu0 %v2402
    %v2404 = vand.u32 %v1969, 4294901760
    %v2405 = vsub.f32 %v1969, %v2404
    %2406 = vmatpush1.msra.mxu0 %v2405
    %v2407 = vand.u32 %v1966, 4294901760
    %v2408 = vsub.f32 %v1966, %v2407
    %2409 = vmatprep.subr.mxu0 %v2408
    %v2410 = vand.u32 %v1965, 4294901760
    %v2411 = vsub.f32 %v1965, %v2410
    %2412 = vmatpush1.msra.mxu0 %v2411
    %v2413 = vand.u32 %v1962, 4294901760
    %v2414 = vsub.f32 %v1962, %v2413
    %2415 = vmatprep.subr.mxu0 %v2414
    %v2416 = vand.u32 %v1961, 4294901760
    %v2417 = vsub.f32 %v1961, %v2416
    %2418 = vmatpush1.msra.mxu0 %v2417
    %v2419 = vand.u32 %v1958, 4294901760
    %v2420 = vsub.f32 %v1958, %v2419
    %2421 = vmatprep.subr.mxu0 %v2420
    %v2422 = vand.u32 %v1957, 4294901760
    %v2423 = vsub.f32 %v1957, %v2422
    %2424 = vmatpush1.msra.mxu0 %v2423
    %v2425 = vand.u32 %v1954, 4294901760
    %v2426 = vsub.f32 %v1954, %v2425
    %2427 = vmatprep.subr.mxu0 %v2426
    %v2428 = vand.u32 %v1953, 4294901760
    %v2429 = vsub.f32 %v1953, %v2428
    %2430 = vmatpush1.msra.mxu0 %v2429
    %v2431 = vand.u32 %v1950, 4294901760
    %v2432 = vsub.f32 %v1950, %v2431
    %2433 = vmatprep.subr.mxu0 %v2432
    %v2434 = vand.u32 %v1949, 4294901760
    %v2435 = vsub.f32 %v1949, %v2434
    %2436 = vmatpush1.msra.mxu0 %v2435
    %v2437 = vand.u32 %v1946, 4294901760
    %v2438 = vsub.f32 %v1946, %v2437
    %2439 = vmatprep.subr.mxu0 %v2438
    %v2440 = vand.u32 %v1945, 4294901760
    %v2441 = vsub.f32 %v1945, %v2440
    %2442 = vmatpush1.msra.mxu0 %v2441
    %v2443 = vand.u32 %v1942, 4294901760
    %v2444 = vsub.f32 %v1942, %v2443
    %2445 = vmatprep.subr.mxu0 %v2444
    %v2446 = vand.u32 %v1941, 4294901760
    %v2447 = vsub.f32 %v1941, %v2446
    %2448 = vmatpush1.msra.mxu0 %v2447
    %v2449 = vand.u32 %v1938, 4294901760
    %v2450 = vsub.f32 %v1938, %v2449
    %2451 = vmatprep.subr.mxu0 %v2450
    %v2452 = vand.u32 %v1937, 4294901760
    %v2453 = vsub.f32 %v1937, %v2452
    %2454 = vmatpush1.msra.mxu0 %v2453
    %2455 = vmatprep.subr.mxu0 0.0
    %2456 = vmatpush2.msra.mxu0 0.0
    %2457 = vmatprep.subr.mxu0 0.0
    %2458 = vmatpush2.msra.mxu0 0.0
    %2459 = vmatprep.subr.mxu0 0.0
    %2460 = vmatpush2.msra.mxu0 0.0
    %2461 = vmatprep.subr.mxu0 0.0
    %2462 = vmatpush2.msra.mxu0 0.0
    %2463 = vmatprep.subr.mxu0 0.0
    %2464 = vmatpush2.msra.mxu0 0.0
    %2465 = vmatprep.subr.mxu0 0.0
    %2466 = vmatpush2.msra.mxu0 0.0
    %2467 = vmatprep.subr.mxu0 0.0
    %2468 = vmatpush2.msra.mxu0 0.0
    %2469 = vmatprep.subr.mxu0 0.0
    %2470 = vmatpush2.msra.mxu0 0.0
    %2471 = vmatprep.subr.mxu0 0.0
    %2472 = vmatpush2.msra.mxu0 0.0
    %2473 = vmatprep.subr.mxu0 0.0
    %2474 = vmatpush2.msra.mxu0 0.0
    %2475 = vmatprep.subr.mxu0 0.0
    %2476 = vmatpush2.msra.mxu0 0.0
    %2477 = vmatprep.subr.mxu0 0.0
    %2478 = vmatpush2.msra.mxu0 0.0
    %2479 = vmatprep.subr.mxu0 0.0
    %2480 = vmatpush2.msra.mxu0 0.0
    %2481 = vmatprep.subr.mxu0 0.0
    %2482 = vmatpush2.msra.mxu0 0.0
    %2483 = vmatprep.subr.mxu0 0.0
    %2484 = vmatpush2.msra.mxu0 0.0
    %2485 = vmatprep.subr.mxu0 0.0
    %2486 = vmatpush2.msra.mxu0 0.0
    %2487 = vmatprep.mubr.f32.mxu0 0.0
    %v2488 = vand.u32 %v62, 4294901760
    %v2489 = vsub.f32 %v62, %v2488
    %2490 = vmatmul.mubr.f32.gmra.mxu0 %v2489
    %v2491 = vpop.f32.mrf.mxu0
    %v2492 = vadd.f32 %v2348, %v2491
    %v2493 = vpop.f32.mrf.mxu0
    %v2494 = vadd.f32 %v2350, %v2493
    %2495 = vmatprep.mubr.f32.mxu0 0.0
    %v2496 = vand.u32 %v63, 4294901760
    %v2497 = vsub.f32 %v63, %v2496
    %2498 = vmatmul.mubr.f32.gmra.mxu0 %v2497
    %v2499 = vpop.f32.mrf.mxu0
    %v2500 = vadd.f32 %v2355, %v2499
    %v2501 = vpop.f32.mrf.mxu0
    %v2502 = vadd.f32 %v2357, %v2501
    %2503 = vdwg.mxu0
    %v2504 = vand.u32 %v1998, 4294901760
    %2505 = vmatprep.subr.mxu0 %v2504
    %v2506 = vand.u32 %v1997, 4294901760
    %2507 = vmatpush1.msra.mxu0 %v2506
    %v2508 = vand.u32 %v1994, 4294901760
    %2509 = vmatprep.subr.mxu0 %v2508
    %v2510 = vand.u32 %v1993, 4294901760
    %2511 = vmatpush1.msra.mxu0 %v2510
    %v2512 = vand.u32 %v1990, 4294901760
    %2513 = vmatprep.subr.mxu0 %v2512
    %v2514 = vand.u32 %v1989, 4294901760
    %2515 = vmatpush1.msra.mxu0 %v2514
    %v2516 = vand.u32 %v1986, 4294901760
    %2517 = vmatprep.subr.mxu0 %v2516
    %v2518 = vand.u32 %v1985, 4294901760
    %2519 = vmatpush1.msra.mxu0 %v2518
    %v2520 = vand.u32 %v1982, 4294901760
    %2521 = vmatprep.subr.mxu0 %v2520
    %v2522 = vand.u32 %v1981, 4294901760
    %2523 = vmatpush1.msra.mxu0 %v2522
    %v2524 = vand.u32 %v1978, 4294901760
    %2525 = vmatprep.subr.mxu0 %v2524
    %v2526 = vand.u32 %v1977, 4294901760
    %2527 = vmatpush1.msra.mxu0 %v2526
    %v2528 = vand.u32 %v1974, 4294901760
    %2529 = vmatprep.subr.mxu0 %v2528
    %v2530 = vand.u32 %v1973, 4294901760
    %2531 = vmatpush1.msra.mxu0 %v2530
    %v2532 = vand.u32 %v1970, 4294901760
    %2533 = vmatprep.subr.mxu0 %v2532
    %v2534 = vand.u32 %v1969, 4294901760
    %2535 = vmatpush1.msra.mxu0 %v2534
    %v2536 = vand.u32 %v1966, 4294901760
    %2537 = vmatprep.subr.mxu0 %v2536
    %v2538 = vand.u32 %v1965, 4294901760
    %2539 = vmatpush1.msra.mxu0 %v2538
    %v2540 = vand.u32 %v1962, 4294901760
    %2541 = vmatprep.subr.mxu0 %v2540
    %v2542 = vand.u32 %v1961, 4294901760
    %2543 = vmatpush1.msra.mxu0 %v2542
    %v2544 = vand.u32 %v1958, 4294901760
    %2545 = vmatprep.subr.mxu0 %v2544
    %v2546 = vand.u32 %v1957, 4294901760
    %2547 = vmatpush1.msra.mxu0 %v2546
    %v2548 = vand.u32 %v1954, 4294901760
    %2549 = vmatprep.subr.mxu0 %v2548
    %v2550 = vand.u32 %v1953, 4294901760
    %2551 = vmatpush1.msra.mxu0 %v2550
    %v2552 = vand.u32 %v1950, 4294901760
    %2553 = vmatprep.subr.mxu0 %v2552
    %v2554 = vand.u32 %v1949, 4294901760
    %2555 = vmatpush1.msra.mxu0 %v2554
    %v2556 = vand.u32 %v1946, 4294901760
    %2557 = vmatprep.subr.mxu0 %v2556
    %v2558 = vand.u32 %v1945, 4294901760
    %2559 = vmatpush1.msra.mxu0 %v2558
    %v2560 = vand.u32 %v1942, 4294901760
    %2561 = vmatprep.subr.mxu0 %v2560
    %v2562 = vand.u32 %v1941, 4294901760
    %2563 = vmatpush1.msra.mxu0 %v2562
    %v2564 = vand.u32 %v1938, 4294901760
    %2565 = vmatprep.subr.mxu0 %v2564
    %v2566 = vand.u32 %v1937, 4294901760
    %2567 = vmatpush1.msra.mxu0 %v2566
    %2568 = vmatprep.subr.mxu0 0.0
    %2569 = vmatpush2.msra.mxu0 0.0
    %2570 = vmatprep.subr.mxu0 0.0
    %2571 = vmatpush2.msra.mxu0 0.0
    %2572 = vmatprep.subr.mxu0 0.0
    %2573 = vmatpush2.msra.mxu0 0.0
    %2574 = vmatprep.subr.mxu0 0.0
    %2575 = vmatpush2.msra.mxu0 0.0
    %2576 = vmatprep.subr.mxu0 0.0
    %2577 = vmatpush2.msra.mxu0 0.0
    %2578 = vmatprep.subr.mxu0 0.0
    %2579 = vmatpush2.msra.mxu0 0.0
    %2580 = vmatprep.subr.mxu0 0.0
    %2581 = vmatpush2.msra.mxu0 0.0
    %2582 = vmatprep.subr.mxu0 0.0
    %2583 = vmatpush2.msra.mxu0 0.0
    %2584 = vmatprep.subr.mxu0 0.0
    %2585 = vmatpush2.msra.mxu0 0.0
    %2586 = vmatprep.subr.mxu0 0.0
    %2587 = vmatpush2.msra.mxu0 0.0
    %2588 = vmatprep.subr.mxu0 0.0
    %2589 = vmatpush2.msra.mxu0 0.0
    %2590 = vmatprep.subr.mxu0 0.0
    %2591 = vmatpush2.msra.mxu0 0.0
    %2592 = vmatprep.subr.mxu0 0.0
    %2593 = vmatpush2.msra.mxu0 0.0
    %2594 = vmatprep.subr.mxu0 0.0
    %2595 = vmatpush2.msra.mxu0 0.0
    %2596 = vmatprep.subr.mxu0 0.0
    %2597 = vmatpush2.msra.mxu0 0.0
    %2598 = vmatprep.subr.mxu0 0.0
    %2599 = vmatpush2.msra.mxu0 0.0
    %2600 = vmatprep.mubr.f32.mxu0 0.0
    %v2601 = vand.u32 %v62, 4294901760
    %v2602 = vsub.f32 %v62, %v2601
    %v2603 = vand.u32 %v2602, 4294901760
    %2604 = vmatmul.mubr.f32.gmra.mxu0 %v2603
    %v2605 = vpop.f32.mrf.mxu0
    %v2606 = vadd.f32 %v2492, %v2605
    %v2607 = vpop.f32.mrf.mxu0
    %v2608 = vadd.f32 %v2494, %v2607
    %2609 = vmatprep.mubr.f32.mxu0 0.0
    %v2610 = vand.u32 %v63, 4294901760
    %v2611 = vsub.f32 %v63, %v2610
    %v2612 = vand.u32 %v2611, 4294901760
    %2613 = vmatmul.mubr.f32.gmra.mxu0 %v2612
    %v2614 = vpop.f32.mrf.mxu0
    %v2615 = vadd.f32 %v2500, %v2614
    %v2616 = vpop.f32.mrf.mxu0
    %v2617 = vadd.f32 %v2502, %v2616
    %2618 = vdwg.mxu0
    %v2619 = vand.u32 %v1998, 4294901760
    %v2620 = vsub.f32 %v1998, %v2619
    %v2621 = vand.u32 %v2620, 4294901760
    %2622 = vmatprep.subr.mxu0 %v2621
    %v2623 = vand.u32 %v1997, 4294901760
    %v2624 = vsub.f32 %v1997, %v2623
    %v2625 = vand.u32 %v2624, 4294901760
    %2626 = vmatpush1.msra.mxu0 %v2625
    %v2627 = vand.u32 %v1994, 4294901760
    %v2628 = vsub.f32 %v1994, %v2627
    %v2629 = vand.u32 %v2628, 4294901760
    %2630 = vmatprep.subr.mxu0 %v2629
    %v2631 = vand.u32 %v1993, 4294901760
    %v2632 = vsub.f32 %v1993, %v2631
    %v2633 = vand.u32 %v2632, 4294901760
    %2634 = vmatpush1.msra.mxu0 %v2633
    %v2635 = vand.u32 %v1990, 4294901760
    %v2636 = vsub.f32 %v1990, %v2635
    %v2637 = vand.u32 %v2636, 4294901760
    %2638 = vmatprep.subr.mxu0 %v2637
    %v2639 = vand.u32 %v1989, 4294901760
    %v2640 = vsub.f32 %v1989, %v2639
    %v2641 = vand.u32 %v2640, 4294901760
    %2642 = vmatpush1.msra.mxu0 %v2641
    %v2643 = vand.u32 %v1986, 4294901760
    %v2644 = vsub.f32 %v1986, %v2643
    %v2645 = vand.u32 %v2644, 4294901760
    %2646 = vmatprep.subr.mxu0 %v2645
    %v2647 = vand.u32 %v1985, 4294901760
    %v2648 = vsub.f32 %v1985, %v2647
    %v2649 = vand.u32 %v2648, 4294901760
    %2650 = vmatpush1.msra.mxu0 %v2649
    %v2651 = vand.u32 %v1982, 4294901760
    %v2652 = vsub.f32 %v1982, %v2651
    %v2653 = vand.u32 %v2652, 4294901760
    %2654 = vmatprep.subr.mxu0 %v2653
    %v2655 = vand.u32 %v1981, 4294901760
    %v2656 = vsub.f32 %v1981, %v2655
    %v2657 = vand.u32 %v2656, 4294901760
    %2658 = vmatpush1.msra.mxu0 %v2657
    %v2659 = vand.u32 %v1978, 4294901760
    %v2660 = vsub.f32 %v1978, %v2659
    %v2661 = vand.u32 %v2660, 4294901760
    %2662 = vmatprep.subr.mxu0 %v2661
    %v2663 = vand.u32 %v1977, 4294901760
    %v2664 = vsub.f32 %v1977, %v2663
    %v2665 = vand.u32 %v2664, 4294901760
    %2666 = vmatpush1.msra.mxu0 %v2665
    %v2667 = vand.u32 %v1974, 4294901760
    %v2668 = vsub.f32 %v1974, %v2667
    %v2669 = vand.u32 %v2668, 4294901760
    %2670 = vmatprep.subr.mxu0 %v2669
    %v2671 = vand.u32 %v1973, 4294901760
    %v2672 = vsub.f32 %v1973, %v2671
    %v2673 = vand.u32 %v2672, 4294901760
    %2674 = vmatpush1.msra.mxu0 %v2673
    %v2675 = vand.u32 %v1970, 4294901760
    %v2676 = vsub.f32 %v1970, %v2675
    %v2677 = vand.u32 %v2676, 4294901760
    %2678 = vmatprep.subr.mxu0 %v2677
    %v2679 = vand.u32 %v1969, 4294901760
    %v2680 = vsub.f32 %v1969, %v2679
    %v2681 = vand.u32 %v2680, 4294901760
    %2682 = vmatpush1.msra.mxu0 %v2681
    %v2683 = vand.u32 %v1966, 4294901760
    %v2684 = vsub.f32 %v1966, %v2683
    %v2685 = vand.u32 %v2684, 4294901760
    %2686 = vmatprep.subr.mxu0 %v2685
    %v2687 = vand.u32 %v1965, 4294901760
    %v2688 = vsub.f32 %v1965, %v2687
    %v2689 = vand.u32 %v2688, 4294901760
    %2690 = vmatpush1.msra.mxu0 %v2689
    %v2691 = vand.u32 %v1962, 4294901760
    %v2692 = vsub.f32 %v1962, %v2691
    %v2693 = vand.u32 %v2692, 4294901760
    %2694 = vmatprep.subr.mxu0 %v2693
    %v2695 = vand.u32 %v1961, 4294901760
    %v2696 = vsub.f32 %v1961, %v2695
    %v2697 = vand.u32 %v2696, 4294901760
    %2698 = vmatpush1.msra.mxu0 %v2697
    %v2699 = vand.u32 %v1958, 4294901760
    %v2700 = vsub.f32 %v1958, %v2699
    %v2701 = vand.u32 %v2700, 4294901760
    %2702 = vmatprep.subr.mxu0 %v2701
    %v2703 = vand.u32 %v1957, 4294901760
    %v2704 = vsub.f32 %v1957, %v2703
    %v2705 = vand.u32 %v2704, 4294901760
    %2706 = vmatpush1.msra.mxu0 %v2705
    %v2707 = vand.u32 %v1954, 4294901760
    %v2708 = vsub.f32 %v1954, %v2707
    %v2709 = vand.u32 %v2708, 4294901760
    %2710 = vmatprep.subr.mxu0 %v2709
    %v2711 = vand.u32 %v1953, 4294901760
    %v2712 = vsub.f32 %v1953, %v2711
    %v2713 = vand.u32 %v2712, 4294901760
    %2714 = vmatpush1.msra.mxu0 %v2713
    %v2715 = vand.u32 %v1950, 4294901760
    %v2716 = vsub.f32 %v1950, %v2715
    %v2717 = vand.u32 %v2716, 4294901760
    %2718 = vmatprep.subr.mxu0 %v2717
    %v2719 = vand.u32 %v1949, 4294901760
    %v2720 = vsub.f32 %v1949, %v2719
    %v2721 = vand.u32 %v2720, 4294901760
    %2722 = vmatpush1.msra.mxu0 %v2721
    %v2723 = vand.u32 %v1946, 4294901760
    %v2724 = vsub.f32 %v1946, %v2723
    %v2725 = vand.u32 %v2724, 4294901760
    %2726 = vmatprep.subr.mxu0 %v2725
    %v2727 = vand.u32 %v1945, 4294901760
    %v2728 = vsub.f32 %v1945, %v2727
    %v2729 = vand.u32 %v2728, 4294901760
    %2730 = vmatpush1.msra.mxu0 %v2729
    %v2731 = vand.u32 %v1942, 4294901760
    %v2732 = vsub.f32 %v1942, %v2731
    %v2733 = vand.u32 %v2732, 4294901760
    %2734 = vmatprep.subr.mxu0 %v2733
    %v2735 = vand.u32 %v1941, 4294901760
    %v2736 = vsub.f32 %v1941, %v2735
    %v2737 = vand.u32 %v2736, 4294901760
    %2738 = vmatpush1.msra.mxu0 %v2737
    %v2739 = vand.u32 %v1938, 4294901760
    %v2740 = vsub.f32 %v1938, %v2739
    %v2741 = vand.u32 %v2740, 4294901760
    %2742 = vmatprep.subr.mxu0 %v2741
    %v2743 = vand.u32 %v1937, 4294901760
    %v2744 = vsub.f32 %v1937, %v2743
    %v2745 = vand.u32 %v2744, 4294901760
    %2746 = vmatpush1.msra.mxu0 %v2745
    %2747 = vmatprep.subr.mxu0 0.0
    %2748 = vmatpush2.msra.mxu0 0.0
    %2749 = vmatprep.subr.mxu0 0.0
    %2750 = vmatpush2.msra.mxu0 0.0
    %2751 = vmatprep.subr.mxu0 0.0
    %2752 = vmatpush2.msra.mxu0 0.0
    %2753 = vmatprep.subr.mxu0 0.0
    %2754 = vmatpush2.msra.mxu0 0.0
    %2755 = vmatprep.subr.mxu0 0.0
    %2756 = vmatpush2.msra.mxu0 0.0
    %2757 = vmatprep.subr.mxu0 0.0
    %2758 = vmatpush2.msra.mxu0 0.0
    %2759 = vmatprep.subr.mxu0 0.0
    %2760 = vmatpush2.msra.mxu0 0.0
    %2761 = vmatprep.subr.mxu0 0.0
    %2762 = vmatpush2.msra.mxu0 0.0
    %2763 = vmatprep.subr.mxu0 0.0
    %2764 = vmatpush2.msra.mxu0 0.0
    %2765 = vmatprep.subr.mxu0 0.0
    %2766 = vmatpush2.msra.mxu0 0.0
    %2767 = vmatprep.subr.mxu0 0.0
    %2768 = vmatpush2.msra.mxu0 0.0
    %2769 = vmatprep.subr.mxu0 0.0
    %2770 = vmatpush2.msra.mxu0 0.0
    %2771 = vmatprep.subr.mxu0 0.0
    %2772 = vmatpush2.msra.mxu0 0.0
    %2773 = vmatprep.subr.mxu0 0.0
    %2774 = vmatpush2.msra.mxu0 0.0
    %2775 = vmatprep.subr.mxu0 0.0
    %2776 = vmatpush2.msra.mxu0 0.0
    %2777 = vmatprep.subr.mxu0 0.0
    %2778 = vmatpush2.msra.mxu0 0.0
    %2779 = vmatprep.mubr.f32.mxu0 0.0
    %v2780 = vand.u32 %v62, 4294901760
    %2781 = vmatmul.mubr.f32.gmra.mxu0 %v2780
    %v2782 = vpop.f32.mrf.mxu0
    %v2783 = vadd.f32 %v2606, %v2782
    %v2784 = vpop.f32.mrf.mxu0
    %v2785 = vadd.f32 %v2608, %v2784
    %2786 = vmatprep.mubr.f32.mxu0 0.0
    %v2787 = vand.u32 %v63, 4294901760
    %2788 = vmatmul.mubr.f32.gmra.mxu0 %v2787
    %v2789 = vpop.f32.mrf.mxu0
    %v2790 = vadd.f32 %v2615, %v2789
    %v2791 = vpop.f32.mrf.mxu0
    %v2792 = vadd.f32 %v2617, %v2791
    %2793 = vdwg.mxu0
    %v2794 = vand.u32 %v1998, 4294901760
    %2795 = vmatprep.subr.mxu0 %v2794
    %v2796 = vand.u32 %v1997, 4294901760
    %2797 = vmatpush1.msra.mxu0 %v2796
    %v2798 = vand.u32 %v1994, 4294901760
    %2799 = vmatprep.subr.mxu0 %v2798
    %v2800 = vand.u32 %v1993, 4294901760
    %2801 = vmatpush1.msra.mxu0 %v2800
    %v2802 = vand.u32 %v1990, 4294901760
    %2803 = vmatprep.subr.mxu0 %v2802
    %v2804 = vand.u32 %v1989, 4294901760
    %2805 = vmatpush1.msra.mxu0 %v2804
    %v2806 = vand.u32 %v1986, 4294901760
    %2807 = vmatprep.subr.mxu0 %v2806
    %v2808 = vand.u32 %v1985, 4294901760
    %2809 = vmatpush1.msra.mxu0 %v2808
    %v2810 = vand.u32 %v1982, 4294901760
    %2811 = vmatprep.subr.mxu0 %v2810
    %v2812 = vand.u32 %v1981, 4294901760
    %2813 = vmatpush1.msra.mxu0 %v2812
    %v2814 = vand.u32 %v1978, 4294901760
    %2815 = vmatprep.subr.mxu0 %v2814
    %v2816 = vand.u32 %v1977, 4294901760
    %2817 = vmatpush1.msra.mxu0 %v2816
    %v2818 = vand.u32 %v1974, 4294901760
    %2819 = vmatprep.subr.mxu0 %v2818
    %v2820 = vand.u32 %v1973, 4294901760
    %2821 = vmatpush1.msra.mxu0 %v2820
    %v2822 = vand.u32 %v1970, 4294901760
    %2823 = vmatprep.subr.mxu0 %v2822
    %v2824 = vand.u32 %v1969, 4294901760
    %2825 = vmatpush1.msra.mxu0 %v2824
    %v2826 = vand.u32 %v1966, 4294901760
    %2827 = vmatprep.subr.mxu0 %v2826
    %v2828 = vand.u32 %v1965, 4294901760
    %2829 = vmatpush1.msra.mxu0 %v2828
    %v2830 = vand.u32 %v1962, 4294901760
    %2831 = vmatprep.subr.mxu0 %v2830
    %v2832 = vand.u32 %v1961, 4294901760
    %2833 = vmatpush1.msra.mxu0 %v2832
    %v2834 = vand.u32 %v1958, 4294901760
    %2835 = vmatprep.subr.mxu0 %v2834
    %v2836 = vand.u32 %v1957, 4294901760
    %2837 = vmatpush1.msra.mxu0 %v2836
    %v2838 = vand.u32 %v1954, 4294901760
    %2839 = vmatprep.subr.mxu0 %v2838
    %v2840 = vand.u32 %v1953, 4294901760
    %2841 = vmatpush1.msra.mxu0 %v2840
    %v2842 = vand.u32 %v1950, 4294901760
    %2843 = vmatprep.subr.mxu0 %v2842
    %v2844 = vand.u32 %v1949, 4294901760
    %2845 = vmatpush1.msra.mxu0 %v2844
    %v2846 = vand.u32 %v1946, 4294901760
    %2847 = vmatprep.subr.mxu0 %v2846
    %v2848 = vand.u32 %v1945, 4294901760
    %2849 = vmatpush1.msra.mxu0 %v2848
    %v2850 = vand.u32 %v1942, 4294901760
    %2851 = vmatprep.subr.mxu0 %v2850
    %v2852 = vand.u32 %v1941, 4294901760
    %2853 = vmatpush1.msra.mxu0 %v2852
    %v2854 = vand.u32 %v1938, 4294901760
    %2855 = vmatprep.subr.mxu0 %v2854
    %v2856 = vand.u32 %v1937, 4294901760
    %2857 = vmatpush1.msra.mxu0 %v2856
    %2858 = vmatprep.subr.mxu0 0.0
    %2859 = vmatpush2.msra.mxu0 0.0
    %2860 = vmatprep.subr.mxu0 0.0
    %2861 = vmatpush2.msra.mxu0 0.0
    %2862 = vmatprep.subr.mxu0 0.0
    %2863 = vmatpush2.msra.mxu0 0.0
    %2864 = vmatprep.subr.mxu0 0.0
    %2865 = vmatpush2.msra.mxu0 0.0
    %2866 = vmatprep.subr.mxu0 0.0
    %2867 = vmatpush2.msra.mxu0 0.0
    %2868 = vmatprep.subr.mxu0 0.0
    %2869 = vmatpush2.msra.mxu0 0.0
    %2870 = vmatprep.subr.mxu0 0.0
    %2871 = vmatpush2.msra.mxu0 0.0
    %2872 = vmatprep.subr.mxu0 0.0
    %2873 = vmatpush2.msra.mxu0 0.0
    %2874 = vmatprep.subr.mxu0 0.0
    %2875 = vmatpush2.msra.mxu0 0.0
    %2876 = vmatprep.subr.mxu0 0.0
    %2877 = vmatpush2.msra.mxu0 0.0
    %2878 = vmatprep.subr.mxu0 0.0
    %2879 = vmatpush2.msra.mxu0 0.0
    %2880 = vmatprep.subr.mxu0 0.0
    %2881 = vmatpush2.msra.mxu0 0.0
    %2882 = vmatprep.subr.mxu0 0.0
    %2883 = vmatpush2.msra.mxu0 0.0
    %2884 = vmatprep.subr.mxu0 0.0
    %2885 = vmatpush2.msra.mxu0 0.0
    %2886 = vmatprep.subr.mxu0 0.0
    %2887 = vmatpush2.msra.mxu0 0.0
    %2888 = vmatprep.subr.mxu0 0.0
    %2889 = vmatpush2.msra.mxu0 0.0
    %2890 = vmatprep.mubr.f32.mxu0 0.0
    %v2891 = vand.u32 %v62, 4294901760
    %2892 = vmatmul.mubr.f32.gmra.mxu0 %v2891
    %v2893 = vpop.f32.mrf.mxu0
    %v2894 = vadd.f32 %v2783, %v2893
    %v2895 = vpop.f32.mrf.mxu0
    %v2896 = vadd.f32 %v2785, %v2895
    %2897 = vmatprep.mubr.f32.mxu0 0.0
    %v2898 = vand.u32 %v63, 4294901760
    %2899 = vmatmul.mubr.f32.gmra.mxu0 %v2898
    %v2900 = vpop.f32.mrf.mxu0
    %v2901 = vadd.f32 %v2790, %v2900
    %v2902 = vpop.f32.mrf.mxu0
    %v2903 = vadd.f32 %v2792, %v2902
    %2904 = vdwg.mxu0
    %v2905 = vand.u32 %v2000, 4294901760
    %2906 = vmatprep.subr.mxu0 %v2905
    %v2907 = vand.u32 %v1999, 4294901760
    %2908 = vmatpush1.msra.mxu0 %v2907
    %v2909 = vand.u32 %v1996, 4294901760
    %2910 = vmatprep.subr.mxu0 %v2909
    %v2911 = vand.u32 %v1995, 4294901760
    %2912 = vmatpush1.msra.mxu0 %v2911
    %v2913 = vand.u32 %v1992, 4294901760
    %2914 = vmatprep.subr.mxu0 %v2913
    %v2915 = vand.u32 %v1991, 4294901760
    %2916 = vmatpush1.msra.mxu0 %v2915
    %v2917 = vand.u32 %v1988, 4294901760
    %2918 = vmatprep.subr.mxu0 %v2917
    %v2919 = vand.u32 %v1987, 4294901760
    %2920 = vmatpush1.msra.mxu0 %v2919
    %v2921 = vand.u32 %v1984, 4294901760
    %2922 = vmatprep.subr.mxu0 %v2921
    %v2923 = vand.u32 %v1983, 4294901760
    %2924 = vmatpush1.msra.mxu0 %v2923
    %v2925 = vand.u32 %v1980, 4294901760
    %2926 = vmatprep.subr.mxu0 %v2925
    %v2927 = vand.u32 %v1979, 4294901760
    %2928 = vmatpush1.msra.mxu0 %v2927
    %v2929 = vand.u32 %v1976, 4294901760
    %2930 = vmatprep.subr.mxu0 %v2929
    %v2931 = vand.u32 %v1975, 4294901760
    %2932 = vmatpush1.msra.mxu0 %v2931
    %v2933 = vand.u32 %v1972, 4294901760
    %2934 = vmatprep.subr.mxu0 %v2933
    %v2935 = vand.u32 %v1971, 4294901760
    %2936 = vmatpush1.msra.mxu0 %v2935
    %v2937 = vand.u32 %v1968, 4294901760
    %2938 = vmatprep.subr.mxu0 %v2937
    %v2939 = vand.u32 %v1967, 4294901760
    %2940 = vmatpush1.msra.mxu0 %v2939
    %v2941 = vand.u32 %v1964, 4294901760
    %2942 = vmatprep.subr.mxu0 %v2941
    %v2943 = vand.u32 %v1963, 4294901760
    %2944 = vmatpush1.msra.mxu0 %v2943
    %v2945 = vand.u32 %v1960, 4294901760
    %2946 = vmatprep.subr.mxu0 %v2945
    %v2947 = vand.u32 %v1959, 4294901760
    %2948 = vmatpush1.msra.mxu0 %v2947
    %v2949 = vand.u32 %v1956, 4294901760
    %2950 = vmatprep.subr.mxu0 %v2949
    %v2951 = vand.u32 %v1955, 4294901760
    %2952 = vmatpush1.msra.mxu0 %v2951
    %v2953 = vand.u32 %v1952, 4294901760
    %2954 = vmatprep.subr.mxu0 %v2953
    %v2955 = vand.u32 %v1951, 4294901760
    %2956 = vmatpush1.msra.mxu0 %v2955
    %v2957 = vand.u32 %v1948, 4294901760
    %2958 = vmatprep.subr.mxu0 %v2957
    %v2959 = vand.u32 %v1947, 4294901760
    %2960 = vmatpush1.msra.mxu0 %v2959
    %v2961 = vand.u32 %v1944, 4294901760
    %2962 = vmatprep.subr.mxu0 %v2961
    %v2963 = vand.u32 %v1943, 4294901760
    %2964 = vmatpush1.msra.mxu0 %v2963
    %v2965 = vand.u32 %v1940, 4294901760
    %2966 = vmatprep.subr.mxu0 %v2965
    %v2967 = vand.u32 %v1939, 4294901760
    %2968 = vmatpush1.msra.mxu0 %v2967
    %2969 = vmatprep.subr.mxu0 0.0
    %2970 = vmatpush2.msra.mxu0 0.0
    %2971 = vmatprep.subr.mxu0 0.0
    %2972 = vmatpush2.msra.mxu0 0.0
    %2973 = vmatprep.subr.mxu0 0.0
    %2974 = vmatpush2.msra.mxu0 0.0
    %2975 = vmatprep.subr.mxu0 0.0
    %2976 = vmatpush2.msra.mxu0 0.0
    %2977 = vmatprep.subr.mxu0 0.0
    %2978 = vmatpush2.msra.mxu0 0.0
    %2979 = vmatprep.subr.mxu0 0.0
    %2980 = vmatpush2.msra.mxu0 0.0
    %2981 = vmatprep.subr.mxu0 0.0
    %2982 = vmatpush2.msra.mxu0 0.0
    %2983 = vmatprep.subr.mxu0 0.0
    %2984 = vmatpush2.msra.mxu0 0.0
    %2985 = vmatprep.subr.mxu0 0.0
    %2986 = vmatpush2.msra.mxu0 0.0
    %2987 = vmatprep.subr.mxu0 0.0
    %2988 = vmatpush2.msra.mxu0 0.0
    %2989 = vmatprep.subr.mxu0 0.0
    %2990 = vmatpush2.msra.mxu0 0.0
    %2991 = vmatprep.subr.mxu0 0.0
    %2992 = vmatpush2.msra.mxu0 0.0
    %2993 = vmatprep.subr.mxu0 0.0
    %2994 = vmatpush2.msra.mxu0 0.0
    %2995 = vmatprep.subr.mxu0 0.0
    %2996 = vmatpush2.msra.mxu0 0.0
    %2997 = vmatprep.subr.mxu0 0.0
    %2998 = vmatpush2.msra.mxu0 0.0
    %2999 = vmatprep.subr.mxu0 0.0
    %3000 = vmatpush2.msra.mxu0 0.0
    %3001 = vmatprep.mubr.f32.mxu0 0.0
    %v3002 = vand.u32 %v62, 4294901760
    %v3003 = vsub.f32 %v62, %v3002
    %v3004 = vand.u32 %v3003, 4294901760
    %v3005 = vsub.f32 %v3003, %v3004
    %v3006 = vand.u32 %v3005, 4294901760
    %3007 = vmatmul.mubr.f32.gmra.mxu0 %v3006
    %v3008 = vpop.f32.mrf.mxu0
    %v3009 = vadd.f32 0.0, %v3008
    %v3010 = vpop.f32.mrf.mxu0
    %v3011 = vadd.f32 0.0, %v3010
    %3012 = vmatprep.mubr.f32.mxu0 0.0
    %v3013 = vand.u32 %v63, 4294901760
    %v3014 = vsub.f32 %v63, %v3013
    %v3015 = vand.u32 %v3014, 4294901760
    %v3016 = vsub.f32 %v3014, %v3015
    %v3017 = vand.u32 %v3016, 4294901760
    %3018 = vmatmul.mubr.f32.gmra.mxu0 %v3017
    %v3019 = vpop.f32.mrf.mxu0
    %v3020 = vadd.f32 0.0, %v3019
    %v3021 = vpop.f32.mrf.mxu0
    %v3022 = vadd.f32 0.0, %v3021
    %3023 = vdwg.mxu0
    %v3024 = vand.u32 %v2000, 4294901760
    %v3025 = vsub.f32 %v2000, %v3024
    %v3026 = vand.u32 %v3025, 4294901760
    %v3027 = vsub.f32 %v3025, %v3026
    %v3028 = vand.u32 %v3027, 4294901760
    %3029 = vmatprep.subr.mxu0 %v3028
    %v3030 = vand.u32 %v1999, 4294901760
    %v3031 = vsub.f32 %v1999, %v3030
    %v3032 = vand.u32 %v3031, 4294901760
    %v3033 = vsub.f32 %v3031, %v3032
    %v3034 = vand.u32 %v3033, 4294901760
    %3035 = vmatpush1.msra.mxu0 %v3034
    %v3036 = vand.u32 %v1996, 4294901760
    %v3037 = vsub.f32 %v1996, %v3036
    %v3038 = vand.u32 %v3037, 4294901760
    %v3039 = vsub.f32 %v3037, %v3038
    %v3040 = vand.u32 %v3039, 4294901760
    %3041 = vmatprep.subr.mxu0 %v3040
    %v3042 = vand.u32 %v1995, 4294901760
    %v3043 = vsub.f32 %v1995, %v3042
    %v3044 = vand.u32 %v3043, 4294901760
    %v3045 = vsub.f32 %v3043, %v3044
    %v3046 = vand.u32 %v3045, 4294901760
    %3047 = vmatpush1.msra.mxu0 %v3046
    %v3048 = vand.u32 %v1992, 4294901760
    %v3049 = vsub.f32 %v1992, %v3048
    %v3050 = vand.u32 %v3049, 4294901760
    %v3051 = vsub.f32 %v3049, %v3050
    %v3052 = vand.u32 %v3051, 4294901760
    %3053 = vmatprep.subr.mxu0 %v3052
    %v3054 = vand.u32 %v1991, 4294901760
    %v3055 = vsub.f32 %v1991, %v3054
    %v3056 = vand.u32 %v3055, 4294901760
    %v3057 = vsub.f32 %v3055, %v3056
    %v3058 = vand.u32 %v3057, 4294901760
    %3059 = vmatpush1.msra.mxu0 %v3058
    %v3060 = vand.u32 %v1988, 4294901760
    %v3061 = vsub.f32 %v1988, %v3060
    %v3062 = vand.u32 %v3061, 4294901760
    %v3063 = vsub.f32 %v3061, %v3062
    %v3064 = vand.u32 %v3063, 4294901760
    %3065 = vmatprep.subr.mxu0 %v3064
    %v3066 = vand.u32 %v1987, 4294901760
    %v3067 = vsub.f32 %v1987, %v3066
    %v3068 = vand.u32 %v3067, 4294901760
    %v3069 = vsub.f32 %v3067, %v3068
    %v3070 = vand.u32 %v3069, 4294901760
    %3071 = vmatpush1.msra.mxu0 %v3070
    %v3072 = vand.u32 %v1984, 4294901760
    %v3073 = vsub.f32 %v1984, %v3072
    %v3074 = vand.u32 %v3073, 4294901760
    %v3075 = vsub.f32 %v3073, %v3074
    %v3076 = vand.u32 %v3075, 4294901760
    %3077 = vmatprep.subr.mxu0 %v3076
    %v3078 = vand.u32 %v1983, 4294901760
    %v3079 = vsub.f32 %v1983, %v3078
    %v3080 = vand.u32 %v3079, 4294901760
    %v3081 = vsub.f32 %v3079, %v3080
    %v3082 = vand.u32 %v3081, 4294901760
    %3083 = vmatpush1.msra.mxu0 %v3082
    %v3084 = vand.u32 %v1980, 4294901760
    %v3085 = vsub.f32 %v1980, %v3084
    %v3086 = vand.u32 %v3085, 4294901760
    %v3087 = vsub.f32 %v3085, %v3086
    %v3088 = vand.u32 %v3087, 4294901760
    %3089 = vmatprep.subr.mxu0 %v3088
    %v3090 = vand.u32 %v1979, 4294901760
    %v3091 = vsub.f32 %v1979, %v3090
    %v3092 = vand.u32 %v3091, 4294901760
    %v3093 = vsub.f32 %v3091, %v3092
    %v3094 = vand.u32 %v3093, 4294901760
    %3095 = vmatpush1.msra.mxu0 %v3094
    %v3096 = vand.u32 %v1976, 4294901760
    %v3097 = vsub.f32 %v1976, %v3096
    %v3098 = vand.u32 %v3097, 4294901760
    %v3099 = vsub.f32 %v3097, %v3098
    %v3100 = vand.u32 %v3099, 4294901760
    %3101 = vmatprep.subr.mxu0 %v3100
    %v3102 = vand.u32 %v1975, 4294901760
    %v3103 = vsub.f32 %v1975, %v3102
    %v3104 = vand.u32 %v3103, 4294901760
    %v3105 = vsub.f32 %v3103, %v3104
    %v3106 = vand.u32 %v3105, 4294901760
    %3107 = vmatpush1.msra.mxu0 %v3106
    %v3108 = vand.u32 %v1972, 4294901760
    %v3109 = vsub.f32 %v1972, %v3108
    %v3110 = vand.u32 %v3109, 4294901760
    %v3111 = vsub.f32 %v3109, %v3110
    %v3112 = vand.u32 %v3111, 4294901760
    %3113 = vmatprep.subr.mxu0 %v3112
    %v3114 = vand.u32 %v1971, 4294901760
    %v3115 = vsub.f32 %v1971, %v3114
    %v3116 = vand.u32 %v3115, 4294901760
    %v3117 = vsub.f32 %v3115, %v3116
    %v3118 = vand.u32 %v3117, 4294901760
    %3119 = vmatpush1.msra.mxu0 %v3118
    %v3120 = vand.u32 %v1968, 4294901760
    %v3121 = vsub.f32 %v1968, %v3120
    %v3122 = vand.u32 %v3121, 4294901760
    %v3123 = vsub.f32 %v3121, %v3122
    %v3124 = vand.u32 %v3123, 4294901760
    %3125 = vmatprep.subr.mxu0 %v3124
    %v3126 = vand.u32 %v1967, 4294901760
    %v3127 = vsub.f32 %v1967, %v3126
    %v3128 = vand.u32 %v3127, 4294901760
    %v3129 = vsub.f32 %v3127, %v3128
    %v3130 = vand.u32 %v3129, 4294901760
    %3131 = vmatpush1.msra.mxu0 %v3130
    %v3132 = vand.u32 %v1964, 4294901760
    %v3133 = vsub.f32 %v1964, %v3132
    %v3134 = vand.u32 %v3133, 4294901760
    %v3135 = vsub.f32 %v3133, %v3134
    %v3136 = vand.u32 %v3135, 4294901760
    %3137 = vmatprep.subr.mxu0 %v3136
    %v3138 = vand.u32 %v1963, 4294901760
    %v3139 = vsub.f32 %v1963, %v3138
    %v3140 = vand.u32 %v3139, 4294901760
    %v3141 = vsub.f32 %v3139, %v3140
    %v3142 = vand.u32 %v3141, 4294901760
    %3143 = vmatpush1.msra.mxu0 %v3142
    %v3144 = vand.u32 %v1960, 4294901760
    %v3145 = vsub.f32 %v1960, %v3144
    %v3146 = vand.u32 %v3145, 4294901760
    %v3147 = vsub.f32 %v3145, %v3146
    %v3148 = vand.u32 %v3147, 4294901760
    %3149 = vmatprep.subr.mxu0 %v3148
    %v3150 = vand.u32 %v1959, 4294901760
    %v3151 = vsub.f32 %v1959, %v3150
    %v3152 = vand.u32 %v3151, 4294901760
    %v3153 = vsub.f32 %v3151, %v3152
    %v3154 = vand.u32 %v3153, 4294901760
    %3155 = vmatpush1.msra.mxu0 %v3154
    %v3156 = vand.u32 %v1956, 4294901760
    %v3157 = vsub.f32 %v1956, %v3156
    %v3158 = vand.u32 %v3157, 4294901760
    %v3159 = vsub.f32 %v3157, %v3158
    %v3160 = vand.u32 %v3159, 4294901760
    %3161 = vmatprep.subr.mxu0 %v3160
    %v3162 = vand.u32 %v1955, 4294901760
    %v3163 = vsub.f32 %v1955, %v3162
    %v3164 = vand.u32 %v3163, 4294901760
    %v3165 = vsub.f32 %v3163, %v3164
    %v3166 = vand.u32 %v3165, 4294901760
    %3167 = vmatpush1.msra.mxu0 %v3166
    %v3168 = vand.u32 %v1952, 4294901760
    %v3169 = vsub.f32 %v1952, %v3168
    %v3170 = vand.u32 %v3169, 4294901760
    %v3171 = vsub.f32 %v3169, %v3170
    %v3172 = vand.u32 %v3171, 4294901760
    %3173 = vmatprep.subr.mxu0 %v3172
    %v3174 = vand.u32 %v1951, 4294901760
    %v3175 = vsub.f32 %v1951, %v3174
    %v3176 = vand.u32 %v3175, 4294901760
    %v3177 = vsub.f32 %v3175, %v3176
    %v3178 = vand.u32 %v3177, 4294901760
    %3179 = vmatpush1.msra.mxu0 %v3178
    %v3180 = vand.u32 %v1948, 4294901760
    %v3181 = vsub.f32 %v1948, %v3180
    %v3182 = vand.u32 %v3181, 4294901760
    %v3183 = vsub.f32 %v3181, %v3182
    %v3184 = vand.u32 %v3183, 4294901760
    %3185 = vmatprep.subr.mxu0 %v3184
    %v3186 = vand.u32 %v1947, 4294901760
    %v3187 = vsub.f32 %v1947, %v3186
    %v3188 = vand.u32 %v3187, 4294901760
    %v3189 = vsub.f32 %v3187, %v3188
    %v3190 = vand.u32 %v3189, 4294901760
    %3191 = vmatpush1.msra.mxu0 %v3190
    %v3192 = vand.u32 %v1944, 4294901760
    %v3193 = vsub.f32 %v1944, %v3192
    %v3194 = vand.u32 %v3193, 4294901760
    %v3195 = vsub.f32 %v3193, %v3194
    %v3196 = vand.u32 %v3195, 4294901760
    %3197 = vmatprep.subr.mxu0 %v3196
    %v3198 = vand.u32 %v1943, 4294901760
    %v3199 = vsub.f32 %v1943, %v3198
    %v3200 = vand.u32 %v3199, 4294901760
    %v3201 = vsub.f32 %v3199, %v3200
    %v3202 = vand.u32 %v3201, 4294901760
    %3203 = vmatpush1.msra.mxu0 %v3202
    %v3204 = vand.u32 %v1940, 4294901760
    %v3205 = vsub.f32 %v1940, %v3204
    %v3206 = vand.u32 %v3205, 4294901760
    %v3207 = vsub.f32 %v3205, %v3206
    %v3208 = vand.u32 %v3207, 4294901760
    %3209 = vmatprep.subr.mxu0 %v3208
    %v3210 = vand.u32 %v1939, 4294901760
    %v3211 = vsub.f32 %v1939, %v3210
    %v3212 = vand.u32 %v3211, 4294901760
    %v3213 = vsub.f32 %v3211, %v3212
    %v3214 = vand.u32 %v3213, 4294901760
    %3215 = vmatpush1.msra.mxu0 %v3214
    %3216 = vmatprep.subr.mxu0 0.0
    %3217 = vmatpush2.msra.mxu0 0.0
    %3218 = vmatprep.subr.mxu0 0.0
    %3219 = vmatpush2.msra.mxu0 0.0
    %3220 = vmatprep.subr.mxu0 0.0
    %3221 = vmatpush2.msra.mxu0 0.0
    %3222 = vmatprep.subr.mxu0 0.0
    %3223 = vmatpush2.msra.mxu0 0.0
    %3224 = vmatprep.subr.mxu0 0.0
    %3225 = vmatpush2.msra.mxu0 0.0
    %3226 = vmatprep.subr.mxu0 0.0
    %3227 = vmatpush2.msra.mxu0 0.0
    %3228 = vmatprep.subr.mxu0 0.0
    %3229 = vmatpush2.msra.mxu0 0.0
    %3230 = vmatprep.subr.mxu0 0.0
    %3231 = vmatpush2.msra.mxu0 0.0
    %3232 = vmatprep.subr.mxu0 0.0
    %3233 = vmatpush2.msra.mxu0 0.0
    %3234 = vmatprep.subr.mxu0 0.0
    %3235 = vmatpush2.msra.mxu0 0.0
    %3236 = vmatprep.subr.mxu0 0.0
    %3237 = vmatpush2.msra.mxu0 0.0
    %3238 = vmatprep.subr.mxu0 0.0
    %3239 = vmatpush2.msra.mxu0 0.0
    %3240 = vmatprep.subr.mxu0 0.0
    %3241 = vmatpush2.msra.mxu0 0.0
    %3242 = vmatprep.subr.mxu0 0.0
    %3243 = vmatpush2.msra.mxu0 0.0
    %3244 = vmatprep.subr.mxu0 0.0
    %3245 = vmatpush2.msra.mxu0 0.0
    %3246 = vmatprep.subr.mxu0 0.0
    %3247 = vmatpush2.msra.mxu0 0.0
    %3248 = vmatprep.mubr.f32.mxu0 0.0
    %v3249 = vand.u32 %v62, 4294901760
    %3250 = vmatmul.mubr.f32.gmra.mxu0 %v3249
    %v3251 = vpop.f32.mrf.mxu0
    %v3252 = vadd.f32 %v3009, %v3251
    %v3253 = vpop.f32.mrf.mxu0
    %v3254 = vadd.f32 %v3011, %v3253
    %3255 = vmatprep.mubr.f32.mxu0 0.0
    %v3256 = vand.u32 %v63, 4294901760
    %3257 = vmatmul.mubr.f32.gmra.mxu0 %v3256
    %v3258 = vpop.f32.mrf.mxu0
    %v3259 = vadd.f32 %v3020, %v3258
    %v3260 = vpop.f32.mrf.mxu0
    %v3261 = vadd.f32 %v3022, %v3260
    %3262 = vdwg.mxu0
    %v3263 = vand.u32 %v2000, 4294901760
    %v3264 = vsub.f32 %v2000, %v3263
    %3265 = vmatprep.subr.mxu0 %v3264
    %v3266 = vand.u32 %v1999, 4294901760
    %v3267 = vsub.f32 %v1999, %v3266
    %3268 = vmatpush1.msra.mxu0 %v3267
    %v3269 = vand.u32 %v1996, 4294901760
    %v3270 = vsub.f32 %v1996, %v3269
    %3271 = vmatprep.subr.mxu0 %v3270
    %v3272 = vand.u32 %v1995, 4294901760
    %v3273 = vsub.f32 %v1995, %v3272
    %3274 = vmatpush1.msra.mxu0 %v3273
    %v3275 = vand.u32 %v1992, 4294901760
    %v3276 = vsub.f32 %v1992, %v3275
    %3277 = vmatprep.subr.mxu0 %v3276
    %v3278 = vand.u32 %v1991, 4294901760
    %v3279 = vsub.f32 %v1991, %v3278
    %3280 = vmatpush1.msra.mxu0 %v3279
    %v3281 = vand.u32 %v1988, 4294901760
    %v3282 = vsub.f32 %v1988, %v3281
    %3283 = vmatprep.subr.mxu0 %v3282
    %v3284 = vand.u32 %v1987, 4294901760
    %v3285 = vsub.f32 %v1987, %v3284
    %3286 = vmatpush1.msra.mxu0 %v3285
    %v3287 = vand.u32 %v1984, 4294901760
    %v3288 = vsub.f32 %v1984, %v3287
    %3289 = vmatprep.subr.mxu0 %v3288
    %v3290 = vand.u32 %v1983, 4294901760
    %v3291 = vsub.f32 %v1983, %v3290
    %3292 = vmatpush1.msra.mxu0 %v3291
    %v3293 = vand.u32 %v1980, 4294901760
    %v3294 = vsub.f32 %v1980, %v3293
    %3295 = vmatprep.subr.mxu0 %v3294
    %v3296 = vand.u32 %v1979, 4294901760
    %v3297 = vsub.f32 %v1979, %v3296
    %3298 = vmatpush1.msra.mxu0 %v3297
    %v3299 = vand.u32 %v1976, 4294901760
    %v3300 = vsub.f32 %v1976, %v3299
    %3301 = vmatprep.subr.mxu0 %v3300
    %v3302 = vand.u32 %v1975, 4294901760
    %v3303 = vsub.f32 %v1975, %v3302
    %3304 = vmatpush1.msra.mxu0 %v3303
    %v3305 = vand.u32 %v1972, 4294901760
    %v3306 = vsub.f32 %v1972, %v3305
    %3307 = vmatprep.subr.mxu0 %v3306
    %v3308 = vand.u32 %v1971, 4294901760
    %v3309 = vsub.f32 %v1971, %v3308
    %3310 = vmatpush1.msra.mxu0 %v3309
    %v3311 = vand.u32 %v1968, 4294901760
    %v3312 = vsub.f32 %v1968, %v3311
    %3313 = vmatprep.subr.mxu0 %v3312
    %v3314 = vand.u32 %v1967, 4294901760
    %v3315 = vsub.f32 %v1967, %v3314
    %3316 = vmatpush1.msra.mxu0 %v3315
    %v3317 = vand.u32 %v1964, 4294901760
    %v3318 = vsub.f32 %v1964, %v3317
    %3319 = vmatprep.subr.mxu0 %v3318
    %v3320 = vand.u32 %v1963, 4294901760
    %v3321 = vsub.f32 %v1963, %v3320
    %3322 = vmatpush1.msra.mxu0 %v3321
    %v3323 = vand.u32 %v1960, 4294901760
    %v3324 = vsub.f32 %v1960, %v3323
    %3325 = vmatprep.subr.mxu0 %v3324
    %v3326 = vand.u32 %v1959, 4294901760
    %v3327 = vsub.f32 %v1959, %v3326
    %3328 = vmatpush1.msra.mxu0 %v3327
    %v3329 = vand.u32 %v1956, 4294901760
    %v3330 = vsub.f32 %v1956, %v3329
    %3331 = vmatprep.subr.mxu0 %v3330
    %v3332 = vand.u32 %v1955, 4294901760
    %v3333 = vsub.f32 %v1955, %v3332
    %3334 = vmatpush1.msra.mxu0 %v3333
    %v3335 = vand.u32 %v1952, 4294901760
    %v3336 = vsub.f32 %v1952, %v3335
    %3337 = vmatprep.subr.mxu0 %v3336
    %v3338 = vand.u32 %v1951, 4294901760
    %v3339 = vsub.f32 %v1951, %v3338
    %3340 = vmatpush1.msra.mxu0 %v3339
    %v3341 = vand.u32 %v1948, 4294901760
    %v3342 = vsub.f32 %v1948, %v3341
    %3343 = vmatprep.subr.mxu0 %v3342
    %v3344 = vand.u32 %v1947, 4294901760
    %v3345 = vsub.f32 %v1947, %v3344
    %3346 = vmatpush1.msra.mxu0 %v3345
    %v3347 = vand.u32 %v1944, 4294901760
    %v3348 = vsub.f32 %v1944, %v3347
    %3349 = vmatprep.subr.mxu0 %v3348
    %v3350 = vand.u32 %v1943, 4294901760
    %v3351 = vsub.f32 %v1943, %v3350
    %3352 = vmatpush1.msra.mxu0 %v3351
    %v3353 = vand.u32 %v1940, 4294901760
    %v3354 = vsub.f32 %v1940, %v3353
    %3355 = vmatprep.subr.mxu0 %v3354
    %v3356 = vand.u32 %v1939, 4294901760
    %v3357 = vsub.f32 %v1939, %v3356
    %3358 = vmatpush1.msra.mxu0 %v3357
    %3359 = vmatprep.subr.mxu0 0.0
    %3360 = vmatpush2.msra.mxu0 0.0
    %3361 = vmatprep.subr.mxu0 0.0
    %3362 = vmatpush2.msra.mxu0 0.0
    %3363 = vmatprep.subr.mxu0 0.0
    %3364 = vmatpush2.msra.mxu0 0.0
    %3365 = vmatprep.subr.mxu0 0.0
    %3366 = vmatpush2.msra.mxu0 0.0
    %3367 = vmatprep.subr.mxu0 0.0
    %3368 = vmatpush2.msra.mxu0 0.0
    %3369 = vmatprep.subr.mxu0 0.0
    %3370 = vmatpush2.msra.mxu0 0.0
    %3371 = vmatprep.subr.mxu0 0.0
    %3372 = vmatpush2.msra.mxu0 0.0
    %3373 = vmatprep.subr.mxu0 0.0
    %3374 = vmatpush2.msra.mxu0 0.0
    %3375 = vmatprep.subr.mxu0 0.0
    %3376 = vmatpush2.msra.mxu0 0.0
    %3377 = vmatprep.subr.mxu0 0.0
    %3378 = vmatpush2.msra.mxu0 0.0
    %3379 = vmatprep.subr.mxu0 0.0
    %3380 = vmatpush2.msra.mxu0 0.0
    %3381 = vmatprep.subr.mxu0 0.0
    %3382 = vmatpush2.msra.mxu0 0.0
    %3383 = vmatprep.subr.mxu0 0.0
    %3384 = vmatpush2.msra.mxu0 0.0
    %3385 = vmatprep.subr.mxu0 0.0
    %3386 = vmatpush2.msra.mxu0 0.0
    %3387 = vmatprep.subr.mxu0 0.0
    %3388 = vmatpush2.msra.mxu0 0.0
    %3389 = vmatprep.subr.mxu0 0.0
    %3390 = vmatpush2.msra.mxu0 0.0
    %3391 = vmatprep.mubr.f32.mxu0 0.0
    %v3392 = vand.u32 %v62, 4294901760
    %v3393 = vsub.f32 %v62, %v3392
    %3394 = vmatmul.mubr.f32.gmra.mxu0 %v3393
    %v3395 = vpop.f32.mrf.mxu0
    %v3396 = vadd.f32 %v3252, %v3395
    %v3397 = vpop.f32.mrf.mxu0
    %v3398 = vadd.f32 %v3254, %v3397
    %3399 = vmatprep.mubr.f32.mxu0 0.0
    %v3400 = vand.u32 %v63, 4294901760
    %v3401 = vsub.f32 %v63, %v3400
    %3402 = vmatmul.mubr.f32.gmra.mxu0 %v3401
    %v3403 = vpop.f32.mrf.mxu0
    %v3404 = vadd.f32 %v3259, %v3403
    %v3405 = vpop.f32.mrf.mxu0
    %v3406 = vadd.f32 %v3261, %v3405
    %3407 = vdwg.mxu0
    %v3408 = vand.u32 %v2000, 4294901760
    %3409 = vmatprep.subr.mxu0 %v3408
    %v3410 = vand.u32 %v1999, 4294901760
    %3411 = vmatpush1.msra.mxu0 %v3410
    %v3412 = vand.u32 %v1996, 4294901760
    %3413 = vmatprep.subr.mxu0 %v3412
    %v3414 = vand.u32 %v1995, 4294901760
    %3415 = vmatpush1.msra.mxu0 %v3414
    %v3416 = vand.u32 %v1992, 4294901760
    %3417 = vmatprep.subr.mxu0 %v3416
    %v3418 = vand.u32 %v1991, 4294901760
    %3419 = vmatpush1.msra.mxu0 %v3418
    %v3420 = vand.u32 %v1988, 4294901760
    %3421 = vmatprep.subr.mxu0 %v3420
    %v3422 = vand.u32 %v1987, 4294901760
    %3423 = vmatpush1.msra.mxu0 %v3422
    %v3424 = vand.u32 %v1984, 4294901760
    %3425 = vmatprep.subr.mxu0 %v3424
    %v3426 = vand.u32 %v1983, 4294901760
    %3427 = vmatpush1.msra.mxu0 %v3426
    %v3428 = vand.u32 %v1980, 4294901760
    %3429 = vmatprep.subr.mxu0 %v3428
    %v3430 = vand.u32 %v1979, 4294901760
    %3431 = vmatpush1.msra.mxu0 %v3430
    %v3432 = vand.u32 %v1976, 4294901760
    %3433 = vmatprep.subr.mxu0 %v3432
    %v3434 = vand.u32 %v1975, 4294901760
    %3435 = vmatpush1.msra.mxu0 %v3434
    %v3436 = vand.u32 %v1972, 4294901760
    %3437 = vmatprep.subr.mxu0 %v3436
    %v3438 = vand.u32 %v1971, 4294901760
    %3439 = vmatpush1.msra.mxu0 %v3438
    %v3440 = vand.u32 %v1968, 4294901760
    %3441 = vmatprep.subr.mxu0 %v3440
    %v3442 = vand.u32 %v1967, 4294901760
    %3443 = vmatpush1.msra.mxu0 %v3442
    %v3444 = vand.u32 %v1964, 4294901760
    %3445 = vmatprep.subr.mxu0 %v3444
    %v3446 = vand.u32 %v1963, 4294901760
    %3447 = vmatpush1.msra.mxu0 %v3446
    %v3448 = vand.u32 %v1960, 4294901760
    %3449 = vmatprep.subr.mxu0 %v3448
    %v3450 = vand.u32 %v1959, 4294901760
    %3451 = vmatpush1.msra.mxu0 %v3450
    %v3452 = vand.u32 %v1956, 4294901760
    %3453 = vmatprep.subr.mxu0 %v3452
    %v3454 = vand.u32 %v1955, 4294901760
    %3455 = vmatpush1.msra.mxu0 %v3454
    %v3456 = vand.u32 %v1952, 4294901760
    %3457 = vmatprep.subr.mxu0 %v3456
    %v3458 = vand.u32 %v1951, 4294901760
    %3459 = vmatpush1.msra.mxu0 %v3458
    %v3460 = vand.u32 %v1948, 4294901760
    %3461 = vmatprep.subr.mxu0 %v3460
    %v3462 = vand.u32 %v1947, 4294901760
    %3463 = vmatpush1.msra.mxu0 %v3462
    %v3464 = vand.u32 %v1944, 4294901760
    %3465 = vmatprep.subr.mxu0 %v3464
    %v3466 = vand.u32 %v1943, 4294901760
    %3467 = vmatpush1.msra.mxu0 %v3466
    %v3468 = vand.u32 %v1940, 4294901760
    %3469 = vmatprep.subr.mxu0 %v3468
    %v3470 = vand.u32 %v1939, 4294901760
    %3471 = vmatpush1.msra.mxu0 %v3470
    %3472 = vmatprep.subr.mxu0 0.0
    %3473 = vmatpush2.msra.mxu0 0.0
    %3474 = vmatprep.subr.mxu0 0.0
    %3475 = vmatpush2.msra.mxu0 0.0
    %3476 = vmatprep.subr.mxu0 0.0
    %3477 = vmatpush2.msra.mxu0 0.0
    %3478 = vmatprep.subr.mxu0 0.0
    %3479 = vmatpush2.msra.mxu0 0.0
    %3480 = vmatprep.subr.mxu0 0.0
    %3481 = vmatpush2.msra.mxu0 0.0
    %3482 = vmatprep.subr.mxu0 0.0
    %3483 = vmatpush2.msra.mxu0 0.0
    %3484 = vmatprep.subr.mxu0 0.0
    %3485 = vmatpush2.msra.mxu0 0.0
    %3486 = vmatprep.subr.mxu0 0.0
    %3487 = vmatpush2.msra.mxu0 0.0
    %3488 = vmatprep.subr.mxu0 0.0
    %3489 = vmatpush2.msra.mxu0 0.0
    %3490 = vmatprep.subr.mxu0 0.0
    %3491 = vmatpush2.msra.mxu0 0.0
    %3492 = vmatprep.subr.mxu0 0.0
    %3493 = vmatpush2.msra.mxu0 0.0
    %3494 = vmatprep.subr.mxu0 0.0
    %3495 = vmatpush2.msra.mxu0 0.0
    %3496 = vmatprep.subr.mxu0 0.0
    %3497 = vmatpush2.msra.mxu0 0.0
    %3498 = vmatprep.subr.mxu0 0.0
    %3499 = vmatpush2.msra.mxu0 0.0
    %3500 = vmatprep.subr.mxu0 0.0
    %3501 = vmatpush2.msra.mxu0 0.0
    %3502 = vmatprep.subr.mxu0 0.0
    %3503 = vmatpush2.msra.mxu0 0.0
    %3504 = vmatprep.mubr.f32.mxu0 0.0
    %v3505 = vand.u32 %v62, 4294901760
    %v3506 = vsub.f32 %v62, %v3505
    %v3507 = vand.u32 %v3506, 4294901760
    %3508 = vmatmul.mubr.f32.gmra.mxu0 %v3507
    %v3509 = vpop.f32.mrf.mxu0
    %v3510 = vadd.f32 %v3396, %v3509
    %v3511 = vpop.f32.mrf.mxu0
    %v3512 = vadd.f32 %v3398, %v3511
    %3513 = vmatprep.mubr.f32.mxu0 0.0
    %v3514 = vand.u32 %v63, 4294901760
    %v3515 = vsub.f32 %v63, %v3514
    %v3516 = vand.u32 %v3515, 4294901760
    %3517 = vmatmul.mubr.f32.gmra.mxu0 %v3516
    %v3518 = vpop.f32.mrf.mxu0
    %v3519 = vadd.f32 %v3404, %v3518
    %v3520 = vpop.f32.mrf.mxu0
    %v3521 = vadd.f32 %v3406, %v3520
    %3522 = vdwg.mxu0
    %v3523 = vand.u32 %v2000, 4294901760
    %v3524 = vsub.f32 %v2000, %v3523
    %v3525 = vand.u32 %v3524, 4294901760
    %3526 = vmatprep.subr.mxu0 %v3525
    %v3527 = vand.u32 %v1999, 4294901760
    %v3528 = vsub.f32 %v1999, %v3527
    %v3529 = vand.u32 %v3528, 4294901760
    %3530 = vmatpush1.msra.mxu0 %v3529
    %v3531 = vand.u32 %v1996, 4294901760
    %v3532 = vsub.f32 %v1996, %v3531
    %v3533 = vand.u32 %v3532, 4294901760
    %3534 = vmatprep.subr.mxu0 %v3533
    %v3535 = vand.u32 %v1995, 4294901760
    %v3536 = vsub.f32 %v1995, %v3535
    %v3537 = vand.u32 %v3536, 4294901760
    %3538 = vmatpush1.msra.mxu0 %v3537
    %v3539 = vand.u32 %v1992, 4294901760
    %v3540 = vsub.f32 %v1992, %v3539
    %v3541 = vand.u32 %v3540, 4294901760
    %3542 = vmatprep.subr.mxu0 %v3541
    %v3543 = vand.u32 %v1991, 4294901760
    %v3544 = vsub.f32 %v1991, %v3543
    %v3545 = vand.u32 %v3544, 4294901760
    %3546 = vmatpush1.msra.mxu0 %v3545
    %v3547 = vand.u32 %v1988, 4294901760
    %v3548 = vsub.f32 %v1988, %v3547
    %v3549 = vand.u32 %v3548, 4294901760
    %3550 = vmatprep.subr.mxu0 %v3549
    %v3551 = vand.u32 %v1987, 4294901760
    %v3552 = vsub.f32 %v1987, %v3551
    %v3553 = vand.u32 %v3552, 4294901760
    %3554 = vmatpush1.msra.mxu0 %v3553
    %v3555 = vand.u32 %v1984, 4294901760
    %v3556 = vsub.f32 %v1984, %v3555
    %v3557 = vand.u32 %v3556, 4294901760
    %3558 = vmatprep.subr.mxu0 %v3557
    %v3559 = vand.u32 %v1983, 4294901760
    %v3560 = vsub.f32 %v1983, %v3559
    %v3561 = vand.u32 %v3560, 4294901760
    %3562 = vmatpush1.msra.mxu0 %v3561
    %v3563 = vand.u32 %v1980, 4294901760
    %v3564 = vsub.f32 %v1980, %v3563
    %v3565 = vand.u32 %v3564, 4294901760
    %3566 = vmatprep.subr.mxu0 %v3565
    %v3567 = vand.u32 %v1979, 4294901760
    %v3568 = vsub.f32 %v1979, %v3567
    %v3569 = vand.u32 %v3568, 4294901760
    %3570 = vmatpush1.msra.mxu0 %v3569
    %v3571 = vand.u32 %v1976, 4294901760
    %v3572 = vsub.f32 %v1976, %v3571
    %v3573 = vand.u32 %v3572, 4294901760
    %3574 = vmatprep.subr.mxu0 %v3573
    %v3575 = vand.u32 %v1975, 4294901760
    %v3576 = vsub.f32 %v1975, %v3575
    %v3577 = vand.u32 %v3576, 4294901760
    %3578 = vmatpush1.msra.mxu0 %v3577
    %v3579 = vand.u32 %v1972, 4294901760
    %v3580 = vsub.f32 %v1972, %v3579
    %v3581 = vand.u32 %v3580, 4294901760
    %3582 = vmatprep.subr.mxu0 %v3581
    %v3583 = vand.u32 %v1971, 4294901760
    %v3584 = vsub.f32 %v1971, %v3583
    %v3585 = vand.u32 %v3584, 4294901760
    %3586 = vmatpush1.msra.mxu0 %v3585
    %v3587 = vand.u32 %v1968, 4294901760
    %v3588 = vsub.f32 %v1968, %v3587
    %v3589 = vand.u32 %v3588, 4294901760
    %3590 = vmatprep.subr.mxu0 %v3589
    %v3591 = vand.u32 %v1967, 4294901760
    %v3592 = vsub.f32 %v1967, %v3591
    %v3593 = vand.u32 %v3592, 4294901760
    %3594 = vmatpush1.msra.mxu0 %v3593
    %v3595 = vand.u32 %v1964, 4294901760
    %v3596 = vsub.f32 %v1964, %v3595
    %v3597 = vand.u32 %v3596, 4294901760
    %3598 = vmatprep.subr.mxu0 %v3597
    %v3599 = vand.u32 %v1963, 4294901760
    %v3600 = vsub.f32 %v1963, %v3599
    %v3601 = vand.u32 %v3600, 4294901760
    %3602 = vmatpush1.msra.mxu0 %v3601
    %v3603 = vand.u32 %v1960, 4294901760
    %v3604 = vsub.f32 %v1960, %v3603
    %v3605 = vand.u32 %v3604, 4294901760
    %3606 = vmatprep.subr.mxu0 %v3605
    %v3607 = vand.u32 %v1959, 4294901760
    %v3608 = vsub.f32 %v1959, %v3607
    %v3609 = vand.u32 %v3608, 4294901760
    %3610 = vmatpush1.msra.mxu0 %v3609
    %v3611 = vand.u32 %v1956, 4294901760
    %v3612 = vsub.f32 %v1956, %v3611
    %v3613 = vand.u32 %v3612, 4294901760
    %3614 = vmatprep.subr.mxu0 %v3613
    %v3615 = vand.u32 %v1955, 4294901760
    %v3616 = vsub.f32 %v1955, %v3615
    %v3617 = vand.u32 %v3616, 4294901760
    %3618 = vmatpush1.msra.mxu0 %v3617
    %v3619 = vand.u32 %v1952, 4294901760
    %v3620 = vsub.f32 %v1952, %v3619
    %v3621 = vand.u32 %v3620, 4294901760
    %3622 = vmatprep.subr.mxu0 %v3621
    %v3623 = vand.u32 %v1951, 4294901760
    %v3624 = vsub.f32 %v1951, %v3623
    %v3625 = vand.u32 %v3624, 4294901760
    %3626 = vmatpush1.msra.mxu0 %v3625
    %v3627 = vand.u32 %v1948, 4294901760
    %v3628 = vsub.f32 %v1948, %v3627
    %v3629 = vand.u32 %v3628, 4294901760
    %3630 = vmatprep.subr.mxu0 %v3629
    %v3631 = vand.u32 %v1947, 4294901760
    %v3632 = vsub.f32 %v1947, %v3631
    %v3633 = vand.u32 %v3632, 4294901760
    %3634 = vmatpush1.msra.mxu0 %v3633
    %v3635 = vand.u32 %v1944, 4294901760
    %v3636 = vsub.f32 %v1944, %v3635
    %v3637 = vand.u32 %v3636, 4294901760
    %3638 = vmatprep.subr.mxu0 %v3637
    %v3639 = vand.u32 %v1943, 4294901760
    %v3640 = vsub.f32 %v1943, %v3639
    %v3641 = vand.u32 %v3640, 4294901760
    %3642 = vmatpush1.msra.mxu0 %v3641
    %v3643 = vand.u32 %v1940, 4294901760
    %v3644 = vsub.f32 %v1940, %v3643
    %v3645 = vand.u32 %v3644, 4294901760
    %3646 = vmatprep.subr.mxu0 %v3645
    %v3647 = vand.u32 %v1939, 4294901760
    %v3648 = vsub.f32 %v1939, %v3647
    %v3649 = vand.u32 %v3648, 4294901760
    %3650 = vmatpush1.msra.mxu0 %v3649
    %3651 = vmatprep.subr.mxu0 0.0
    %3652 = vmatpush2.msra.mxu0 0.0
    %3653 = vmatprep.subr.mxu0 0.0
    %3654 = vmatpush2.msra.mxu0 0.0
    %3655 = vmatprep.subr.mxu0 0.0
    %3656 = vmatpush2.msra.mxu0 0.0
    %3657 = vmatprep.subr.mxu0 0.0
    %3658 = vmatpush2.msra.mxu0 0.0
    %3659 = vmatprep.subr.mxu0 0.0
    %3660 = vmatpush2.msra.mxu0 0.0
    %3661 = vmatprep.subr.mxu0 0.0
    %3662 = vmatpush2.msra.mxu0 0.0
    %3663 = vmatprep.subr.mxu0 0.0
    %3664 = vmatpush2.msra.mxu0 0.0
    %3665 = vmatprep.subr.mxu0 0.0
    %3666 = vmatpush2.msra.mxu0 0.0
    %3667 = vmatprep.subr.mxu0 0.0
    %3668 = vmatpush2.msra.mxu0 0.0
    %3669 = vmatprep.subr.mxu0 0.0
    %3670 = vmatpush2.msra.mxu0 0.0
    %3671 = vmatprep.subr.mxu0 0.0
    %3672 = vmatpush2.msra.mxu0 0.0
    %3673 = vmatprep.subr.mxu0 0.0
    %3674 = vmatpush2.msra.mxu0 0.0
    %3675 = vmatprep.subr.mxu0 0.0
    %3676 = vmatpush2.msra.mxu0 0.0
    %3677 = vmatprep.subr.mxu0 0.0
    %3678 = vmatpush2.msra.mxu0 0.0
    %3679 = vmatprep.subr.mxu0 0.0
    %3680 = vmatpush2.msra.mxu0 0.0
    %3681 = vmatprep.subr.mxu0 0.0
    %3682 = vmatpush2.msra.mxu0 0.0
    %3683 = vmatprep.mubr.f32.mxu0 0.0
    %v3684 = vand.u32 %v62, 4294901760
    %3685 = vmatmul.mubr.f32.gmra.mxu0 %v3684
    %v3686 = vpop.f32.mrf.mxu0
    %v3687 = vadd.f32 %v3510, %v3686
    %v3688 = vpop.f32.mrf.mxu0
    %v3689 = vadd.f32 %v3512, %v3688
    %3690 = vmatprep.mubr.f32.mxu0 0.0
    %v3691 = vand.u32 %v63, 4294901760
    %3692 = vmatmul.mubr.f32.gmra.mxu0 %v3691
    %v3693 = vpop.f32.mrf.mxu0
    %v3694 = vadd.f32 %v3519, %v3693
    %v3695 = vpop.f32.mrf.mxu0
    %v3696 = vadd.f32 %v3521, %v3695
    %3697 = vdwg.mxu0
    %v3698 = vand.u32 %v2000, 4294901760
    %3699 = vmatprep.subr.mxu0 %v3698
    %v3700 = vand.u32 %v1999, 4294901760
    %3701 = vmatpush1.msra.mxu0 %v3700
    %v3702 = vand.u32 %v1996, 4294901760
    %3703 = vmatprep.subr.mxu0 %v3702
    %v3704 = vand.u32 %v1995, 4294901760
    %3705 = vmatpush1.msra.mxu0 %v3704
    %v3706 = vand.u32 %v1992, 4294901760
    %3707 = vmatprep.subr.mxu0 %v3706
    %v3708 = vand.u32 %v1991, 4294901760
    %3709 = vmatpush1.msra.mxu0 %v3708
    %v3710 = vand.u32 %v1988, 4294901760
    %3711 = vmatprep.subr.mxu0 %v3710
    %v3712 = vand.u32 %v1987, 4294901760
    %3713 = vmatpush1.msra.mxu0 %v3712
    %v3714 = vand.u32 %v1984, 4294901760
    %3715 = vmatprep.subr.mxu0 %v3714
    %v3716 = vand.u32 %v1983, 4294901760
    %3717 = vmatpush1.msra.mxu0 %v3716
    %v3718 = vand.u32 %v1980, 4294901760
    %3719 = vmatprep.subr.mxu0 %v3718
    %v3720 = vand.u32 %v1979, 4294901760
    %3721 = vmatpush1.msra.mxu0 %v3720
    %v3722 = vand.u32 %v1976, 4294901760
    %3723 = vmatprep.subr.mxu0 %v3722
    %v3724 = vand.u32 %v1975, 4294901760
    %3725 = vmatpush1.msra.mxu0 %v3724
    %v3726 = vand.u32 %v1972, 4294901760
    %3727 = vmatprep.subr.mxu0 %v3726
    %v3728 = vand.u32 %v1971, 4294901760
    %3729 = vmatpush1.msra.mxu0 %v3728
    %v3730 = vand.u32 %v1968, 4294901760
    %3731 = vmatprep.subr.mxu0 %v3730
    %v3732 = vand.u32 %v1967, 4294901760
    %3733 = vmatpush1.msra.mxu0 %v3732
    %v3734 = vand.u32 %v1964, 4294901760
    %3735 = vmatprep.subr.mxu0 %v3734
    %v3736 = vand.u32 %v1963, 4294901760
    %3737 = vmatpush1.msra.mxu0 %v3736
    %v3738 = vand.u32 %v1960, 4294901760
    %3739 = vmatprep.subr.mxu0 %v3738
    %v3740 = vand.u32 %v1959, 4294901760
    %3741 = vmatpush1.msra.mxu0 %v3740
    %v3742 = vand.u32 %v1956, 4294901760
    %3743 = vmatprep.subr.mxu0 %v3742
    %v3744 = vand.u32 %v1955, 4294901760
    %3745 = vmatpush1.msra.mxu0 %v3744
    %v3746 = vand.u32 %v1952, 4294901760
    %3747 = vmatprep.subr.mxu0 %v3746
    %v3748 = vand.u32 %v1951, 4294901760
    %3749 = vmatpush1.msra.mxu0 %v3748
    %v3750 = vand.u32 %v1948, 4294901760
    %3751 = vmatprep.subr.mxu0 %v3750
    %v3752 = vand.u32 %v1947, 4294901760
    %3753 = vmatpush1.msra.mxu0 %v3752
    %v3754 = vand.u32 %v1944, 4294901760
    %3755 = vmatprep.subr.mxu0 %v3754
    %v3756 = vand.u32 %v1943, 4294901760
    %3757 = vmatpush1.msra.mxu0 %v3756
    %v3758 = vand.u32 %v1940, 4294901760
    %3759 = vmatprep.subr.mxu0 %v3758
    %v3760 = vand.u32 %v1939, 4294901760
    %3761 = vmatpush1.msra.mxu0 %v3760
    %3762 = vmatprep.subr.mxu0 0.0
    %3763 = vmatpush2.msra.mxu0 0.0
    %3764 = vmatprep.subr.mxu0 0.0
    %3765 = vmatpush2.msra.mxu0 0.0
    %3766 = vmatprep.subr.mxu0 0.0
    %3767 = vmatpush2.msra.mxu0 0.0
    %3768 = vmatprep.subr.mxu0 0.0
    %3769 = vmatpush2.msra.mxu0 0.0
    %3770 = vmatprep.subr.mxu0 0.0
    %3771 = vmatpush2.msra.mxu0 0.0
    %3772 = vmatprep.subr.mxu0 0.0
    %3773 = vmatpush2.msra.mxu0 0.0
    %3774 = vmatprep.subr.mxu0 0.0
    %3775 = vmatpush2.msra.mxu0 0.0
    %3776 = vmatprep.subr.mxu0 0.0
    %3777 = vmatpush2.msra.mxu0 0.0
    %3778 = vmatprep.subr.mxu0 0.0
    %3779 = vmatpush2.msra.mxu0 0.0
    %3780 = vmatprep.subr.mxu0 0.0
    %3781 = vmatpush2.msra.mxu0 0.0
    %3782 = vmatprep.subr.mxu0 0.0
    %3783 = vmatpush2.msra.mxu0 0.0
    %3784 = vmatprep.subr.mxu0 0.0
    %3785 = vmatpush2.msra.mxu0 0.0
    %3786 = vmatprep.subr.mxu0 0.0
    %3787 = vmatpush2.msra.mxu0 0.0
    %3788 = vmatprep.subr.mxu0 0.0
    %3789 = vmatpush2.msra.mxu0 0.0
    %3790 = vmatprep.subr.mxu0 0.0
    %3791 = vmatpush2.msra.mxu0 0.0
    %3792 = vmatprep.subr.mxu0 0.0
    %3793 = vmatpush2.msra.mxu0 0.0
    %3794 = vmatprep.mubr.f32.mxu0 0.0
    %v3795 = vand.u32 %v62, 4294901760
    %3796 = vmatmul.mubr.f32.gmra.mxu0 %v3795
    %v3797 = vpop.f32.mrf.mxu0
    %v3798 = vadd.f32 %v3687, %v3797
    %v3799 = vpop.f32.mrf.mxu0
    %v3800 = vadd.f32 %v3689, %v3799
    %3801 = vmatprep.mubr.f32.mxu0 0.0
    %v3802 = vand.u32 %v63, 4294901760
    %3803 = vmatmul.mubr.f32.gmra.mxu0 %v3802
    %v3804 = vpop.f32.mrf.mxu0
    %v3805 = vadd.f32 %v3694, %v3804
    %v3806 = vpop.f32.mrf.mxu0
    %v3807 = vadd.f32 %v3696, %v3806
    %3808 = vdwg.mxu0
    %v3809 = vxor.u32 %v1021, 2147483648
    %v3810 = vxor.u32 %v1023, 2147483648
    %v3811 = vxor.u32 %v1925, 2147483648
    %v3812 = vxor.u32 %v1927, 2147483648
    %v3813 = vxor.u32 %v1028, 2147483648
    %v3814 = vxor.u32 %v1030, 2147483648
    %v3815 = vxor.u32 %v1932, 2147483648
    %v3816 = vxor.u32 %v1934, 2147483648
    %v3817 = vmul.f32 %v3809, 1.442695
    %v3818 = vpow.pop %v3817
    %v3819 = vmul.f32 %v3810, 1.442695
    %v3820 = vpow.pop %v3819
    %v3821 = vmul.f32 %v3811, 1.442695
    %v3822 = vpow.pop %v3821
    %v3823 = vmul.f32 %v3812, 1.442695
    %v3824 = vpow.pop %v3823
    %v3825 = vmul.f32 %v3813, 1.442695
    %v3826 = vpow.pop %v3825
    %v3827 = vmul.f32 %v3814, 1.442695
    %v3828 = vpow.pop %v3827
    %v3829 = vmul.f32 %v3815, 1.442695
    %v3830 = vpow.pop %v3829
    %v3831 = vmul.f32 %v3816, 1.442695
    %v3832 = vpow.pop %v3831
    %v3833 = vadd.f32 %v3818, 1.0
    %v3834 = vadd.f32 %v3820, 1.0
    %v3835 = vadd.f32 %v3822, 1.0
    %v3836 = vadd.f32 %v3824, 1.0
    %v3837 = vadd.f32 %v3826, 1.0
    %v3838 = vadd.f32 %v3828, 1.0
    %v3839 = vadd.f32 %v3830, 1.0
    %v3840 = vadd.f32 %v3832, 1.0
    %v3841 = vrcp.pop %v3833
    %v3842 = vmul.f32 1.0, %v3841
    %v3843 = vrcp.pop %v3834
    %v3844 = vmul.f32 1.0, %v3843
    %v3845 = vrcp.pop %v3835
    %v3846 = vmul.f32 1.0, %v3845
    %v3847 = vrcp.pop %v3836
    %v3848 = vmul.f32 1.0, %v3847
    %v3849 = vrcp.pop %v3837
    %v3850 = vmul.f32 1.0, %v3849
    %v3851 = vrcp.pop %v3838
    %v3852 = vmul.f32 1.0, %v3851
    %v3853 = vrcp.pop %v3839
    %v3854 = vmul.f32 1.0, %v3853
    %v3855 = vrcp.pop %v3840
    %v3856 = vmul.f32 1.0, %v3855
    %v3857 = vmul.f32 %v1021, %v3842
    %v3858 = vmul.f32 %v1023, %v3844
    %v3859 = vmul.f32 %v1925, %v3846
    %v3860 = vmul.f32 %v1927, %v3848
    %v3861 = vmul.f32 %v1028, %v3850
    %v3862 = vmul.f32 %v1030, %v3852
    %v3863 = vmul.f32 %v1932, %v3854
    %v3864 = vmul.f32 %v1934, %v3856
    %v3865 = vmul.f32 %v3857, %v2894
    %v3866 = vmul.f32 %v3858, %v2896
    %v3867 = vmul.f32 %v3859, %v3798
    %v3868 = vmul.f32 %v3860, %v3800
    %v3869 = vmul.f32 %v3861, %v2901
    %v3870 = vmul.f32 %v3862, %v2903
    %v3871 = vmul.f32 %v3863, %v3805
    %v3872 = vmul.f32 %v3864, %v3807
    %v3873 = vld [vmem:[#allocation8] sm:$0xff]
    %v3874 = vld [vmem:[#allocation8 + $0x8] sm:$0xff]
    %v3875 = vld [vmem:[#allocation7] sm:$0xff]
    %v3876 = vld [vmem:[#allocation7 + $0x8] sm:$0xff]
    %v3877 = vld [vmem:[#allocation7 + $0x10] sm:$0xff]
    %v3878 = vld [vmem:[#allocation7 + $0x18] sm:$0xff]
    %v3879 = vld [vmem:[#allocation7 + $0x20] sm:$0xff]
    %v3880 = vld [vmem:[#allocation7 + $0x28] sm:$0xff]
    %v3881 = vld [vmem:[#allocation7 + $0x30] sm:$0xff]
    %v3882 = vld [vmem:[#allocation7 + $0x38] sm:$0xff]
    %v3883 = vld [vmem:[#allocation7 + $0x40] sm:$0xff]
    %v3884 = vld [vmem:[#allocation7 + $0x48] sm:$0xff]
    %v3885 = vld [vmem:[#allocation7 + $0x50] sm:$0xff]
    %v3886 = vld [vmem:[#allocation7 + $0x58] sm:$0xff]
    %v3887 = vld [vmem:[#allocation7 + $0x60] sm:$0xff]
    %v3888 = vld [vmem:[#allocation7 + $0x68] sm:$0xff]
    %v3889 = vld [vmem:[#allocation7 + $0x70] sm:$0xff]
    %v3890 = vld [vmem:[#allocation7 + $0x78] sm:$0xff]
    %v3891 = vld [vmem:[#allocation7 + $0x80] sm:$0xff]
    %v3892 = vld [vmem:[#allocation7 + $0x88] sm:$0xff]
    %v3893 = vld [vmem:[#allocation7 + $0x90] sm:$0xff]
    %v3894 = vld [vmem:[#allocation7 + $0x98] sm:$0xff]
    %v3895 = vld [vmem:[#allocation7 + $0xa0] sm:$0xff]
    %v3896 = vld [vmem:[#allocation7 + $0xa8] sm:$0xff]
    %v3897 = vld [vmem:[#allocation7 + $0xb0] sm:$0xff]
    %v3898 = vld [vmem:[#allocation7 + $0xb8] sm:$0xff]
    %v3899 = vld [vmem:[#allocation7 + $0xc0] sm:$0xff]
    %v3900 = vld [vmem:[#allocation7 + $0xc8] sm:$0xff]
    %v3901 = vld [vmem:[#allocation7 + $0xd0] sm:$0xff]
    %v3902 = vld [vmem:[#allocation7 + $0xd8] sm:$0xff]
    %v3903 = vld [vmem:[#allocation7 + $0xe0] sm:$0xff]
    %v3904 = vld [vmem:[#allocation7 + $0xe8] sm:$0xff]
    %v3905 = vld [vmem:[#allocation7 + $0xf0] sm:$0xff]
    %v3906 = vld [vmem:[#allocation7 + $0xf8] sm:$0xff]
    %v3907 = vld [vmem:[#allocation7 + $0x100] sm:$0xff]
    %v3908 = vld [vmem:[#allocation7 + $0x108] sm:$0xff]
    %v3909 = vld [vmem:[#allocation7 + $0x110] sm:$0xff]
    %v3910 = vld [vmem:[#allocation7 + $0x118] sm:$0xff]
    %v3911 = vld [vmem:[#allocation7 + $0x120] sm:$0xff]
    %v3912 = vld [vmem:[#allocation7 + $0x128] sm:$0xff]
    %v3913 = vld [vmem:[#allocation7 + $0x130] sm:$0xff]
    %v3914 = vld [vmem:[#allocation7 + $0x138] sm:$0xff]
    %v3915 = vld [vmem:[#allocation7 + $0x140] sm:$0xff]
    %v3916 = vld [vmem:[#allocation7 + $0x148] sm:$0xff]
    %v3917 = vld [vmem:[#allocation7 + $0x150] sm:$0xff]
    %v3918 = vld [vmem:[#allocation7 + $0x158] sm:$0xff]
    %v3919 = vld [vmem:[#allocation7 + $0x160] sm:$0xff]
    %v3920 = vld [vmem:[#allocation7 + $0x168] sm:$0xff]
    %v3921 = vld [vmem:[#allocation7 + $0x170] sm:$0xff]
    %v3922 = vld [vmem:[#allocation7 + $0x178] sm:$0xff]
    %v3923 = vld [vmem:[#allocation7 + $0x180] sm:$0xff]
    %v3924 = vld [vmem:[#allocation7 + $0x188] sm:$0xff]
    %v3925 = vld [vmem:[#allocation7 + $0x190] sm:$0xff]
    %v3926 = vld [vmem:[#allocation7 + $0x198] sm:$0xff]
    %v3927 = vld [vmem:[#allocation7 + $0x1a0] sm:$0xff]
    %v3928 = vld [vmem:[#allocation7 + $0x1a8] sm:$0xff]
    %v3929 = vld [vmem:[#allocation7 + $0x1b0] sm:$0xff]
    %v3930 = vld [vmem:[#allocation7 + $0x1b8] sm:$0xff]
    %v3931 = vld [vmem:[#allocation7 + $0x1c0] sm:$0xff]
    %v3932 = vld [vmem:[#allocation7 + $0x1c8] sm:$0xff]
    %v3933 = vld [vmem:[#allocation7 + $0x1d0] sm:$0xff]
    %v3934 = vld [vmem:[#allocation7 + $0x1d8] sm:$0xff]
    %v3935 = vld [vmem:[#allocation7 + $0x1e0] sm:$0xff]
    %v3936 = vld [vmem:[#allocation7 + $0x1e8] sm:$0xff]
    %v3937 = vld [vmem:[#allocation7 + $0x1f0] sm:$0xff]
    %v3938 = vld [vmem:[#allocation7 + $0x1f8] sm:$0xff]
    %3939 = vmatprep.subr.mxu0 0.0
    %v3940 = vand.u32 %v3890, 4294901760
    %3941 = vmatpush1.msra.mxu0 %v3940
    %3942 = vmatprep.subr.mxu0 0.0
    %v3943 = vand.u32 %v3889, 4294901760
    %3944 = vmatpush1.msra.mxu0 %v3943
    %3945 = vmatprep.subr.mxu0 0.0
    %v3946 = vand.u32 %v3888, 4294901760
    %3947 = vmatpush1.msra.mxu0 %v3946
    %3948 = vmatprep.subr.mxu0 0.0
    %v3949 = vand.u32 %v3887, 4294901760
    %3950 = vmatpush1.msra.mxu0 %v3949
    %3951 = vmatprep.subr.mxu0 0.0
    %v3952 = vand.u32 %v3886, 4294901760
    %3953 = vmatpush1.msra.mxu0 %v3952
    %3954 = vmatprep.subr.mxu0 0.0
    %v3955 = vand.u32 %v3885, 4294901760
    %3956 = vmatpush1.msra.mxu0 %v3955
    %3957 = vmatprep.subr.mxu0 0.0
    %v3958 = vand.u32 %v3884, 4294901760
    %3959 = vmatpush1.msra.mxu0 %v3958
    %3960 = vmatprep.subr.mxu0 0.0
    %v3961 = vand.u32 %v3883, 4294901760
    %3962 = vmatpush1.msra.mxu0 %v3961
    %3963 = vmatprep.subr.mxu0 0.0
    %v3964 = vand.u32 %v3882, 4294901760
    %3965 = vmatpush1.msra.mxu0 %v3964
    %3966 = vmatprep.subr.mxu0 0.0
    %v3967 = vand.u32 %v3881, 4294901760
    %3968 = vmatpush1.msra.mxu0 %v3967
    %3969 = vmatprep.subr.mxu0 0.0
    %v3970 = vand.u32 %v3880, 4294901760
    %3971 = vmatpush1.msra.mxu0 %v3970
    %3972 = vmatprep.subr.mxu0 0.0
    %v3973 = vand.u32 %v3879, 4294901760
    %3974 = vmatpush1.msra.mxu0 %v3973
    %3975 = vmatprep.subr.mxu0 0.0
    %v3976 = vand.u32 %v3878, 4294901760
    %3977 = vmatpush1.msra.mxu0 %v3976
    %3978 = vmatprep.subr.mxu0 0.0
    %v3979 = vand.u32 %v3877, 4294901760
    %3980 = vmatpush1.msra.mxu0 %v3979
    %3981 = vmatprep.subr.mxu0 0.0
    %v3982 = vand.u32 %v3876, 4294901760
    %3983 = vmatpush1.msra.mxu0 %v3982
    %3984 = vmatprep.subr.mxu0 0.0
    %v3985 = vand.u32 %v3875, 4294901760
    %3986 = vmatpush1.msra.mxu0 %v3985
    %3987 = vmatprep.subr.mxu0 0.0
    %v3988 = vand.u32 %v3906, 4294901760
    %3989 = vmatpush2.msra.mxu0 %v3988
    %3990 = vmatprep.subr.mxu0 0.0
    %v3991 = vand.u32 %v3905, 4294901760
    %3992 = vmatpush2.msra.mxu0 %v3991
    %3993 = vmatprep.subr.mxu0 0.0
    %v3994 = vand.u32 %v3904, 4294901760
    %3995 = vmatpush2.msra.mxu0 %v3994
    %3996 = vmatprep.subr.mxu0 0.0
    %v3997 = vand.u32 %v3903, 4294901760
    %3998 = vmatpush2.msra.mxu0 %v3997
    %3999 = vmatprep.subr.mxu0 0.0
    %v4000 = vand.u32 %v3902, 4294901760
    %4001 = vmatpush2.msra.mxu0 %v4000
    %4002 = vmatprep.subr.mxu0 0.0
    %v4003 = vand.u32 %v3901, 4294901760
    %4004 = vmatpush2.msra.mxu0 %v4003
    %4005 = vmatprep.subr.mxu0 0.0
    %v4006 = vand.u32 %v3900, 4294901760
    %4007 = vmatpush2.msra.mxu0 %v4006
    %4008 = vmatprep.subr.mxu0 0.0
    %v4009 = vand.u32 %v3899, 4294901760
    %4010 = vmatpush2.msra.mxu0 %v4009
    %4011 = vmatprep.subr.mxu0 0.0
    %v4012 = vand.u32 %v3898, 4294901760
    %4013 = vmatpush2.msra.mxu0 %v4012
    %4014 = vmatprep.subr.mxu0 0.0
    %v4015 = vand.u32 %v3897, 4294901760
    %4016 = vmatpush2.msra.mxu0 %v4015
    %4017 = vmatprep.subr.mxu0 0.0
    %v4018 = vand.u32 %v3896, 4294901760
    %4019 = vmatpush2.msra.mxu0 %v4018
    %4020 = vmatprep.subr.mxu0 0.0
    %v4021 = vand.u32 %v3895, 4294901760
    %4022 = vmatpush2.msra.mxu0 %v4021
    %4023 = vmatprep.subr.mxu0 0.0
    %v4024 = vand.u32 %v3894, 4294901760
    %4025 = vmatpush2.msra.mxu0 %v4024
    %4026 = vmatprep.subr.mxu0 0.0
    %v4027 = vand.u32 %v3893, 4294901760
    %4028 = vmatpush2.msra.mxu0 %v4027
    %4029 = vmatprep.subr.mxu0 0.0
    %v4030 = vand.u32 %v3892, 4294901760
    %4031 = vmatpush2.msra.mxu0 %v4030
    %4032 = vmatprep.subr.mxu0 0.0
    %v4033 = vand.u32 %v3891, 4294901760
    %4034 = vmatpush2.msra.mxu0 %v4033
    %v4035 = vand.u32 %v3866, 4294901760
    %v4036 = vsub.f32 %v3866, %v4035
    %v4037 = vand.u32 %v4036, 4294901760
    %v4038 = vsub.f32 %v4036, %v4037
    %v4039 = vand.u32 %v4038, 4294901760
    %4040 = vmatprep.mubr.f32.mxu0 %v4039
    %v4041 = vand.u32 %v3865, 4294901760
    %v4042 = vsub.f32 %v3865, %v4041
    %v4043 = vand.u32 %v4042, 4294901760
    %v4044 = vsub.f32 %v4042, %v4043
    %v4045 = vand.u32 %v4044, 4294901760
    %4046 = vmatmul.mubr.f32.gmra.mxu0 %v4045
    %v4047 = vpop.f32.mrf.mxu0
    %v4048 = vadd.f32 0.0, %v4047
    %v4049 = vpop.f32.mrf.mxu0
    %v4050 = vand.u32 %v3870, 4294901760
    %v4051 = vsub.f32 %v3870, %v4050
    %v4052 = vand.u32 %v4051, 4294901760
    %v4053 = vsub.f32 %v4051, %v4052
    %v4054 = vand.u32 %v4053, 4294901760
    %4055 = vmatprep.mubr.f32.mxu0 %v4054
    %v4056 = vand.u32 %v3869, 4294901760
    %v4057 = vsub.f32 %v3869, %v4056
    %v4058 = vand.u32 %v4057, 4294901760
    %v4059 = vsub.f32 %v4057, %v4058
    %v4060 = vand.u32 %v4059, 4294901760
    %4061 = vmatmul.mubr.f32.gmra.mxu0 %v4060
    %v4062 = vpop.f32.mrf.mxu0
    %v4063 = vadd.f32 0.0, %v4062
    %v4064 = vpop.f32.mrf.mxu0
    %4065 = vdwg.mxu0
    %4066 = vmatprep.subr.mxu0 0.0
    %v4067 = vand.u32 %v3890, 4294901760
    %v4068 = vsub.f32 %v3890, %v4067
    %v4069 = vand.u32 %v4068, 4294901760
    %v4070 = vsub.f32 %v4068, %v4069
    %v4071 = vand.u32 %v4070, 4294901760
    %4072 = vmatpush1.msra.mxu0 %v4071
    %4073 = vmatprep.subr.mxu0 0.0
    %v4074 = vand.u32 %v3889, 4294901760
    %v4075 = vsub.f32 %v3889, %v4074
    %v4076 = vand.u32 %v4075, 4294901760
    %v4077 = vsub.f32 %v4075, %v4076
    %v4078 = vand.u32 %v4077, 4294901760
    %4079 = vmatpush1.msra.mxu0 %v4078
    %4080 = vmatprep.subr.mxu0 0.0
    %v4081 = vand.u32 %v3888, 4294901760
    %v4082 = vsub.f32 %v3888, %v4081
    %v4083 = vand.u32 %v4082, 4294901760
    %v4084 = vsub.f32 %v4082, %v4083
    %v4085 = vand.u32 %v4084, 4294901760
    %4086 = vmatpush1.msra.mxu0 %v4085
    %4087 = vmatprep.subr.mxu0 0.0
    %v4088 = vand.u32 %v3887, 4294901760
    %v4089 = vsub.f32 %v3887, %v4088
    %v4090 = vand.u32 %v4089, 4294901760
    %v4091 = vsub.f32 %v4089, %v4090
    %v4092 = vand.u32 %v4091, 4294901760
    %4093 = vmatpush1.msra.mxu0 %v4092
    %4094 = vmatprep.subr.mxu0 0.0
    %v4095 = vand.u32 %v3886, 4294901760
    %v4096 = vsub.f32 %v3886, %v4095
    %v4097 = vand.u32 %v4096, 4294901760
    %v4098 = vsub.f32 %v4096, %v4097
    %v4099 = vand.u32 %v4098, 4294901760
    %4100 = vmatpush1.msra.mxu0 %v4099
    %4101 = vmatprep.subr.mxu0 0.0
    %v4102 = vand.u32 %v3885, 4294901760
    %v4103 = vsub.f32 %v3885, %v4102
    %v4104 = vand.u32 %v4103, 4294901760
    %v4105 = vsub.f32 %v4103, %v4104
    %v4106 = vand.u32 %v4105, 4294901760
    %4107 = vmatpush1.msra.mxu0 %v4106
    %4108 = vmatprep.subr.mxu0 0.0
    %v4109 = vand.u32 %v3884, 4294901760
    %v4110 = vsub.f32 %v3884, %v4109
    %v4111 = vand.u32 %v4110, 4294901760
    %v4112 = vsub.f32 %v4110, %v4111
    %v4113 = vand.u32 %v4112, 4294901760
    %4114 = vmatpush1.msra.mxu0 %v4113
    %4115 = vmatprep.subr.mxu0 0.0
    %v4116 = vand.u32 %v3883, 4294901760
    %v4117 = vsub.f32 %v3883, %v4116
    %v4118 = vand.u32 %v4117, 4294901760
    %v4119 = vsub.f32 %v4117, %v4118
    %v4120 = vand.u32 %v4119, 4294901760
    %4121 = vmatpush1.msra.mxu0 %v4120
    %4122 = vmatprep.subr.mxu0 0.0
    %v4123 = vand.u32 %v3882, 4294901760
    %v4124 = vsub.f32 %v3882, %v4123
    %v4125 = vand.u32 %v4124, 4294901760
    %v4126 = vsub.f32 %v4124, %v4125
    %v4127 = vand.u32 %v4126, 4294901760
    %4128 = vmatpush1.msra.mxu0 %v4127
    %4129 = vmatprep.subr.mxu0 0.0
    %v4130 = vand.u32 %v3881, 4294901760
    %v4131 = vsub.f32 %v3881, %v4130
    %v4132 = vand.u32 %v4131, 4294901760
    %v4133 = vsub.f32 %v4131, %v4132
    %v4134 = vand.u32 %v4133, 4294901760
    %4135 = vmatpush1.msra.mxu0 %v4134
    %4136 = vmatprep.subr.mxu0 0.0
    %v4137 = vand.u32 %v3880, 4294901760
    %v4138 = vsub.f32 %v3880, %v4137
    %v4139 = vand.u32 %v4138, 4294901760
    %v4140 = vsub.f32 %v4138, %v4139
    %v4141 = vand.u32 %v4140, 4294901760
    %4142 = vmatpush1.msra.mxu0 %v4141
    %4143 = vmatprep.subr.mxu0 0.0
    %v4144 = vand.u32 %v3879, 4294901760
    %v4145 = vsub.f32 %v3879, %v4144
    %v4146 = vand.u32 %v4145, 4294901760
    %v4147 = vsub.f32 %v4145, %v4146
    %v4148 = vand.u32 %v4147, 4294901760
    %4149 = vmatpush1.msra.mxu0 %v4148
    %4150 = vmatprep.subr.mxu0 0.0
    %v4151 = vand.u32 %v3878, 4294901760
    %v4152 = vsub.f32 %v3878, %v4151
    %v4153 = vand.u32 %v4152, 4294901760
    %v4154 = vsub.f32 %v4152, %v4153
    %v4155 = vand.u32 %v4154, 4294901760
    %4156 = vmatpush1.msra.mxu0 %v4155
    %4157 = vmatprep.subr.mxu0 0.0
    %v4158 = vand.u32 %v3877, 4294901760
    %v4159 = vsub.f32 %v3877, %v4158
    %v4160 = vand.u32 %v4159, 4294901760
    %v4161 = vsub.f32 %v4159, %v4160
    %v4162 = vand.u32 %v4161, 4294901760
    %4163 = vmatpush1.msra.mxu0 %v4162
    %4164 = vmatprep.subr.mxu0 0.0
    %v4165 = vand.u32 %v3876, 4294901760
    %v4166 = vsub.f32 %v3876, %v4165
    %v4167 = vand.u32 %v4166, 4294901760
    %v4168 = vsub.f32 %v4166, %v4167
    %v4169 = vand.u32 %v4168, 4294901760
    %4170 = vmatpush1.msra.mxu0 %v4169
    %4171 = vmatprep.subr.mxu0 0.0
    %v4172 = vand.u32 %v3875, 4294901760
    %v4173 = vsub.f32 %v3875, %v4172
    %v4174 = vand.u32 %v4173, 4294901760
    %v4175 = vsub.f32 %v4173, %v4174
    %v4176 = vand.u32 %v4175, 4294901760
    %4177 = vmatpush1.msra.mxu0 %v4176
    %4178 = vmatprep.subr.mxu0 0.0
    %v4179 = vand.u32 %v3906, 4294901760
    %v4180 = vsub.f32 %v3906, %v4179
    %v4181 = vand.u32 %v4180, 4294901760
    %v4182 = vsub.f32 %v4180, %v4181
    %v4183 = vand.u32 %v4182, 4294901760
    %4184 = vmatpush2.msra.mxu0 %v4183
    %4185 = vmatprep.subr.mxu0 0.0
    %v4186 = vand.u32 %v3905, 4294901760
    %v4187 = vsub.f32 %v3905, %v4186
    %v4188 = vand.u32 %v4187, 4294901760
    %v4189 = vsub.f32 %v4187, %v4188
    %v4190 = vand.u32 %v4189, 4294901760
    %4191 = vmatpush2.msra.mxu0 %v4190
    %4192 = vmatprep.subr.mxu0 0.0
    %v4193 = vand.u32 %v3904, 4294901760
    %v4194 = vsub.f32 %v3904, %v4193
    %v4195 = vand.u32 %v4194, 4294901760
    %v4196 = vsub.f32 %v4194, %v4195
    %v4197 = vand.u32 %v4196, 4294901760
    %4198 = vmatpush2.msra.mxu0 %v4197
    %4199 = vmatprep.subr.mxu0 0.0
    %v4200 = vand.u32 %v3903, 4294901760
    %v4201 = vsub.f32 %v3903, %v4200
    %v4202 = vand.u32 %v4201, 4294901760
    %v4203 = vsub.f32 %v4201, %v4202
    %v4204 = vand.u32 %v4203, 4294901760
    %4205 = vmatpush2.msra.mxu0 %v4204
    %4206 = vmatprep.subr.mxu0 0.0
    %v4207 = vand.u32 %v3902, 4294901760
    %v4208 = vsub.f32 %v3902, %v4207
    %v4209 = vand.u32 %v4208, 4294901760
    %v4210 = vsub.f32 %v4208, %v4209
    %v4211 = vand.u32 %v4210, 4294901760
    %4212 = vmatpush2.msra.mxu0 %v4211
    %4213 = vmatprep.subr.mxu0 0.0
    %v4214 = vand.u32 %v3901, 4294901760
    %v4215 = vsub.f32 %v3901, %v4214
    %v4216 = vand.u32 %v4215, 4294901760
    %v4217 = vsub.f32 %v4215, %v4216
    %v4218 = vand.u32 %v4217, 4294901760
    %4219 = vmatpush2.msra.mxu0 %v4218
    %4220 = vmatprep.subr.mxu0 0.0
    %v4221 = vand.u32 %v3900, 4294901760
    %v4222 = vsub.f32 %v3900, %v4221
    %v4223 = vand.u32 %v4222, 4294901760
    %v4224 = vsub.f32 %v4222, %v4223
    %v4225 = vand.u32 %v4224, 4294901760
    %4226 = vmatpush2.msra.mxu0 %v4225
    %4227 = vmatprep.subr.mxu0 0.0
    %v4228 = vand.u32 %v3899, 4294901760
    %v4229 = vsub.f32 %v3899, %v4228
    %v4230 = vand.u32 %v4229, 4294901760
    %v4231 = vsub.f32 %v4229, %v4230
    %v4232 = vand.u32 %v4231, 4294901760
    %4233 = vmatpush2.msra.mxu0 %v4232
    %4234 = vmatprep.subr.mxu0 0.0
    %v4235 = vand.u32 %v3898, 4294901760
    %v4236 = vsub.f32 %v3898, %v4235
    %v4237 = vand.u32 %v4236, 4294901760
    %v4238 = vsub.f32 %v4236, %v4237
    %v4239 = vand.u32 %v4238, 4294901760
    %4240 = vmatpush2.msra.mxu0 %v4239
    %4241 = vmatprep.subr.mxu0 0.0
    %v4242 = vand.u32 %v3897, 4294901760
    %v4243 = vsub.f32 %v3897, %v4242
    %v4244 = vand.u32 %v4243, 4294901760
    %v4245 = vsub.f32 %v4243, %v4244
    %v4246 = vand.u32 %v4245, 4294901760
    %4247 = vmatpush2.msra.mxu0 %v4246
    %4248 = vmatprep.subr.mxu0 0.0
    %v4249 = vand.u32 %v3896, 4294901760
    %v4250 = vsub.f32 %v3896, %v4249
    %v4251 = vand.u32 %v4250, 4294901760
    %v4252 = vsub.f32 %v4250, %v4251
    %v4253 = vand.u32 %v4252, 4294901760
    %4254 = vmatpush2.msra.mxu0 %v4253
    %4255 = vmatprep.subr.mxu0 0.0
    %v4256 = vand.u32 %v3895, 4294901760
    %v4257 = vsub.f32 %v3895, %v4256
    %v4258 = vand.u32 %v4257, 4294901760
    %v4259 = vsub.f32 %v4257, %v4258
    %v4260 = vand.u32 %v4259, 4294901760
    %4261 = vmatpush2.msra.mxu0 %v4260
    %4262 = vmatprep.subr.mxu0 0.0
    %v4263 = vand.u32 %v3894, 4294901760
    %v4264 = vsub.f32 %v3894, %v4263
    %v4265 = vand.u32 %v4264, 4294901760
    %v4266 = vsub.f32 %v4264, %v4265
    %v4267 = vand.u32 %v4266, 4294901760
    %4268 = vmatpush2.msra.mxu0 %v4267
    %4269 = vmatprep.subr.mxu0 0.0
    %v4270 = vand.u32 %v3893, 4294901760
    %v4271 = vsub.f32 %v3893, %v4270
    %v4272 = vand.u32 %v4271, 4294901760
    %v4273 = vsub.f32 %v4271, %v4272
    %v4274 = vand.u32 %v4273, 4294901760
    %4275 = vmatpush2.msra.mxu0 %v4274
    %4276 = vmatprep.subr.mxu0 0.0
    %v4277 = vand.u32 %v3892, 4294901760
    %v4278 = vsub.f32 %v3892, %v4277
    %v4279 = vand.u32 %v4278, 4294901760
    %v4280 = vsub.f32 %v4278, %v4279
    %v4281 = vand.u32 %v4280, 4294901760
    %4282 = vmatpush2.msra.mxu0 %v4281
    %4283 = vmatprep.subr.mxu0 0.0
    %v4284 = vand.u32 %v3891, 4294901760
    %v4285 = vsub.f32 %v3891, %v4284
    %v4286 = vand.u32 %v4285, 4294901760
    %v4287 = vsub.f32 %v4285, %v4286
    %v4288 = vand.u32 %v4287, 4294901760
    %4289 = vmatpush2.msra.mxu0 %v4288
    %v4290 = vand.u32 %v3866, 4294901760
    %4291 = vmatprep.mubr.f32.mxu0 %v4290
    %v4292 = vand.u32 %v3865, 4294901760
    %4293 = vmatmul.mubr.f32.gmra.mxu0 %v4292
    %v4294 = vpop.f32.mrf.mxu0
    %v4295 = vadd.f32 %v4048, %v4294
    %v4296 = vpop.f32.mrf.mxu0
    %v4297 = vand.u32 %v3870, 4294901760
    %4298 = vmatprep.mubr.f32.mxu0 %v4297
    %v4299 = vand.u32 %v3869, 4294901760
    %4300 = vmatmul.mubr.f32.gmra.mxu0 %v4299
    %v4301 = vpop.f32.mrf.mxu0
    %v4302 = vadd.f32 %v4063, %v4301
    %v4303 = vpop.f32.mrf.mxu0
    %4304 = vdwg.mxu0
    %4305 = vmatprep.subr.mxu0 0.0
    %v4306 = vand.u32 %v3890, 4294901760
    %v4307 = vsub.f32 %v3890, %v4306
    %4308 = vmatpush1.msra.mxu0 %v4307
    %4309 = vmatprep.subr.mxu0 0.0
    %v4310 = vand.u32 %v3889, 4294901760
    %v4311 = vsub.f32 %v3889, %v4310
    %4312 = vmatpush1.msra.mxu0 %v4311
    %4313 = vmatprep.subr.mxu0 0.0
    %v4314 = vand.u32 %v3888, 4294901760
    %v4315 = vsub.f32 %v3888, %v4314
    %4316 = vmatpush1.msra.mxu0 %v4315
    %4317 = vmatprep.subr.mxu0 0.0
    %v4318 = vand.u32 %v3887, 4294901760
    %v4319 = vsub.f32 %v3887, %v4318
    %4320 = vmatpush1.msra.mxu0 %v4319
    %4321 = vmatprep.subr.mxu0 0.0
    %v4322 = vand.u32 %v3886, 4294901760
    %v4323 = vsub.f32 %v3886, %v4322
    %4324 = vmatpush1.msra.mxu0 %v4323
    %4325 = vmatprep.subr.mxu0 0.0
    %v4326 = vand.u32 %v3885, 4294901760
    %v4327 = vsub.f32 %v3885, %v4326
    %4328 = vmatpush1.msra.mxu0 %v4327
    %4329 = vmatprep.subr.mxu0 0.0
    %v4330 = vand.u32 %v3884, 4294901760
    %v4331 = vsub.f32 %v3884, %v4330
    %4332 = vmatpush1.msra.mxu0 %v4331
    %4333 = vmatprep.subr.mxu0 0.0
    %v4334 = vand.u32 %v3883, 4294901760
    %v4335 = vsub.f32 %v3883, %v4334
    %4336 = vmatpush1.msra.mxu0 %v4335
    %4337 = vmatprep.subr.mxu0 0.0
    %v4338 = vand.u32 %v3882, 4294901760
    %v4339 = vsub.f32 %v3882, %v4338
    %4340 = vmatpush1.msra.mxu0 %v4339
    %4341 = vmatprep.subr.mxu0 0.0
    %v4342 = vand.u32 %v3881, 4294901760
    %v4343 = vsub.f32 %v3881, %v4342
    %4344 = vmatpush1.msra.mxu0 %v4343
    %4345 = vmatprep.subr.mxu0 0.0
    %v4346 = vand.u32 %v3880, 4294901760
    %v4347 = vsub.f32 %v3880, %v4346
    %4348 = vmatpush1.msra.mxu0 %v4347
    %4349 = vmatprep.subr.mxu0 0.0
    %v4350 = vand.u32 %v3879, 4294901760
    %v4351 = vsub.f32 %v3879, %v4350
    %4352 = vmatpush1.msra.mxu0 %v4351
    %4353 = vmatprep.subr.mxu0 0.0
    %v4354 = vand.u32 %v3878, 4294901760
    %v4355 = vsub.f32 %v3878, %v4354
    %4356 = vmatpush1.msra.mxu0 %v4355
    %4357 = vmatprep.subr.mxu0 0.0
    %v4358 = vand.u32 %v3877, 4294901760
    %v4359 = vsub.f32 %v3877, %v4358
    %4360 = vmatpush1.msra.mxu0 %v4359
    %4361 = vmatprep.subr.mxu0 0.0
    %v4362 = vand.u32 %v3876, 4294901760
    %v4363 = vsub.f32 %v3876, %v4362
    %4364 = vmatpush1.msra.mxu0 %v4363
    %4365 = vmatprep.subr.mxu0 0.0
    %v4366 = vand.u32 %v3875, 4294901760
    %v4367 = vsub.f32 %v3875, %v4366
    %4368 = vmatpush1.msra.mxu0 %v4367
    %4369 = vmatprep.subr.mxu0 0.0
    %v4370 = vand.u32 %v3906, 4294901760
    %v4371 = vsub.f32 %v3906, %v4370
    %4372 = vmatpush2.msra.mxu0 %v4371
    %4373 = vmatprep.subr.mxu0 0.0
    %v4374 = vand.u32 %v3905, 4294901760
    %v4375 = vsub.f32 %v3905, %v4374
    %4376 = vmatpush2.msra.mxu0 %v4375
    %4377 = vmatprep.subr.mxu0 0.0
    %v4378 = vand.u32 %v3904, 4294901760
    %v4379 = vsub.f32 %v3904, %v4378
    %4380 = vmatpush2.msra.mxu0 %v4379
    %4381 = vmatprep.subr.mxu0 0.0
    %v4382 = vand.u32 %v3903, 4294901760
    %v4383 = vsub.f32 %v3903, %v4382
    %4384 = vmatpush2.msra.mxu0 %v4383
    %4385 = vmatprep.subr.mxu0 0.0
    %v4386 = vand.u32 %v3902, 4294901760
    %v4387 = vsub.f32 %v3902, %v4386
    %4388 = vmatpush2.msra.mxu0 %v4387
    %4389 = vmatprep.subr.mxu0 0.0
    %v4390 = vand.u32 %v3901, 4294901760
    %v4391 = vsub.f32 %v3901, %v4390
    %4392 = vmatpush2.msra.mxu0 %v4391
    %4393 = vmatprep.subr.mxu0 0.0
    %v4394 = vand.u32 %v3900, 4294901760
    %v4395 = vsub.f32 %v3900, %v4394
    %4396 = vmatpush2.msra.mxu0 %v4395
    %4397 = vmatprep.subr.mxu0 0.0
    %v4398 = vand.u32 %v3899, 4294901760
    %v4399 = vsub.f32 %v3899, %v4398
    %4400 = vmatpush2.msra.mxu0 %v4399
    %4401 = vmatprep.subr.mxu0 0.0
    %v4402 = vand.u32 %v3898, 4294901760
    %v4403 = vsub.f32 %v3898, %v4402
    %4404 = vmatpush2.msra.mxu0 %v4403
    %4405 = vmatprep.subr.mxu0 0.0
    %v4406 = vand.u32 %v3897, 4294901760
    %v4407 = vsub.f32 %v3897, %v4406
    %4408 = vmatpush2.msra.mxu0 %v4407
    %4409 = vmatprep.subr.mxu0 0.0
    %v4410 = vand.u32 %v3896, 4294901760
    %v4411 = vsub.f32 %v3896, %v4410
    %4412 = vmatpush2.msra.mxu0 %v4411
    %4413 = vmatprep.subr.mxu0 0.0
    %v4414 = vand.u32 %v3895, 4294901760
    %v4415 = vsub.f32 %v3895, %v4414
    %4416 = vmatpush2.msra.mxu0 %v4415
    %4417 = vmatprep.subr.mxu0 0.0
    %v4418 = vand.u32 %v3894, 4294901760
    %v4419 = vsub.f32 %v3894, %v4418
    %4420 = vmatpush2.msra.mxu0 %v4419
    %4421 = vmatprep.subr.mxu0 0.0
    %v4422 = vand.u32 %v3893, 4294901760
    %v4423 = vsub.f32 %v3893, %v4422
    %4424 = vmatpush2.msra.mxu0 %v4423
    %4425 = vmatprep.subr.mxu0 0.0
    %v4426 = vand.u32 %v3892, 4294901760
    %v4427 = vsub.f32 %v3892, %v4426
    %4428 = vmatpush2.msra.mxu0 %v4427
    %4429 = vmatprep.subr.mxu0 0.0
    %v4430 = vand.u32 %v3891, 4294901760
    %v4431 = vsub.f32 %v3891, %v4430
    %4432 = vmatpush2.msra.mxu0 %v4431
    %v4433 = vand.u32 %v3866, 4294901760
    %v4434 = vsub.f32 %v3866, %v4433
    %4435 = vmatprep.mubr.f32.mxu0 %v4434
    %v4436 = vand.u32 %v3865, 4294901760
    %v4437 = vsub.f32 %v3865, %v4436
    %4438 = vmatmul.mubr.f32.gmra.mxu0 %v4437
    %v4439 = vpop.f32.mrf.mxu0
    %v4440 = vadd.f32 %v4295, %v4439
    %v4441 = vpop.f32.mrf.mxu0
    %v4442 = vand.u32 %v3870, 4294901760
    %v4443 = vsub.f32 %v3870, %v4442
    %4444 = vmatprep.mubr.f32.mxu0 %v4443
    %v4445 = vand.u32 %v3869, 4294901760
    %v4446 = vsub.f32 %v3869, %v4445
    %4447 = vmatmul.mubr.f32.gmra.mxu0 %v4446
    %v4448 = vpop.f32.mrf.mxu0
    %v4449 = vadd.f32 %v4302, %v4448
    %v4450 = vpop.f32.mrf.mxu0
    %4451 = vdwg.mxu0
    %4452 = vmatprep.subr.mxu0 0.0
    %v4453 = vand.u32 %v3890, 4294901760
    %4454 = vmatpush1.msra.mxu0 %v4453
    %4455 = vmatprep.subr.mxu0 0.0
    %v4456 = vand.u32 %v3889, 4294901760
    %4457 = vmatpush1.msra.mxu0 %v4456
    %4458 = vmatprep.subr.mxu0 0.0
    %v4459 = vand.u32 %v3888, 4294901760
    %4460 = vmatpush1.msra.mxu0 %v4459
    %4461 = vmatprep.subr.mxu0 0.0
    %v4462 = vand.u32 %v3887, 4294901760
    %4463 = vmatpush1.msra.mxu0 %v4462
    %4464 = vmatprep.subr.mxu0 0.0
    %v4465 = vand.u32 %v3886, 4294901760
    %4466 = vmatpush1.msra.mxu0 %v4465
    %4467 = vmatprep.subr.mxu0 0.0
    %v4468 = vand.u32 %v3885, 4294901760
    %4469 = vmatpush1.msra.mxu0 %v4468
    %4470 = vmatprep.subr.mxu0 0.0
    %v4471 = vand.u32 %v3884, 4294901760
    %4472 = vmatpush1.msra.mxu0 %v4471
    %4473 = vmatprep.subr.mxu0 0.0
    %v4474 = vand.u32 %v3883, 4294901760
    %4475 = vmatpush1.msra.mxu0 %v4474
    %4476 = vmatprep.subr.mxu0 0.0
    %v4477 = vand.u32 %v3882, 4294901760
    %4478 = vmatpush1.msra.mxu0 %v4477
    %4479 = vmatprep.subr.mxu0 0.0
    %v4480 = vand.u32 %v3881, 4294901760
    %4481 = vmatpush1.msra.mxu0 %v4480
    %4482 = vmatprep.subr.mxu0 0.0
    %v4483 = vand.u32 %v3880, 4294901760
    %4484 = vmatpush1.msra.mxu0 %v4483
    %4485 = vmatprep.subr.mxu0 0.0
    %v4486 = vand.u32 %v3879, 4294901760
    %4487 = vmatpush1.msra.mxu0 %v4486
    %4488 = vmatprep.subr.mxu0 0.0
    %v4489 = vand.u32 %v3878, 4294901760
    %4490 = vmatpush1.msra.mxu0 %v4489
    %4491 = vmatprep.subr.mxu0 0.0
    %v4492 = vand.u32 %v3877, 4294901760
    %4493 = vmatpush1.msra.mxu0 %v4492
    %4494 = vmatprep.subr.mxu0 0.0
    %v4495 = vand.u32 %v3876, 4294901760
    %4496 = vmatpush1.msra.mxu0 %v4495
    %4497 = vmatprep.subr.mxu0 0.0
    %v4498 = vand.u32 %v3875, 4294901760
    %4499 = vmatpush1.msra.mxu0 %v4498
    %4500 = vmatprep.subr.mxu0 0.0
    %v4501 = vand.u32 %v3906, 4294901760
    %4502 = vmatpush2.msra.mxu0 %v4501
    %4503 = vmatprep.subr.mxu0 0.0
    %v4504 = vand.u32 %v3905, 4294901760
    %4505 = vmatpush2.msra.mxu0 %v4504
    %4506 = vmatprep.subr.mxu0 0.0
    %v4507 = vand.u32 %v3904, 4294901760
    %4508 = vmatpush2.msra.mxu0 %v4507
    %4509 = vmatprep.subr.mxu0 0.0
    %v4510 = vand.u32 %v3903, 4294901760
    %4511 = vmatpush2.msra.mxu0 %v4510
    %4512 = vmatprep.subr.mxu0 0.0
    %v4513 = vand.u32 %v3902, 4294901760
    %4514 = vmatpush2.msra.mxu0 %v4513
    %4515 = vmatprep.subr.mxu0 0.0
    %v4516 = vand.u32 %v3901, 4294901760
    %4517 = vmatpush2.msra.mxu0 %v4516
    %4518 = vmatprep.subr.mxu0 0.0
    %v4519 = vand.u32 %v3900, 4294901760
    %4520 = vmatpush2.msra.mxu0 %v4519
    %4521 = vmatprep.subr.mxu0 0.0
    %v4522 = vand.u32 %v3899, 4294901760
    %4523 = vmatpush2.msra.mxu0 %v4522
    %4524 = vmatprep.subr.mxu0 0.0
    %v4525 = vand.u32 %v3898, 4294901760
    %4526 = vmatpush2.msra.mxu0 %v4525
    %4527 = vmatprep.subr.mxu0 0.0
    %v4528 = vand.u32 %v3897, 4294901760
    %4529 = vmatpush2.msra.mxu0 %v4528
    %4530 = vmatprep.subr.mxu0 0.0
    %v4531 = vand.u32 %v3896, 4294901760
    %4532 = vmatpush2.msra.mxu0 %v4531
    %4533 = vmatprep.subr.mxu0 0.0
    %v4534 = vand.u32 %v3895, 4294901760
    %4535 = vmatpush2.msra.mxu0 %v4534
    %4536 = vmatprep.subr.mxu0 0.0
    %v4537 = vand.u32 %v3894, 4294901760
    %4538 = vmatpush2.msra.mxu0 %v4537
    %4539 = vmatprep.subr.mxu0 0.0
    %v4540 = vand.u32 %v3893, 4294901760
    %4541 = vmatpush2.msra.mxu0 %v4540
    %4542 = vmatprep.subr.mxu0 0.0
    %v4543 = vand.u32 %v3892, 4294901760
    %4544 = vmatpush2.msra.mxu0 %v4543
    %4545 = vmatprep.subr.mxu0 0.0
    %v4546 = vand.u32 %v3891, 4294901760
    %4547 = vmatpush2.msra.mxu0 %v4546
    %v4548 = vand.u32 %v3866, 4294901760
    %v4549 = vsub.f32 %v3866, %v4548
    %v4550 = vand.u32 %v4549, 4294901760
    %4551 = vmatprep.mubr.f32.mxu0 %v4550
    %v4552 = vand.u32 %v3865, 4294901760
    %v4553 = vsub.f32 %v3865, %v4552
    %v4554 = vand.u32 %v4553, 4294901760
    %4555 = vmatmul.mubr.f32.gmra.mxu0 %v4554
    %v4556 = vpop.f32.mrf.mxu0
    %v4557 = vadd.f32 %v4440, %v4556
    %v4558 = vpop.f32.mrf.mxu0
    %v4559 = vand.u32 %v3870, 4294901760
    %v4560 = vsub.f32 %v3870, %v4559
    %v4561 = vand.u32 %v4560, 4294901760
    %4562 = vmatprep.mubr.f32.mxu0 %v4561
    %v4563 = vand.u32 %v3869, 4294901760
    %v4564 = vsub.f32 %v3869, %v4563
    %v4565 = vand.u32 %v4564, 4294901760
    %4566 = vmatmul.mubr.f32.gmra.mxu0 %v4565
    %v4567 = vpop.f32.mrf.mxu0
    %v4568 = vadd.f32 %v4449, %v4567
    %v4569 = vpop.f32.mrf.mxu0
    %4570 = vdwg.mxu0
    %4571 = vmatprep.subr.mxu0 0.0
    %v4572 = vand.u32 %v3890, 4294901760
    %v4573 = vsub.f32 %v3890, %v4572
    %v4574 = vand.u32 %v4573, 4294901760
    %4575 = vmatpush1.msra.mxu0 %v4574
    %4576 = vmatprep.subr.mxu0 0.0
    %v4577 = vand.u32 %v3889, 4294901760
    %v4578 = vsub.f32 %v3889, %v4577
    %v4579 = vand.u32 %v4578, 4294901760
    %4580 = vmatpush1.msra.mxu0 %v4579
    %4581 = vmatprep.subr.mxu0 0.0
    %v4582 = vand.u32 %v3888, 4294901760
    %v4583 = vsub.f32 %v3888, %v4582
    %v4584 = vand.u32 %v4583, 4294901760
    %4585 = vmatpush1.msra.mxu0 %v4584
    %4586 = vmatprep.subr.mxu0 0.0
    %v4587 = vand.u32 %v3887, 4294901760
    %v4588 = vsub.f32 %v3887, %v4587
    %v4589 = vand.u32 %v4588, 4294901760
    %4590 = vmatpush1.msra.mxu0 %v4589
    %4591 = vmatprep.subr.mxu0 0.0
    %v4592 = vand.u32 %v3886, 4294901760
    %v4593 = vsub.f32 %v3886, %v4592
    %v4594 = vand.u32 %v4593, 4294901760
    %4595 = vmatpush1.msra.mxu0 %v4594
    %4596 = vmatprep.subr.mxu0 0.0
    %v4597 = vand.u32 %v3885, 4294901760
    %v4598 = vsub.f32 %v3885, %v4597
    %v4599 = vand.u32 %v4598, 4294901760
    %4600 = vmatpush1.msra.mxu0 %v4599
    %4601 = vmatprep.subr.mxu0 0.0
    %v4602 = vand.u32 %v3884, 4294901760
    %v4603 = vsub.f32 %v3884, %v4602
    %v4604 = vand.u32 %v4603, 4294901760
    %4605 = vmatpush1.msra.mxu0 %v4604
    %4606 = vmatprep.subr.mxu0 0.0
    %v4607 = vand.u32 %v3883, 4294901760
    %v4608 = vsub.f32 %v3883, %v4607
    %v4609 = vand.u32 %v4608, 4294901760
    %4610 = vmatpush1.msra.mxu0 %v4609
    %4611 = vmatprep.subr.mxu0 0.0
    %v4612 = vand.u32 %v3882, 4294901760
    %v4613 = vsub.f32 %v3882, %v4612
    %v4614 = vand.u32 %v4613, 4294901760
    %4615 = vmatpush1.msra.mxu0 %v4614
    %4616 = vmatprep.subr.mxu0 0.0
    %v4617 = vand.u32 %v3881, 4294901760
    %v4618 = vsub.f32 %v3881, %v4617
    %v4619 = vand.u32 %v4618, 4294901760
    %4620 = vmatpush1.msra.mxu0 %v4619
    %4621 = vmatprep.subr.mxu0 0.0
    %v4622 = vand.u32 %v3880, 4294901760
    %v4623 = vsub.f32 %v3880, %v4622
    %v4624 = vand.u32 %v4623, 4294901760
    %4625 = vmatpush1.msra.mxu0 %v4624
    %4626 = vmatprep.subr.mxu0 0.0
    %v4627 = vand.u32 %v3879, 4294901760
    %v4628 = vsub.f32 %v3879, %v4627
    %v4629 = vand.u32 %v4628, 4294901760
    %4630 = vmatpush1.msra.mxu0 %v4629
    %4631 = vmatprep.subr.mxu0 0.0
    %v4632 = vand.u32 %v3878, 4294901760
    %v4633 = vsub.f32 %v3878, %v4632
    %v4634 = vand.u32 %v4633, 4294901760
    %4635 = vmatpush1.msra.mxu0 %v4634
    %4636 = vmatprep.subr.mxu0 0.0
    %v4637 = vand.u32 %v3877, 4294901760
    %v4638 = vsub.f32 %v3877, %v4637
    %v4639 = vand.u32 %v4638, 4294901760
    %4640 = vmatpush1.msra.mxu0 %v4639
    %4641 = vmatprep.subr.mxu0 0.0
    %v4642 = vand.u32 %v3876, 4294901760
    %v4643 = vsub.f32 %v3876, %v4642
    %v4644 = vand.u32 %v4643, 4294901760
    %4645 = vmatpush1.msra.mxu0 %v4644
    %4646 = vmatprep.subr.mxu0 0.0
    %v4647 = vand.u32 %v3875, 4294901760
    %v4648 = vsub.f32 %v3875, %v4647
    %v4649 = vand.u32 %v4648, 4294901760
    %4650 = vmatpush1.msra.mxu0 %v4649
    %4651 = vmatprep.subr.mxu0 0.0
    %v4652 = vand.u32 %v3906, 4294901760
    %v4653 = vsub.f32 %v3906, %v4652
    %v4654 = vand.u32 %v4653, 4294901760
    %4655 = vmatpush2.msra.mxu0 %v4654
    %4656 = vmatprep.subr.mxu0 0.0
    %v4657 = vand.u32 %v3905, 4294901760
    %v4658 = vsub.f32 %v3905, %v4657
    %v4659 = vand.u32 %v4658, 4294901760
    %4660 = vmatpush2.msra.mxu0 %v4659
    %4661 = vmatprep.subr.mxu0 0.0
    %v4662 = vand.u32 %v3904, 4294901760
    %v4663 = vsub.f32 %v3904, %v4662
    %v4664 = vand.u32 %v4663, 4294901760
    %4665 = vmatpush2.msra.mxu0 %v4664
    %4666 = vmatprep.subr.mxu0 0.0
    %v4667 = vand.u32 %v3903, 4294901760
    %v4668 = vsub.f32 %v3903, %v4667
    %v4669 = vand.u32 %v4668, 4294901760
    %4670 = vmatpush2.msra.mxu0 %v4669
    %4671 = vmatprep.subr.mxu0 0.0
    %v4672 = vand.u32 %v3902, 4294901760
    %v4673 = vsub.f32 %v3902, %v4672
    %v4674 = vand.u32 %v4673, 4294901760
    %4675 = vmatpush2.msra.mxu0 %v4674
    %4676 = vmatprep.subr.mxu0 0.0
    %v4677 = vand.u32 %v3901, 4294901760
    %v4678 = vsub.f32 %v3901, %v4677
    %v4679 = vand.u32 %v4678, 4294901760
    %4680 = vmatpush2.msra.mxu0 %v4679
    %4681 = vmatprep.subr.mxu0 0.0
    %v4682 = vand.u32 %v3900, 4294901760
    %v4683 = vsub.f32 %v3900, %v4682
    %v4684 = vand.u32 %v4683, 4294901760
    %4685 = vmatpush2.msra.mxu0 %v4684
    %4686 = vmatprep.subr.mxu0 0.0
    %v4687 = vand.u32 %v3899, 4294901760
    %v4688 = vsub.f32 %v3899, %v4687
    %v4689 = vand.u32 %v4688, 4294901760
    %4690 = vmatpush2.msra.mxu0 %v4689
    %4691 = vmatprep.subr.mxu0 0.0
    %v4692 = vand.u32 %v3898, 4294901760
    %v4693 = vsub.f32 %v3898, %v4692
    %v4694 = vand.u32 %v4693, 4294901760
    %4695 = vmatpush2.msra.mxu0 %v4694
    %4696 = vmatprep.subr.mxu0 0.0
    %v4697 = vand.u32 %v3897, 4294901760
    %v4698 = vsub.f32 %v3897, %v4697
    %v4699 = vand.u32 %v4698, 4294901760
    %4700 = vmatpush2.msra.mxu0 %v4699
    %4701 = vmatprep.subr.mxu0 0.0
    %v4702 = vand.u32 %v3896, 4294901760
    %v4703 = vsub.f32 %v3896, %v4702
    %v4704 = vand.u32 %v4703, 4294901760
    %4705 = vmatpush2.msra.mxu0 %v4704
    %4706 = vmatprep.subr.mxu0 0.0
    %v4707 = vand.u32 %v3895, 4294901760
    %v4708 = vsub.f32 %v3895, %v4707
    %v4709 = vand.u32 %v4708, 4294901760
    %4710 = vmatpush2.msra.mxu0 %v4709
    %4711 = vmatprep.subr.mxu0 0.0
    %v4712 = vand.u32 %v3894, 4294901760
    %v4713 = vsub.f32 %v3894, %v4712
    %v4714 = vand.u32 %v4713, 4294901760
    %4715 = vmatpush2.msra.mxu0 %v4714
    %4716 = vmatprep.subr.mxu0 0.0
    %v4717 = vand.u32 %v3893, 4294901760
    %v4718 = vsub.f32 %v3893, %v4717
    %v4719 = vand.u32 %v4718, 4294901760
    %4720 = vmatpush2.msra.mxu0 %v4719
    %4721 = vmatprep.subr.mxu0 0.0
    %v4722 = vand.u32 %v3892, 4294901760
    %v4723 = vsub.f32 %v3892, %v4722
    %v4724 = vand.u32 %v4723, 4294901760
    %4725 = vmatpush2.msra.mxu0 %v4724
    %4726 = vmatprep.subr.mxu0 0.0
    %v4727 = vand.u32 %v3891, 4294901760
    %v4728 = vsub.f32 %v3891, %v4727
    %v4729 = vand.u32 %v4728, 4294901760
    %4730 = vmatpush2.msra.mxu0 %v4729
    %v4731 = vand.u32 %v3866, 4294901760
    %4732 = vmatprep.mubr.f32.mxu0 %v4731
    %v4733 = vand.u32 %v3865, 4294901760
    %4734 = vmatmul.mubr.f32.gmra.mxu0 %v4733
    %v4735 = vpop.f32.mrf.mxu0
    %v4736 = vadd.f32 %v4557, %v4735
    %v4737 = vpop.f32.mrf.mxu0
    %v4738 = vand.u32 %v3870, 4294901760
    %4739 = vmatprep.mubr.f32.mxu0 %v4738
    %v4740 = vand.u32 %v3869, 4294901760
    %4741 = vmatmul.mubr.f32.gmra.mxu0 %v4740
    %v4742 = vpop.f32.mrf.mxu0
    %v4743 = vadd.f32 %v4568, %v4742
    %v4744 = vpop.f32.mrf.mxu0
    %4745 = vdwg.mxu0
    %4746 = vmatprep.subr.mxu0 0.0
    %v4747 = vand.u32 %v3890, 4294901760
    %4748 = vmatpush1.msra.mxu0 %v4747
    %4749 = vmatprep.subr.mxu0 0.0
    %v4750 = vand.u32 %v3889, 4294901760
    %4751 = vmatpush1.msra.mxu0 %v4750
    %4752 = vmatprep.subr.mxu0 0.0
    %v4753 = vand.u32 %v3888, 4294901760
    %4754 = vmatpush1.msra.mxu0 %v4753
    %4755 = vmatprep.subr.mxu0 0.0
    %v4756 = vand.u32 %v3887, 4294901760
    %4757 = vmatpush1.msra.mxu0 %v4756
    %4758 = vmatprep.subr.mxu0 0.0
    %v4759 = vand.u32 %v3886, 4294901760
    %4760 = vmatpush1.msra.mxu0 %v4759
    %4761 = vmatprep.subr.mxu0 0.0
    %v4762 = vand.u32 %v3885, 4294901760
    %4763 = vmatpush1.msra.mxu0 %v4762
    %4764 = vmatprep.subr.mxu0 0.0
    %v4765 = vand.u32 %v3884, 4294901760
    %4766 = vmatpush1.msra.mxu0 %v4765
    %4767 = vmatprep.subr.mxu0 0.0
    %v4768 = vand.u32 %v3883, 4294901760
    %4769 = vmatpush1.msra.mxu0 %v4768
    %4770 = vmatprep.subr.mxu0 0.0
    %v4771 = vand.u32 %v3882, 4294901760
    %4772 = vmatpush1.msra.mxu0 %v4771
    %4773 = vmatprep.subr.mxu0 0.0
    %v4774 = vand.u32 %v3881, 4294901760
    %4775 = vmatpush1.msra.mxu0 %v4774
    %4776 = vmatprep.subr.mxu0 0.0
    %v4777 = vand.u32 %v3880, 4294901760
    %4778 = vmatpush1.msra.mxu0 %v4777
    %4779 = vmatprep.subr.mxu0 0.0
    %v4780 = vand.u32 %v3879, 4294901760
    %4781 = vmatpush1.msra.mxu0 %v4780
    %4782 = vmatprep.subr.mxu0 0.0
    %v4783 = vand.u32 %v3878, 4294901760
    %4784 = vmatpush1.msra.mxu0 %v4783
    %4785 = vmatprep.subr.mxu0 0.0
    %v4786 = vand.u32 %v3877, 4294901760
    %4787 = vmatpush1.msra.mxu0 %v4786
    %4788 = vmatprep.subr.mxu0 0.0
    %v4789 = vand.u32 %v3876, 4294901760
    %4790 = vmatpush1.msra.mxu0 %v4789
    %4791 = vmatprep.subr.mxu0 0.0
    %v4792 = vand.u32 %v3875, 4294901760
    %4793 = vmatpush1.msra.mxu0 %v4792
    %4794 = vmatprep.subr.mxu0 0.0
    %v4795 = vand.u32 %v3906, 4294901760
    %4796 = vmatpush2.msra.mxu0 %v4795
    %4797 = vmatprep.subr.mxu0 0.0
    %v4798 = vand.u32 %v3905, 4294901760
    %4799 = vmatpush2.msra.mxu0 %v4798
    %4800 = vmatprep.subr.mxu0 0.0
    %v4801 = vand.u32 %v3904, 4294901760
    %4802 = vmatpush2.msra.mxu0 %v4801
    %4803 = vmatprep.subr.mxu0 0.0
    %v4804 = vand.u32 %v3903, 4294901760
    %4805 = vmatpush2.msra.mxu0 %v4804
    %4806 = vmatprep.subr.mxu0 0.0
    %v4807 = vand.u32 %v3902, 4294901760
    %4808 = vmatpush2.msra.mxu0 %v4807
    %4809 = vmatprep.subr.mxu0 0.0
    %v4810 = vand.u32 %v3901, 4294901760
    %4811 = vmatpush2.msra.mxu0 %v4810
    %4812 = vmatprep.subr.mxu0 0.0
    %v4813 = vand.u32 %v3900, 4294901760
    %4814 = vmatpush2.msra.mxu0 %v4813
    %4815 = vmatprep.subr.mxu0 0.0
    %v4816 = vand.u32 %v3899, 4294901760
    %4817 = vmatpush2.msra.mxu0 %v4816
    %4818 = vmatprep.subr.mxu0 0.0
    %v4819 = vand.u32 %v3898, 4294901760
    %4820 = vmatpush2.msra.mxu0 %v4819
    %4821 = vmatprep.subr.mxu0 0.0
    %v4822 = vand.u32 %v3897, 4294901760
    %4823 = vmatpush2.msra.mxu0 %v4822
    %4824 = vmatprep.subr.mxu0 0.0
    %v4825 = vand.u32 %v3896, 4294901760
    %4826 = vmatpush2.msra.mxu0 %v4825
    %4827 = vmatprep.subr.mxu0 0.0
    %v4828 = vand.u32 %v3895, 4294901760
    %4829 = vmatpush2.msra.mxu0 %v4828
    %4830 = vmatprep.subr.mxu0 0.0
    %v4831 = vand.u32 %v3894, 4294901760
    %4832 = vmatpush2.msra.mxu0 %v4831
    %4833 = vmatprep.subr.mxu0 0.0
    %v4834 = vand.u32 %v3893, 4294901760
    %4835 = vmatpush2.msra.mxu0 %v4834
    %4836 = vmatprep.subr.mxu0 0.0
    %v4837 = vand.u32 %v3892, 4294901760
    %4838 = vmatpush2.msra.mxu0 %v4837
    %4839 = vmatprep.subr.mxu0 0.0
    %v4840 = vand.u32 %v3891, 4294901760
    %4841 = vmatpush2.msra.mxu0 %v4840
    %v4842 = vand.u32 %v3866, 4294901760
    %4843 = vmatprep.mubr.f32.mxu0 %v4842
    %v4844 = vand.u32 %v3865, 4294901760
    %4845 = vmatmul.mubr.f32.gmra.mxu0 %v4844
    %v4846 = vpop.f32.mrf.mxu0
    %v4847 = vadd.f32 %v4736, %v4846
    %v4848 = vpop.f32.mrf.mxu0
    %v4849 = vand.u32 %v3870, 4294901760
    %4850 = vmatprep.mubr.f32.mxu0 %v4849
    %v4851 = vand.u32 %v3869, 4294901760
    %4852 = vmatmul.mubr.f32.gmra.mxu0 %v4851
    %v4853 = vpop.f32.mrf.mxu0
    %v4854 = vadd.f32 %v4743, %v4853
    %v4855 = vpop.f32.mrf.mxu0
    %4856 = vdwg.mxu0
    %4857 = vmatprep.subr.mxu0 0.0
    %v4858 = vand.u32 %v3922, 4294901760
    %4859 = vmatpush1.msra.mxu0 %v4858
    %4860 = vmatprep.subr.mxu0 0.0
    %v4861 = vand.u32 %v3921, 4294901760
    %4862 = vmatpush1.msra.mxu0 %v4861
    %4863 = vmatprep.subr.mxu0 0.0
    %v4864 = vand.u32 %v3920, 4294901760
    %4865 = vmatpush1.msra.mxu0 %v4864
    %4866 = vmatprep.subr.mxu0 0.0
    %v4867 = vand.u32 %v3919, 4294901760
    %4868 = vmatpush1.msra.mxu0 %v4867
    %4869 = vmatprep.subr.mxu0 0.0
    %v4870 = vand.u32 %v3918, 4294901760
    %4871 = vmatpush1.msra.mxu0 %v4870
    %4872 = vmatprep.subr.mxu0 0.0
    %v4873 = vand.u32 %v3917, 4294901760
    %4874 = vmatpush1.msra.mxu0 %v4873
    %4875 = vmatprep.subr.mxu0 0.0
    %v4876 = vand.u32 %v3916, 4294901760
    %4877 = vmatpush1.msra.mxu0 %v4876
    %4878 = vmatprep.subr.mxu0 0.0
    %v4879 = vand.u32 %v3915, 4294901760
    %4880 = vmatpush1.msra.mxu0 %v4879
    %4881 = vmatprep.subr.mxu0 0.0
    %v4882 = vand.u32 %v3914, 4294901760
    %4883 = vmatpush1.msra.mxu0 %v4882
    %4884 = vmatprep.subr.mxu0 0.0
    %v4885 = vand.u32 %v3913, 4294901760
    %4886 = vmatpush1.msra.mxu0 %v4885
    %4887 = vmatprep.subr.mxu0 0.0
    %v4888 = vand.u32 %v3912, 4294901760
    %4889 = vmatpush1.msra.mxu0 %v4888
    %4890 = vmatprep.subr.mxu0 0.0
    %v4891 = vand.u32 %v3911, 4294901760
    %4892 = vmatpush1.msra.mxu0 %v4891
    %4893 = vmatprep.subr.mxu0 0.0
    %v4894 = vand.u32 %v3910, 4294901760
    %4895 = vmatpush1.msra.mxu0 %v4894
    %4896 = vmatprep.subr.mxu0 0.0
    %v4897 = vand.u32 %v3909, 4294901760
    %4898 = vmatpush1.msra.mxu0 %v4897
    %4899 = vmatprep.subr.mxu0 0.0
    %v4900 = vand.u32 %v3908, 4294901760
    %4901 = vmatpush1.msra.mxu0 %v4900
    %4902 = vmatprep.subr.mxu0 0.0
    %v4903 = vand.u32 %v3907, 4294901760
    %4904 = vmatpush1.msra.mxu0 %v4903
    %4905 = vmatprep.subr.mxu0 0.0
    %v4906 = vand.u32 %v3938, 4294901760
    %4907 = vmatpush2.msra.mxu0 %v4906
    %4908 = vmatprep.subr.mxu0 0.0
    %v4909 = vand.u32 %v3937, 4294901760
    %4910 = vmatpush2.msra.mxu0 %v4909
    %4911 = vmatprep.subr.mxu0 0.0
    %v4912 = vand.u32 %v3936, 4294901760
    %4913 = vmatpush2.msra.mxu0 %v4912
    %4914 = vmatprep.subr.mxu0 0.0
    %v4915 = vand.u32 %v3935, 4294901760
    %4916 = vmatpush2.msra.mxu0 %v4915
    %4917 = vmatprep.subr.mxu0 0.0
    %v4918 = vand.u32 %v3934, 4294901760
    %4919 = vmatpush2.msra.mxu0 %v4918
    %4920 = vmatprep.subr.mxu0 0.0
    %v4921 = vand.u32 %v3933, 4294901760
    %4922 = vmatpush2.msra.mxu0 %v4921
    %4923 = vmatprep.subr.mxu0 0.0
    %v4924 = vand.u32 %v3932, 4294901760
    %4925 = vmatpush2.msra.mxu0 %v4924
    %4926 = vmatprep.subr.mxu0 0.0
    %v4927 = vand.u32 %v3931, 4294901760
    %4928 = vmatpush2.msra.mxu0 %v4927
    %4929 = vmatprep.subr.mxu0 0.0
    %v4930 = vand.u32 %v3930, 4294901760
    %4931 = vmatpush2.msra.mxu0 %v4930
    %4932 = vmatprep.subr.mxu0 0.0
    %v4933 = vand.u32 %v3929, 4294901760
    %4934 = vmatpush2.msra.mxu0 %v4933
    %4935 = vmatprep.subr.mxu0 0.0
    %v4936 = vand.u32 %v3928, 4294901760
    %4937 = vmatpush2.msra.mxu0 %v4936
    %4938 = vmatprep.subr.mxu0 0.0
    %v4939 = vand.u32 %v3927, 4294901760
    %4940 = vmatpush2.msra.mxu0 %v4939
    %4941 = vmatprep.subr.mxu0 0.0
    %v4942 = vand.u32 %v3926, 4294901760
    %4943 = vmatpush2.msra.mxu0 %v4942
    %4944 = vmatprep.subr.mxu0 0.0
    %v4945 = vand.u32 %v3925, 4294901760
    %4946 = vmatpush2.msra.mxu0 %v4945
    %4947 = vmatprep.subr.mxu0 0.0
    %v4948 = vand.u32 %v3924, 4294901760
    %4949 = vmatpush2.msra.mxu0 %v4948
    %4950 = vmatprep.subr.mxu0 0.0
    %v4951 = vand.u32 %v3923, 4294901760
    %4952 = vmatpush2.msra.mxu0 %v4951
    %v4953 = vand.u32 %v3868, 4294901760
    %v4954 = vsub.f32 %v3868, %v4953
    %v4955 = vand.u32 %v4954, 4294901760
    %v4956 = vsub.f32 %v4954, %v4955
    %v4957 = vand.u32 %v4956, 4294901760
    %4958 = vmatprep.mubr.f32.mxu0 %v4957
    %v4959 = vand.u32 %v3867, 4294901760
    %v4960 = vsub.f32 %v3867, %v4959
    %v4961 = vand.u32 %v4960, 4294901760
    %v4962 = vsub.f32 %v4960, %v4961
    %v4963 = vand.u32 %v4962, 4294901760
    %4964 = vmatmul.mubr.f32.gmra.mxu0 %v4963
    %v4965 = vpop.f32.mrf.mxu0
    %v4966 = vadd.f32 %v4847, %v4965
    %v4967 = vpop.f32.mrf.mxu0
    %v4968 = vand.u32 %v3872, 4294901760
    %v4969 = vsub.f32 %v3872, %v4968
    %v4970 = vand.u32 %v4969, 4294901760
    %v4971 = vsub.f32 %v4969, %v4970
    %v4972 = vand.u32 %v4971, 4294901760
    %4973 = vmatprep.mubr.f32.mxu0 %v4972
    %v4974 = vand.u32 %v3871, 4294901760
    %v4975 = vsub.f32 %v3871, %v4974
    %v4976 = vand.u32 %v4975, 4294901760
    %v4977 = vsub.f32 %v4975, %v4976
    %v4978 = vand.u32 %v4977, 4294901760
    %4979 = vmatmul.mubr.f32.gmra.mxu0 %v4978
    %v4980 = vpop.f32.mrf.mxu0
    %v4981 = vadd.f32 %v4854, %v4980
    %v4982 = vpop.f32.mrf.mxu0
    %4983 = vdwg.mxu0
    %4984 = vmatprep.subr.mxu0 0.0
    %v4985 = vand.u32 %v3922, 4294901760
    %v4986 = vsub.f32 %v3922, %v4985
    %v4987 = vand.u32 %v4986, 4294901760
    %v4988 = vsub.f32 %v4986, %v4987
    %v4989 = vand.u32 %v4988, 4294901760
    %4990 = vmatpush1.msra.mxu0 %v4989
    %4991 = vmatprep.subr.mxu0 0.0
    %v4992 = vand.u32 %v3921, 4294901760
    %v4993 = vsub.f32 %v3921, %v4992
    %v4994 = vand.u32 %v4993, 4294901760
    %v4995 = vsub.f32 %v4993, %v4994
    %v4996 = vand.u32 %v4995, 4294901760
    %4997 = vmatpush1.msra.mxu0 %v4996
    %4998 = vmatprep.subr.mxu0 0.0
    %v4999 = vand.u32 %v3920, 4294901760
    %v5000 = vsub.f32 %v3920, %v4999
    %v5001 = vand.u32 %v5000, 4294901760
    %v5002 = vsub.f32 %v5000, %v5001
    %v5003 = vand.u32 %v5002, 4294901760
    %5004 = vmatpush1.msra.mxu0 %v5003
    %5005 = vmatprep.subr.mxu0 0.0
    %v5006 = vand.u32 %v3919, 4294901760
    %v5007 = vsub.f32 %v3919, %v5006
    %v5008 = vand.u32 %v5007, 4294901760
    %v5009 = vsub.f32 %v5007, %v5008
    %v5010 = vand.u32 %v5009, 4294901760
    %5011 = vmatpush1.msra.mxu0 %v5010
    %5012 = vmatprep.subr.mxu0 0.0
    %v5013 = vand.u32 %v3918, 4294901760
    %v5014 = vsub.f32 %v3918, %v5013
    %v5015 = vand.u32 %v5014, 4294901760
    %v5016 = vsub.f32 %v5014, %v5015
    %v5017 = vand.u32 %v5016, 4294901760
    %5018 = vmatpush1.msra.mxu0 %v5017
    %5019 = vmatprep.subr.mxu0 0.0
    %v5020 = vand.u32 %v3917, 4294901760
    %v5021 = vsub.f32 %v3917, %v5020
    %v5022 = vand.u32 %v5021, 4294901760
    %v5023 = vsub.f32 %v5021, %v5022
    %v5024 = vand.u32 %v5023, 4294901760
    %5025 = vmatpush1.msra.mxu0 %v5024
    %5026 = vmatprep.subr.mxu0 0.0
    %v5027 = vand.u32 %v3916, 4294901760
    %v5028 = vsub.f32 %v3916, %v5027
    %v5029 = vand.u32 %v5028, 4294901760
    %v5030 = vsub.f32 %v5028, %v5029
    %v5031 = vand.u32 %v5030, 4294901760
    %5032 = vmatpush1.msra.mxu0 %v5031
    %5033 = vmatprep.subr.mxu0 0.0
    %v5034 = vand.u32 %v3915, 4294901760
    %v5035 = vsub.f32 %v3915, %v5034
    %v5036 = vand.u32 %v5035, 4294901760
    %v5037 = vsub.f32 %v5035, %v5036
    %v5038 = vand.u32 %v5037, 4294901760
    %5039 = vmatpush1.msra.mxu0 %v5038
    %5040 = vmatprep.subr.mxu0 0.0
    %v5041 = vand.u32 %v3914, 4294901760
    %v5042 = vsub.f32 %v3914, %v5041
    %v5043 = vand.u32 %v5042, 4294901760
    %v5044 = vsub.f32 %v5042, %v5043
    %v5045 = vand.u32 %v5044, 4294901760
    %5046 = vmatpush1.msra.mxu0 %v5045
    %5047 = vmatprep.subr.mxu0 0.0
    %v5048 = vand.u32 %v3913, 4294901760
    %v5049 = vsub.f32 %v3913, %v5048
    %v5050 = vand.u32 %v5049, 4294901760
    %v5051 = vsub.f32 %v5049, %v5050
    %v5052 = vand.u32 %v5051, 4294901760
    %5053 = vmatpush1.msra.mxu0 %v5052
    %5054 = vmatprep.subr.mxu0 0.0
    %v5055 = vand.u32 %v3912, 4294901760
    %v5056 = vsub.f32 %v3912, %v5055
    %v5057 = vand.u32 %v5056, 4294901760
    %v5058 = vsub.f32 %v5056, %v5057
    %v5059 = vand.u32 %v5058, 4294901760
    %5060 = vmatpush1.msra.mxu0 %v5059
    %5061 = vmatprep.subr.mxu0 0.0
    %v5062 = vand.u32 %v3911, 4294901760
    %v5063 = vsub.f32 %v3911, %v5062
    %v5064 = vand.u32 %v5063, 4294901760
    %v5065 = vsub.f32 %v5063, %v5064
    %v5066 = vand.u32 %v5065, 4294901760
    %5067 = vmatpush1.msra.mxu0 %v5066
    %5068 = vmatprep.subr.mxu0 0.0
    %v5069 = vand.u32 %v3910, 4294901760
    %v5070 = vsub.f32 %v3910, %v5069
    %v5071 = vand.u32 %v5070, 4294901760
    %v5072 = vsub.f32 %v5070, %v5071
    %v5073 = vand.u32 %v5072, 4294901760
    %5074 = vmatpush1.msra.mxu0 %v5073
    %5075 = vmatprep.subr.mxu0 0.0
    %v5076 = vand.u32 %v3909, 4294901760
    %v5077 = vsub.f32 %v3909, %v5076
    %v5078 = vand.u32 %v5077, 4294901760
    %v5079 = vsub.f32 %v5077, %v5078
    %v5080 = vand.u32 %v5079, 4294901760
    %5081 = vmatpush1.msra.mxu0 %v5080
    %5082 = vmatprep.subr.mxu0 0.0
    %v5083 = vand.u32 %v3908, 4294901760
    %v5084 = vsub.f32 %v3908, %v5083
    %v5085 = vand.u32 %v5084, 4294901760
    %v5086 = vsub.f32 %v5084, %v5085
    %v5087 = vand.u32 %v5086, 4294901760
    %5088 = vmatpush1.msra.mxu0 %v5087
    %5089 = vmatprep.subr.mxu0 0.0
    %v5090 = vand.u32 %v3907, 4294901760
    %v5091 = vsub.f32 %v3907, %v5090
    %v5092 = vand.u32 %v5091, 4294901760
    %v5093 = vsub.f32 %v5091, %v5092
    %v5094 = vand.u32 %v5093, 4294901760
    %5095 = vmatpush1.msra.mxu0 %v5094
    %5096 = vmatprep.subr.mxu0 0.0
    %v5097 = vand.u32 %v3938, 4294901760
    %v5098 = vsub.f32 %v3938, %v5097
    %v5099 = vand.u32 %v5098, 4294901760
    %v5100 = vsub.f32 %v5098, %v5099
    %v5101 = vand.u32 %v5100, 4294901760
    %5102 = vmatpush2.msra.mxu0 %v5101
    %5103 = vmatprep.subr.mxu0 0.0
    %v5104 = vand.u32 %v3937, 4294901760
    %v5105 = vsub.f32 %v3937, %v5104
    %v5106 = vand.u32 %v5105, 4294901760
    %v5107 = vsub.f32 %v5105, %v5106
    %v5108 = vand.u32 %v5107, 4294901760
    %5109 = vmatpush2.msra.mxu0 %v5108
    %5110 = vmatprep.subr.mxu0 0.0
    %v5111 = vand.u32 %v3936, 4294901760
    %v5112 = vsub.f32 %v3936, %v5111
    %v5113 = vand.u32 %v5112, 4294901760
    %v5114 = vsub.f32 %v5112, %v5113
    %v5115 = vand.u32 %v5114, 4294901760
    %5116 = vmatpush2.msra.mxu0 %v5115
    %5117 = vmatprep.subr.mxu0 0.0
    %v5118 = vand.u32 %v3935, 4294901760
    %v5119 = vsub.f32 %v3935, %v5118
    %v5120 = vand.u32 %v5119, 4294901760
    %v5121 = vsub.f32 %v5119, %v5120
    %v5122 = vand.u32 %v5121, 4294901760
    %5123 = vmatpush2.msra.mxu0 %v5122
    %5124 = vmatprep.subr.mxu0 0.0
    %v5125 = vand.u32 %v3934, 4294901760
    %v5126 = vsub.f32 %v3934, %v5125
    %v5127 = vand.u32 %v5126, 4294901760
    %v5128 = vsub.f32 %v5126, %v5127
    %v5129 = vand.u32 %v5128, 4294901760
    %5130 = vmatpush2.msra.mxu0 %v5129
    %5131 = vmatprep.subr.mxu0 0.0
    %v5132 = vand.u32 %v3933, 4294901760
    %v5133 = vsub.f32 %v3933, %v5132
    %v5134 = vand.u32 %v5133, 4294901760
    %v5135 = vsub.f32 %v5133, %v5134
    %v5136 = vand.u32 %v5135, 4294901760
    %5137 = vmatpush2.msra.mxu0 %v5136
    %5138 = vmatprep.subr.mxu0 0.0
    %v5139 = vand.u32 %v3932, 4294901760
    %v5140 = vsub.f32 %v3932, %v5139
    %v5141 = vand.u32 %v5140, 4294901760
    %v5142 = vsub.f32 %v5140, %v5141
    %v5143 = vand.u32 %v5142, 4294901760
    %5144 = vmatpush2.msra.mxu0 %v5143
    %5145 = vmatprep.subr.mxu0 0.0
    %v5146 = vand.u32 %v3931, 4294901760
    %v5147 = vsub.f32 %v3931, %v5146
    %v5148 = vand.u32 %v5147, 4294901760
    %v5149 = vsub.f32 %v5147, %v5148
    %v5150 = vand.u32 %v5149, 4294901760
    %5151 = vmatpush2.msra.mxu0 %v5150
    %5152 = vmatprep.subr.mxu0 0.0
    %v5153 = vand.u32 %v3930, 4294901760
    %v5154 = vsub.f32 %v3930, %v5153
    %v5155 = vand.u32 %v5154, 4294901760
    %v5156 = vsub.f32 %v5154, %v5155
    %v5157 = vand.u32 %v5156, 4294901760
    %5158 = vmatpush2.msra.mxu0 %v5157
    %5159 = vmatprep.subr.mxu0 0.0
    %v5160 = vand.u32 %v3929, 4294901760
    %v5161 = vsub.f32 %v3929, %v5160
    %v5162 = vand.u32 %v5161, 4294901760
    %v5163 = vsub.f32 %v5161, %v5162
    %v5164 = vand.u32 %v5163, 4294901760
    %5165 = vmatpush2.msra.mxu0 %v5164
    %5166 = vmatprep.subr.mxu0 0.0
    %v5167 = vand.u32 %v3928, 4294901760
    %v5168 = vsub.f32 %v3928, %v5167
    %v5169 = vand.u32 %v5168, 4294901760
    %v5170 = vsub.f32 %v5168, %v5169
    %v5171 = vand.u32 %v5170, 4294901760
    %5172 = vmatpush2.msra.mxu0 %v5171
    %5173 = vmatprep.subr.mxu0 0.0
    %v5174 = vand.u32 %v3927, 4294901760
    %v5175 = vsub.f32 %v3927, %v5174
    %v5176 = vand.u32 %v5175, 4294901760
    %v5177 = vsub.f32 %v5175, %v5176
    %v5178 = vand.u32 %v5177, 4294901760
    %5179 = vmatpush2.msra.mxu0 %v5178
    %5180 = vmatprep.subr.mxu0 0.0
    %v5181 = vand.u32 %v3926, 4294901760
    %v5182 = vsub.f32 %v3926, %v5181
    %v5183 = vand.u32 %v5182, 4294901760
    %v5184 = vsub.f32 %v5182, %v5183
    %v5185 = vand.u32 %v5184, 4294901760
    %5186 = vmatpush2.msra.mxu0 %v5185
    %5187 = vmatprep.subr.mxu0 0.0
    %v5188 = vand.u32 %v3925, 4294901760
    %v5189 = vsub.f32 %v3925, %v5188
    %v5190 = vand.u32 %v5189, 4294901760
    %v5191 = vsub.f32 %v5189, %v5190
    %v5192 = vand.u32 %v5191, 4294901760
    %5193 = vmatpush2.msra.mxu0 %v5192
    %5194 = vmatprep.subr.mxu0 0.0
    %v5195 = vand.u32 %v3924, 4294901760
    %v5196 = vsub.f32 %v3924, %v5195
    %v5197 = vand.u32 %v5196, 4294901760
    %v5198 = vsub.f32 %v5196, %v5197
    %v5199 = vand.u32 %v5198, 4294901760
    %5200 = vmatpush2.msra.mxu0 %v5199
    %5201 = vmatprep.subr.mxu0 0.0
    %v5202 = vand.u32 %v3923, 4294901760
    %v5203 = vsub.f32 %v3923, %v5202
    %v5204 = vand.u32 %v5203, 4294901760
    %v5205 = vsub.f32 %v5203, %v5204
    %v5206 = vand.u32 %v5205, 4294901760
    %5207 = vmatpush2.msra.mxu0 %v5206
    %v5208 = vand.u32 %v3868, 4294901760
    %5209 = vmatprep.mubr.f32.mxu0 %v5208
    %v5210 = vand.u32 %v3867, 4294901760
    %5211 = vmatmul.mubr.f32.gmra.mxu0 %v5210
    %v5212 = vpop.f32.mrf.mxu0
    %v5213 = vadd.f32 %v4966, %v5212
    %v5214 = vpop.f32.mrf.mxu0
    %v5215 = vand.u32 %v3872, 4294901760
    %5216 = vmatprep.mubr.f32.mxu0 %v5215
    %v5217 = vand.u32 %v3871, 4294901760
    %5218 = vmatmul.mubr.f32.gmra.mxu0 %v5217
    %v5219 = vpop.f32.mrf.mxu0
    %v5220 = vadd.f32 %v4981, %v5219
    %v5221 = vpop.f32.mrf.mxu0
    %5222 = vdwg.mxu0
    %5223 = vmatprep.subr.mxu0 0.0
    %v5224 = vand.u32 %v3922, 4294901760
    %v5225 = vsub.f32 %v3922, %v5224
    %5226 = vmatpush1.msra.mxu0 %v5225
    %5227 = vmatprep.subr.mxu0 0.0
    %v5228 = vand.u32 %v3921, 4294901760
    %v5229 = vsub.f32 %v3921, %v5228
    %5230 = vmatpush1.msra.mxu0 %v5229
    %5231 = vmatprep.subr.mxu0 0.0
    %v5232 = vand.u32 %v3920, 4294901760
    %v5233 = vsub.f32 %v3920, %v5232
    %5234 = vmatpush1.msra.mxu0 %v5233
    %5235 = vmatprep.subr.mxu0 0.0
    %v5236 = vand.u32 %v3919, 4294901760
    %v5237 = vsub.f32 %v3919, %v5236
    %5238 = vmatpush1.msra.mxu0 %v5237
    %5239 = vmatprep.subr.mxu0 0.0
    %v5240 = vand.u32 %v3918, 4294901760
    %v5241 = vsub.f32 %v3918, %v5240
    %5242 = vmatpush1.msra.mxu0 %v5241
    %5243 = vmatprep.subr.mxu0 0.0
    %v5244 = vand.u32 %v3917, 4294901760
    %v5245 = vsub.f32 %v3917, %v5244
    %5246 = vmatpush1.msra.mxu0 %v5245
    %5247 = vmatprep.subr.mxu0 0.0
    %v5248 = vand.u32 %v3916, 4294901760
    %v5249 = vsub.f32 %v3916, %v5248
    %5250 = vmatpush1.msra.mxu0 %v5249
    %5251 = vmatprep.subr.mxu0 0.0
    %v5252 = vand.u32 %v3915, 4294901760
    %v5253 = vsub.f32 %v3915, %v5252
    %5254 = vmatpush1.msra.mxu0 %v5253
    %5255 = vmatprep.subr.mxu0 0.0
    %v5256 = vand.u32 %v3914, 4294901760
    %v5257 = vsub.f32 %v3914, %v5256
    %5258 = vmatpush1.msra.mxu0 %v5257
    %5259 = vmatprep.subr.mxu0 0.0
    %v5260 = vand.u32 %v3913, 4294901760
    %v5261 = vsub.f32 %v3913, %v5260
    %5262 = vmatpush1.msra.mxu0 %v5261
    %5263 = vmatprep.subr.mxu0 0.0
    %v5264 = vand.u32 %v3912, 4294901760
    %v5265 = vsub.f32 %v3912, %v5264
    %5266 = vmatpush1.msra.mxu0 %v5265
    %5267 = vmatprep.subr.mxu0 0.0
    %v5268 = vand.u32 %v3911, 4294901760
    %v5269 = vsub.f32 %v3911, %v5268
    %5270 = vmatpush1.msra.mxu0 %v5269
    %5271 = vmatprep.subr.mxu0 0.0
    %v5272 = vand.u32 %v3910, 4294901760
    %v5273 = vsub.f32 %v3910, %v5272
    %5274 = vmatpush1.msra.mxu0 %v5273
    %5275 = vmatprep.subr.mxu0 0.0
    %v5276 = vand.u32 %v3909, 4294901760
    %v5277 = vsub.f32 %v3909, %v5276
    %5278 = vmatpush1.msra.mxu0 %v5277
    %5279 = vmatprep.subr.mxu0 0.0
    %v5280 = vand.u32 %v3908, 4294901760
    %v5281 = vsub.f32 %v3908, %v5280
    %5282 = vmatpush1.msra.mxu0 %v5281
    %5283 = vmatprep.subr.mxu0 0.0
    %v5284 = vand.u32 %v3907, 4294901760
    %v5285 = vsub.f32 %v3907, %v5284
    %5286 = vmatpush1.msra.mxu0 %v5285
    %5287 = vmatprep.subr.mxu0 0.0
    %v5288 = vand.u32 %v3938, 4294901760
    %v5289 = vsub.f32 %v3938, %v5288
    %5290 = vmatpush2.msra.mxu0 %v5289
    %5291 = vmatprep.subr.mxu0 0.0
    %v5292 = vand.u32 %v3937, 4294901760
    %v5293 = vsub.f32 %v3937, %v5292
    %5294 = vmatpush2.msra.mxu0 %v5293
    %5295 = vmatprep.subr.mxu0 0.0
    %v5296 = vand.u32 %v3936, 4294901760
    %v5297 = vsub.f32 %v3936, %v5296
    %5298 = vmatpush2.msra.mxu0 %v5297
    %5299 = vmatprep.subr.mxu0 0.0
    %v5300 = vand.u32 %v3935, 4294901760
    %v5301 = vsub.f32 %v3935, %v5300
    %5302 = vmatpush2.msra.mxu0 %v5301
    %5303 = vmatprep.subr.mxu0 0.0
    %v5304 = vand.u32 %v3934, 4294901760
    %v5305 = vsub.f32 %v3934, %v5304
    %5306 = vmatpush2.msra.mxu0 %v5305
    %5307 = vmatprep.subr.mxu0 0.0
    %v5308 = vand.u32 %v3933, 4294901760
    %v5309 = vsub.f32 %v3933, %v5308
    %5310 = vmatpush2.msra.mxu0 %v5309
    %5311 = vmatprep.subr.mxu0 0.0
    %v5312 = vand.u32 %v3932, 4294901760
    %v5313 = vsub.f32 %v3932, %v5312
    %5314 = vmatpush2.msra.mxu0 %v5313
    %5315 = vmatprep.subr.mxu0 0.0
    %v5316 = vand.u32 %v3931, 4294901760
    %v5317 = vsub.f32 %v3931, %v5316
    %5318 = vmatpush2.msra.mxu0 %v5317
    %5319 = vmatprep.subr.mxu0 0.0
    %v5320 = vand.u32 %v3930, 4294901760
    %v5321 = vsub.f32 %v3930, %v5320
    %5322 = vmatpush2.msra.mxu0 %v5321
    %5323 = vmatprep.subr.mxu0 0.0
    %v5324 = vand.u32 %v3929, 4294901760
    %v5325 = vsub.f32 %v3929, %v5324
    %5326 = vmatpush2.msra.mxu0 %v5325
    %5327 = vmatprep.subr.mxu0 0.0
    %v5328 = vand.u32 %v3928, 4294901760
    %v5329 = vsub.f32 %v3928, %v5328
    %5330 = vmatpush2.msra.mxu0 %v5329
    %5331 = vmatprep.subr.mxu0 0.0
    %v5332 = vand.u32 %v3927, 4294901760
    %v5333 = vsub.f32 %v3927, %v5332
    %5334 = vmatpush2.msra.mxu0 %v5333
    %5335 = vmatprep.subr.mxu0 0.0
    %v5336 = vand.u32 %v3926, 4294901760
    %v5337 = vsub.f32 %v3926, %v5336
    %5338 = vmatpush2.msra.mxu0 %v5337
    %5339 = vmatprep.subr.mxu0 0.0
    %v5340 = vand.u32 %v3925, 4294901760
    %v5341 = vsub.f32 %v3925, %v5340
    %5342 = vmatpush2.msra.mxu0 %v5341
    %5343 = vmatprep.subr.mxu0 0.0
    %v5344 = vand.u32 %v3924, 4294901760
    %v5345 = vsub.f32 %v3924, %v5344
    %5346 = vmatpush2.msra.mxu0 %v5345
    %5347 = vmatprep.subr.mxu0 0.0
    %v5348 = vand.u32 %v3923, 4294901760
    %v5349 = vsub.f32 %v3923, %v5348
    %5350 = vmatpush2.msra.mxu0 %v5349
    %v5351 = vand.u32 %v3868, 4294901760
    %v5352 = vsub.f32 %v3868, %v5351
    %5353 = vmatprep.mubr.f32.mxu0 %v5352
    %v5354 = vand.u32 %v3867, 4294901760
    %v5355 = vsub.f32 %v3867, %v5354
    %5356 = vmatmul.mubr.f32.gmra.mxu0 %v5355
    %v5357 = vpop.f32.mrf.mxu0
    %v5358 = vadd.f32 %v5213, %v5357
    %v5359 = vpop.f32.mrf.mxu0
    %v5360 = vand.u32 %v3872, 4294901760
    %v5361 = vsub.f32 %v3872, %v5360
    %5362 = vmatprep.mubr.f32.mxu0 %v5361
    %v5363 = vand.u32 %v3871, 4294901760
    %v5364 = vsub.f32 %v3871, %v5363
    %5365 = vmatmul.mubr.f32.gmra.mxu0 %v5364
    %v5366 = vpop.f32.mrf.mxu0
    %v5367 = vadd.f32 %v5220, %v5366
    %v5368 = vpop.f32.mrf.mxu0
    %5369 = vdwg.mxu0
    %5370 = vmatprep.subr.mxu0 0.0
    %v5371 = vand.u32 %v3922, 4294901760
    %5372 = vmatpush1.msra.mxu0 %v5371
    %5373 = vmatprep.subr.mxu0 0.0
    %v5374 = vand.u32 %v3921, 4294901760
    %5375 = vmatpush1.msra.mxu0 %v5374
    %5376 = vmatprep.subr.mxu0 0.0
    %v5377 = vand.u32 %v3920, 4294901760
    %5378 = vmatpush1.msra.mxu0 %v5377
    %5379 = vmatprep.subr.mxu0 0.0
    %v5380 = vand.u32 %v3919, 4294901760
    %5381 = vmatpush1.msra.mxu0 %v5380
    %5382 = vmatprep.subr.mxu0 0.0
    %v5383 = vand.u32 %v3918, 4294901760
    %5384 = vmatpush1.msra.mxu0 %v5383
    %5385 = vmatprep.subr.mxu0 0.0
    %v5386 = vand.u32 %v3917, 4294901760
    %5387 = vmatpush1.msra.mxu0 %v5386
    %5388 = vmatprep.subr.mxu0 0.0
    %v5389 = vand.u32 %v3916, 4294901760
    %5390 = vmatpush1.msra.mxu0 %v5389
    %5391 = vmatprep.subr.mxu0 0.0
    %v5392 = vand.u32 %v3915, 4294901760
    %5393 = vmatpush1.msra.mxu0 %v5392
    %5394 = vmatprep.subr.mxu0 0.0
    %v5395 = vand.u32 %v3914, 4294901760
    %5396 = vmatpush1.msra.mxu0 %v5395
    %5397 = vmatprep.subr.mxu0 0.0
    %v5398 = vand.u32 %v3913, 4294901760
    %5399 = vmatpush1.msra.mxu0 %v5398
    %5400 = vmatprep.subr.mxu0 0.0
    %v5401 = vand.u32 %v3912, 4294901760
    %5402 = vmatpush1.msra.mxu0 %v5401
    %5403 = vmatprep.subr.mxu0 0.0
    %v5404 = vand.u32 %v3911, 4294901760
    %5405 = vmatpush1.msra.mxu0 %v5404
    %5406 = vmatprep.subr.mxu0 0.0
    %v5407 = vand.u32 %v3910, 4294901760
    %5408 = vmatpush1.msra.mxu0 %v5407
    %5409 = vmatprep.subr.mxu0 0.0
    %v5410 = vand.u32 %v3909, 4294901760
    %5411 = vmatpush1.msra.mxu0 %v5410
    %5412 = vmatprep.subr.mxu0 0.0
    %v5413 = vand.u32 %v3908, 4294901760
    %5414 = vmatpush1.msra.mxu0 %v5413
    %5415 = vmatprep.subr.mxu0 0.0
    %v5416 = vand.u32 %v3907, 4294901760
    %5417 = vmatpush1.msra.mxu0 %v5416
    %5418 = vmatprep.subr.mxu0 0.0
    %v5419 = vand.u32 %v3938, 4294901760
    %5420 = vmatpush2.msra.mxu0 %v5419
    %5421 = vmatprep.subr.mxu0 0.0
    %v5422 = vand.u32 %v3937, 4294901760
    %5423 = vmatpush2.msra.mxu0 %v5422
    %5424 = vmatprep.subr.mxu0 0.0
    %v5425 = vand.u32 %v3936, 4294901760
    %5426 = vmatpush2.msra.mxu0 %v5425
    %5427 = vmatprep.subr.mxu0 0.0
    %v5428 = vand.u32 %v3935, 4294901760
    %5429 = vmatpush2.msra.mxu0 %v5428
    %5430 = vmatprep.subr.mxu0 0.0
    %v5431 = vand.u32 %v3934, 4294901760
    %5432 = vmatpush2.msra.mxu0 %v5431
    %5433 = vmatprep.subr.mxu0 0.0
    %v5434 = vand.u32 %v3933, 4294901760
    %5435 = vmatpush2.msra.mxu0 %v5434
    %5436 = vmatprep.subr.mxu0 0.0
    %v5437 = vand.u32 %v3932, 4294901760
    %5438 = vmatpush2.msra.mxu0 %v5437
    %5439 = vmatprep.subr.mxu0 0.0
    %v5440 = vand.u32 %v3931, 4294901760
    %5441 = vmatpush2.msra.mxu0 %v5440
    %5442 = vmatprep.subr.mxu0 0.0
    %v5443 = vand.u32 %v3930, 4294901760
    %5444 = vmatpush2.msra.mxu0 %v5443
    %5445 = vmatprep.subr.mxu0 0.0
    %v5446 = vand.u32 %v3929, 4294901760
    %5447 = vmatpush2.msra.mxu0 %v5446
    %5448 = vmatprep.subr.mxu0 0.0
    %v5449 = vand.u32 %v3928, 4294901760
    %5450 = vmatpush2.msra.mxu0 %v5449
    %5451 = vmatprep.subr.mxu0 0.0
    %v5452 = vand.u32 %v3927, 4294901760
    %5453 = vmatpush2.msra.mxu0 %v5452
    %5454 = vmatprep.subr.mxu0 0.0
    %v5455 = vand.u32 %v3926, 4294901760
    %5456 = vmatpush2.msra.mxu0 %v5455
    %5457 = vmatprep.subr.mxu0 0.0
    %v5458 = vand.u32 %v3925, 4294901760
    %5459 = vmatpush2.msra.mxu0 %v5458
    %5460 = vmatprep.subr.mxu0 0.0
    %v5461 = vand.u32 %v3924, 4294901760
    %5462 = vmatpush2.msra.mxu0 %v5461
    %5463 = vmatprep.subr.mxu0 0.0
    %v5464 = vand.u32 %v3923, 4294901760
    %5465 = vmatpush2.msra.mxu0 %v5464
    %v5466 = vand.u32 %v3868, 4294901760
    %v5467 = vsub.f32 %v3868, %v5466
    %v5468 = vand.u32 %v5467, 4294901760
    %5469 = vmatprep.mubr.f32.mxu0 %v5468
    %v5470 = vand.u32 %v3867, 4294901760
    %v5471 = vsub.f32 %v3867, %v5470
    %v5472 = vand.u32 %v5471, 4294901760
    %5473 = vmatmul.mubr.f32.gmra.mxu0 %v5472
    %v5474 = vpop.f32.mrf.mxu0
    %v5475 = vadd.f32 %v5358, %v5474
    %v5476 = vpop.f32.mrf.mxu0
    %v5477 = vand.u32 %v3872, 4294901760
    %v5478 = vsub.f32 %v3872, %v5477
    %v5479 = vand.u32 %v5478, 4294901760
    %5480 = vmatprep.mubr.f32.mxu0 %v5479
    %v5481 = vand.u32 %v3871, 4294901760
    %v5482 = vsub.f32 %v3871, %v5481
    %v5483 = vand.u32 %v5482, 4294901760
    %5484 = vmatmul.mubr.f32.gmra.mxu0 %v5483
    %v5485 = vpop.f32.mrf.mxu0
    %v5486 = vadd.f32 %v5367, %v5485
    %v5487 = vpop.f32.mrf.mxu0
    %5488 = vdwg.mxu0
    %5489 = vmatprep.subr.mxu0 0.0
    %v5490 = vand.u32 %v3922, 4294901760
    %v5491 = vsub.f32 %v3922, %v5490
    %v5492 = vand.u32 %v5491, 4294901760
    %5493 = vmatpush1.msra.mxu0 %v5492
    %5494 = vmatprep.subr.mxu0 0.0
    %v5495 = vand.u32 %v3921, 4294901760
    %v5496 = vsub.f32 %v3921, %v5495
    %v5497 = vand.u32 %v5496, 4294901760
    %5498 = vmatpush1.msra.mxu0 %v5497
    %5499 = vmatprep.subr.mxu0 0.0
    %v5500 = vand.u32 %v3920, 4294901760
    %v5501 = vsub.f32 %v3920, %v5500
    %v5502 = vand.u32 %v5501, 4294901760
    %5503 = vmatpush1.msra.mxu0 %v5502
    %5504 = vmatprep.subr.mxu0 0.0
    %v5505 = vand.u32 %v3919, 4294901760
    %v5506 = vsub.f32 %v3919, %v5505
    %v5507 = vand.u32 %v5506, 4294901760
    %5508 = vmatpush1.msra.mxu0 %v5507
    %5509 = vmatprep.subr.mxu0 0.0
    %v5510 = vand.u32 %v3918, 4294901760
    %v5511 = vsub.f32 %v3918, %v5510
    %v5512 = vand.u32 %v5511, 4294901760
    %5513 = vmatpush1.msra.mxu0 %v5512
    %5514 = vmatprep.subr.mxu0 0.0
    %v5515 = vand.u32 %v3917, 4294901760
    %v5516 = vsub.f32 %v3917, %v5515
    %v5517 = vand.u32 %v5516, 4294901760
    %5518 = vmatpush1.msra.mxu0 %v5517
    %5519 = vmatprep.subr.mxu0 0.0
    %v5520 = vand.u32 %v3916, 4294901760
    %v5521 = vsub.f32 %v3916, %v5520
    %v5522 = vand.u32 %v5521, 4294901760
    %5523 = vmatpush1.msra.mxu0 %v5522
    %5524 = vmatprep.subr.mxu0 0.0
    %v5525 = vand.u32 %v3915, 4294901760
    %v5526 = vsub.f32 %v3915, %v5525
    %v5527 = vand.u32 %v5526, 4294901760
    %5528 = vmatpush1.msra.mxu0 %v5527
    %5529 = vmatprep.subr.mxu0 0.0
    %v5530 = vand.u32 %v3914, 4294901760
    %v5531 = vsub.f32 %v3914, %v5530
    %v5532 = vand.u32 %v5531, 4294901760
    %5533 = vmatpush1.msra.mxu0 %v5532
    %5534 = vmatprep.subr.mxu0 0.0
    %v5535 = vand.u32 %v3913, 4294901760
    %v5536 = vsub.f32 %v3913, %v5535
    %v5537 = vand.u32 %v5536, 4294901760
    %5538 = vmatpush1.msra.mxu0 %v5537
    %5539 = vmatprep.subr.mxu0 0.0
    %v5540 = vand.u32 %v3912, 4294901760
    %v5541 = vsub.f32 %v3912, %v5540
    %v5542 = vand.u32 %v5541, 4294901760
    %5543 = vmatpush1.msra.mxu0 %v5542
    %5544 = vmatprep.subr.mxu0 0.0
    %v5545 = vand.u32 %v3911, 4294901760
    %v5546 = vsub.f32 %v3911, %v5545
    %v5547 = vand.u32 %v5546, 4294901760
    %5548 = vmatpush1.msra.mxu0 %v5547
    %5549 = vmatprep.subr.mxu0 0.0
    %v5550 = vand.u32 %v3910, 4294901760
    %v5551 = vsub.f32 %v3910, %v5550
    %v5552 = vand.u32 %v5551, 4294901760
    %5553 = vmatpush1.msra.mxu0 %v5552
    %5554 = vmatprep.subr.mxu0 0.0
    %v5555 = vand.u32 %v3909, 4294901760
    %v5556 = vsub.f32 %v3909, %v5555
    %v5557 = vand.u32 %v5556, 4294901760
    %5558 = vmatpush1.msra.mxu0 %v5557
    %5559 = vmatprep.subr.mxu0 0.0
    %v5560 = vand.u32 %v3908, 4294901760
    %v5561 = vsub.f32 %v3908, %v5560
    %v5562 = vand.u32 %v5561, 4294901760
    %5563 = vmatpush1.msra.mxu0 %v5562
    %5564 = vmatprep.subr.mxu0 0.0
    %v5565 = vand.u32 %v3907, 4294901760
    %v5566 = vsub.f32 %v3907, %v5565
    %v5567 = vand.u32 %v5566, 4294901760
    %5568 = vmatpush1.msra.mxu0 %v5567
    %5569 = vmatprep.subr.mxu0 0.0
    %v5570 = vand.u32 %v3938, 4294901760
    %v5571 = vsub.f32 %v3938, %v5570
    %v5572 = vand.u32 %v5571, 4294901760
    %5573 = vmatpush2.msra.mxu0 %v5572
    %5574 = vmatprep.subr.mxu0 0.0
    %v5575 = vand.u32 %v3937, 4294901760
    %v5576 = vsub.f32 %v3937, %v5575
    %v5577 = vand.u32 %v5576, 4294901760
    %5578 = vmatpush2.msra.mxu0 %v5577
    %5579 = vmatprep.subr.mxu0 0.0
    %v5580 = vand.u32 %v3936, 4294901760
    %v5581 = vsub.f32 %v3936, %v5580
    %v5582 = vand.u32 %v5581, 4294901760
    %5583 = vmatpush2.msra.mxu0 %v5582
    %5584 = vmatprep.subr.mxu0 0.0
    %v5585 = vand.u32 %v3935, 4294901760
    %v5586 = vsub.f32 %v3935, %v5585
    %v5587 = vand.u32 %v5586, 4294901760
    %5588 = vmatpush2.msra.mxu0 %v5587
    %5589 = vmatprep.subr.mxu0 0.0
    %v5590 = vand.u32 %v3934, 4294901760
    %v5591 = vsub.f32 %v3934, %v5590
    %v5592 = vand.u32 %v5591, 4294901760
    %5593 = vmatpush2.msra.mxu0 %v5592
    %5594 = vmatprep.subr.mxu0 0.0
    %v5595 = vand.u32 %v3933, 4294901760
    %v5596 = vsub.f32 %v3933, %v5595
    %v5597 = vand.u32 %v5596, 4294901760
    %5598 = vmatpush2.msra.mxu0 %v5597
    %5599 = vmatprep.subr.mxu0 0.0
    %v5600 = vand.u32 %v3932, 4294901760
    %v5601 = vsub.f32 %v3932, %v5600
    %v5602 = vand.u32 %v5601, 4294901760
    %5603 = vmatpush2.msra.mxu0 %v5602
    %5604 = vmatprep.subr.mxu0 0.0
    %v5605 = vand.u32 %v3931, 4294901760
    %v5606 = vsub.f32 %v3931, %v5605
    %v5607 = vand.u32 %v5606, 4294901760
    %5608 = vmatpush2.msra.mxu0 %v5607
    %5609 = vmatprep.subr.mxu0 0.0
    %v5610 = vand.u32 %v3930, 4294901760
    %v5611 = vsub.f32 %v3930, %v5610
    %v5612 = vand.u32 %v5611, 4294901760
    %5613 = vmatpush2.msra.mxu0 %v5612
    %5614 = vmatprep.subr.mxu0 0.0
    %v5615 = vand.u32 %v3929, 4294901760
    %v5616 = vsub.f32 %v3929, %v5615
    %v5617 = vand.u32 %v5616, 4294901760
    %5618 = vmatpush2.msra.mxu0 %v5617
    %5619 = vmatprep.subr.mxu0 0.0
    %v5620 = vand.u32 %v3928, 4294901760
    %v5621 = vsub.f32 %v3928, %v5620
    %v5622 = vand.u32 %v5621, 4294901760
    %5623 = vmatpush2.msra.mxu0 %v5622
    %5624 = vmatprep.subr.mxu0 0.0
    %v5625 = vand.u32 %v3927, 4294901760
    %v5626 = vsub.f32 %v3927, %v5625
    %v5627 = vand.u32 %v5626, 4294901760
    %5628 = vmatpush2.msra.mxu0 %v5627
    %5629 = vmatprep.subr.mxu0 0.0
    %v5630 = vand.u32 %v3926, 4294901760
    %v5631 = vsub.f32 %v3926, %v5630
    %v5632 = vand.u32 %v5631, 4294901760
    %5633 = vmatpush2.msra.mxu0 %v5632
    %5634 = vmatprep.subr.mxu0 0.0
    %v5635 = vand.u32 %v3925, 4294901760
    %v5636 = vsub.f32 %v3925, %v5635
    %v5637 = vand.u32 %v5636, 4294901760
    %5638 = vmatpush2.msra.mxu0 %v5637
    %5639 = vmatprep.subr.mxu0 0.0
    %v5640 = vand.u32 %v3924, 4294901760
    %v5641 = vsub.f32 %v3924, %v5640
    %v5642 = vand.u32 %v5641, 4294901760
    %5643 = vmatpush2.msra.mxu0 %v5642
    %5644 = vmatprep.subr.mxu0 0.0
    %v5645 = vand.u32 %v3923, 4294901760
    %v5646 = vsub.f32 %v3923, %v5645
    %v5647 = vand.u32 %v5646, 4294901760
    %5648 = vmatpush2.msra.mxu0 %v5647
    %v5649 = vand.u32 %v3868, 4294901760
    %5650 = vmatprep.mubr.f32.mxu0 %v5649
    %v5651 = vand.u32 %v3867, 4294901760
    %5652 = vmatmul.mubr.f32.gmra.mxu0 %v5651
    %v5653 = vpop.f32.mrf.mxu0
    %v5654 = vadd.f32 %v5475, %v5653
    %v5655 = vpop.f32.mrf.mxu0
    %v5656 = vand.u32 %v3872, 4294901760
    %5657 = vmatprep.mubr.f32.mxu0 %v5656
    %v5658 = vand.u32 %v3871, 4294901760
    %5659 = vmatmul.mubr.f32.gmra.mxu0 %v5658
    %v5660 = vpop.f32.mrf.mxu0
    %v5661 = vadd.f32 %v5486, %v5660
    %v5662 = vpop.f32.mrf.mxu0
    %5663 = vdwg.mxu0
    %5664 = vmatprep.subr.mxu0 0.0
    %v5665 = vand.u32 %v3922, 4294901760
    %5666 = vmatpush1.msra.mxu0 %v5665
    %5667 = vmatprep.subr.mxu0 0.0
    %v5668 = vand.u32 %v3921, 4294901760
    %5669 = vmatpush1.msra.mxu0 %v5668
    %5670 = vmatprep.subr.mxu0 0.0
    %v5671 = vand.u32 %v3920, 4294901760
    %5672 = vmatpush1.msra.mxu0 %v5671
    %5673 = vmatprep.subr.mxu0 0.0
    %v5674 = vand.u32 %v3919, 4294901760
    %5675 = vmatpush1.msra.mxu0 %v5674
    %5676 = vmatprep.subr.mxu0 0.0
    %v5677 = vand.u32 %v3918, 4294901760
    %5678 = vmatpush1.msra.mxu0 %v5677
    %5679 = vmatprep.subr.mxu0 0.0
    %v5680 = vand.u32 %v3917, 4294901760
    %5681 = vmatpush1.msra.mxu0 %v5680
    %5682 = vmatprep.subr.mxu0 0.0
    %v5683 = vand.u32 %v3916, 4294901760
    %5684 = vmatpush1.msra.mxu0 %v5683
    %5685 = vmatprep.subr.mxu0 0.0
    %v5686 = vand.u32 %v3915, 4294901760
    %5687 = vmatpush1.msra.mxu0 %v5686
    %5688 = vmatprep.subr.mxu0 0.0
    %v5689 = vand.u32 %v3914, 4294901760
    %5690 = vmatpush1.msra.mxu0 %v5689
    %5691 = vmatprep.subr.mxu0 0.0
    %v5692 = vand.u32 %v3913, 4294901760
    %5693 = vmatpush1.msra.mxu0 %v5692
    %5694 = vmatprep.subr.mxu0 0.0
    %v5695 = vand.u32 %v3912, 4294901760
    %5696 = vmatpush1.msra.mxu0 %v5695
    %5697 = vmatprep.subr.mxu0 0.0
    %v5698 = vand.u32 %v3911, 4294901760
    %5699 = vmatpush1.msra.mxu0 %v5698
    %5700 = vmatprep.subr.mxu0 0.0
    %v5701 = vand.u32 %v3910, 4294901760
    %5702 = vmatpush1.msra.mxu0 %v5701
    %5703 = vmatprep.subr.mxu0 0.0
    %v5704 = vand.u32 %v3909, 4294901760
    %5705 = vmatpush1.msra.mxu0 %v5704
    %5706 = vmatprep.subr.mxu0 0.0
    %v5707 = vand.u32 %v3908, 4294901760
    %5708 = vmatpush1.msra.mxu0 %v5707
    %5709 = vmatprep.subr.mxu0 0.0
    %v5710 = vand.u32 %v3907, 4294901760
    %5711 = vmatpush1.msra.mxu0 %v5710
    %5712 = vmatprep.subr.mxu0 0.0
    %v5713 = vand.u32 %v3938, 4294901760
    %5714 = vmatpush2.msra.mxu0 %v5713
    %5715 = vmatprep.subr.mxu0 0.0
    %v5716 = vand.u32 %v3937, 4294901760
    %5717 = vmatpush2.msra.mxu0 %v5716
    %5718 = vmatprep.subr.mxu0 0.0
    %v5719 = vand.u32 %v3936, 4294901760
    %5720 = vmatpush2.msra.mxu0 %v5719
    %5721 = vmatprep.subr.mxu0 0.0
    %v5722 = vand.u32 %v3935, 4294901760
    %5723 = vmatpush2.msra.mxu0 %v5722
    %5724 = vmatprep.subr.mxu0 0.0
    %v5725 = vand.u32 %v3934, 4294901760
    %5726 = vmatpush2.msra.mxu0 %v5725
    %5727 = vmatprep.subr.mxu0 0.0
    %v5728 = vand.u32 %v3933, 4294901760
    %5729 = vmatpush2.msra.mxu0 %v5728
    %5730 = vmatprep.subr.mxu0 0.0
    %v5731 = vand.u32 %v3932, 4294901760
    %5732 = vmatpush2.msra.mxu0 %v5731
    %5733 = vmatprep.subr.mxu0 0.0
    %v5734 = vand.u32 %v3931, 4294901760
    %5735 = vmatpush2.msra.mxu0 %v5734
    %5736 = vmatprep.subr.mxu0 0.0
    %v5737 = vand.u32 %v3930, 4294901760
    %5738 = vmatpush2.msra.mxu0 %v5737
    %5739 = vmatprep.subr.mxu0 0.0
    %v5740 = vand.u32 %v3929, 4294901760
    %5741 = vmatpush2.msra.mxu0 %v5740
    %5742 = vmatprep.subr.mxu0 0.0
    %v5743 = vand.u32 %v3928, 4294901760
    %5744 = vmatpush2.msra.mxu0 %v5743
    %5745 = vmatprep.subr.mxu0 0.0
    %v5746 = vand.u32 %v3927, 4294901760
    %5747 = vmatpush2.msra.mxu0 %v5746
    %5748 = vmatprep.subr.mxu0 0.0
    %v5749 = vand.u32 %v3926, 4294901760
    %5750 = vmatpush2.msra.mxu0 %v5749
    %5751 = vmatprep.subr.mxu0 0.0
    %v5752 = vand.u32 %v3925, 4294901760
    %5753 = vmatpush2.msra.mxu0 %v5752
    %5754 = vmatprep.subr.mxu0 0.0
    %v5755 = vand.u32 %v3924, 4294901760
    %5756 = vmatpush2.msra.mxu0 %v5755
    %5757 = vmatprep.subr.mxu0 0.0
    %v5758 = vand.u32 %v3923, 4294901760
    %5759 = vmatpush2.msra.mxu0 %v5758
    %v5760 = vand.u32 %v3868, 4294901760
    %5761 = vmatprep.mubr.f32.mxu0 %v5760
    %v5762 = vand.u32 %v3867, 4294901760
    %5763 = vmatmul.mubr.f32.gmra.mxu0 %v5762
    %v5764 = vpop.f32.mrf.mxu0
    %v5765 = vadd.f32 %v5654, %v5764
    %v5766 = vpop.f32.mrf.mxu0
    %v5767 = vand.u32 %v3872, 4294901760
    %5768 = vmatprep.mubr.f32.mxu0 %v5767
    %v5769 = vand.u32 %v3871, 4294901760
    %5770 = vmatmul.mubr.f32.gmra.mxu0 %v5769
    %v5771 = vpop.f32.mrf.mxu0
    %v5772 = vadd.f32 %v5661, %v5771
    %v5773 = vpop.f32.mrf.mxu0
    %5774 = vdwg.mxu0
    %v5775 = vadd.f32 %v3873, %v5765
    %v5776 = vadd.f32 %v3874, %v5772
    %5777 = vst [vmem:[#allocation8] sm:$0xff] %v5775
    %5778 = vst [vmem:[#allocation8 + $0x8] sm:$0xff] %v5776
    // Predicated region
    $region30: #{tpu_custom_call.1} parent=1 // pred_check
      _
    $region31: #{tpu_custom_call.1} parent=1 // pred_check_branch
      %5780 = sbr.rel (0) target = $region33
    $region32: #{tpu_custom_call.1} parent=1 // pred_region
      %s5782 = ssub.s32 256, 256
      %5783 = vsyncadd [#allocation4], %s5782
      %s5784 = sshll.u32 [#allocation8], 4
      %s5785 = int_to_ptr.vmem [resolvable:$true] %s5784
      %5790 = dma.vmem_to_hbm [thread:$0]  %s5785, 256, %s3, [#allocation4], 128, 128, 8
    $region33: #{tpu_custom_call.1} parent=1 // pred_fallthru
      _
    // Predicated region
    $region34: #{tpu_custom_call.1} parent=1 // pred_check
      _
    $region35: #{tpu_custom_call.1} parent=1 // pred_check_branch
      %5792 = sbr.rel (0) target = $region37
    $region36: #{tpu_custom_call.1} parent=1 // pred_region
      %5793 = dma.done [#allocation4], 256
    $region37: #{tpu_custom_call.1} parent=1 // pred_fallthru
      _
    %5794 = vsyncpa [#allocation3], 1
    %5795 = vsyncpa [#allocation6], 1
    %5796 = vsyncpa [#allocation4], 1

</llo_original>
